<compile_context>
chip_gen: v6e
topology: v6e:2x2x1
jax: 0.10.0
libtpu: 0.0.40
codegen_flags: <defaults>
</compile_context>

<pallas_src>
import functools

import jax
import jax.numpy as jnp
from jax import lax
from jax.experimental import pallas as pl
from jax.experimental.pallas import tpu as pltpu

LN_EPS = 1e-12  # RoFormerConfig.layer_norm_eps default


def _layer_norm(x, gamma, beta):
    mu = jnp.mean(x, axis=-1, keepdims=True)
    var = jnp.mean(jnp.square(x - mu), axis=-1, keepdims=True)
    return (x - mu) * lax.rsqrt(var + LN_EPS) * gamma + beta


# -----------------------------------------------------------------------------
# Fused kernel: embedding LayerNorm (layer 0 only) + every RoFormer encoder layer.
# grid = (batch_block, layer, ffn_tile); the output block is the VMEM-resident
# (Bt, S, H) residual stream carried across the layer and ffn-tile axes.
# -----------------------------------------------------------------------------
def fused_encoder_kernel(x_ref, sin_ref, cos_ref, eg_ref, eb_ref,
                         wq_ref, bq_ref, wk_ref, bk_ref, wv_ref, bv_ref,
                         wo_ref, bo_ref, l1g_ref, l1b_ref,
                         w1_ref, b1_ref, w2_ref, b2_ref, l2g_ref, l2b_ref,
                         o_ref, h1_ref, acc_ref, *, num_heads, head_dim):
    layer = pl.program_id(1)
    it = pl.program_id(2)
    n_it = pl.num_programs(2)

    Bt, S, H = o_ref.shape
    nH, dh = num_heads, head_dim
    half = dh // 2
    cdt = wq_ref.dtype                       # matmul compute dtype (bf16 or f32)

    # ---------- attention + first LayerNorm: only on the first FFN tile ----------
    @pl.when(it == 0)
    def _():
        # Layer 0: LayerNorm of (cls ++ eeg) + token_type_emb[0]; initializes the carry.
        @pl.when(layer == 0)
        def _():
            x0 = x_ref[...].reshape(Bt * S, H)
            o_ref[...] = _layer_norm(x0, eg_ref[...], eb_ref[...]).reshape(Bt, S, H)

        h = o_ref[...].reshape(Bt * S, H)    # (Bt*S, H) f32 residual stream
        hb = h.astype(cdt)

        def proj(w_ref, b_ref):              # (Bt*S,H) @ (H,H) + (1,H) -> f32
            return jnp.dot(hb, w_ref[0], preferred_element_type=jnp.float32) + b_ref[0]

        q = proj(wq_ref, bq_ref)             # 1/sqrt(dh) already folded into wq/bq
        k = proj(wk_ref, bk_ref)
        v = proj(wv_ref, bv_ref)

        def heads(t):                        # (Bt*S, H) -> (Bt*nH, S, dh)
            return (t.reshape(Bt, S, nH, dh)
                     .transpose(0, 2, 1, 3)
                     .reshape(Bt * nH, S, dh))

        sin = sin_ref[...][None]             # (1, S, dh) sign-folded: [-sin | sin]
        cos = cos_ref[...][None]             # (1, S, dh)            : [ cos | cos]

        def rope(t):                         # rotate-half; negation folded into sin table
            rot = jnp.concatenate([t[..., half:], t[..., :half]], axis=-1)
            return t * cos + rot * sin

        q3 = rope(heads(q)).astype(cdt)      # (Bt*nH, S, dh)
        k3 = rope(heads(k)).astype(cdt)
        v3 = heads(v).astype(cdt)

        # Head-batched attention: one batched dot for scores, one for the context.
        s = jnp.einsum("bqd,bkd->bqk", q3, k3, preferred_element_type=jnp.float32)
        s = s - jnp.max(s, axis=-1, keepdims=True)
        p = jnp.exp(s)
        denom = jnp.sum(p, axis=-1, keepdims=True)
        if cdt == jnp.float32:               # exact path for tight f32 validation
            p = p / denom
        else:                                # EUP slot, free next to the MXU
            p = p * pl.reciprocal(denom, approx=True)
        ctx = jnp.einsum("bqk,bkd->bqd", p.astype(cdt), v3,
                         preferred_element_type=jnp.float32)       # (Bt*nH, S, dh)
        ctx = (ctx.reshape(Bt, nH, S, dh)
                  .transpose(0, 2, 1, 3)
                  .reshape(Bt * S, H))

        attn = jnp.dot(ctx.astype(cdt), wo_ref[0],
                       preferred_element_type=jnp.float32) + bo_ref[0]
        h1_ref[...] = _layer_norm(attn + h, l1g_ref[0], l1b_ref[0])
        acc_ref[...] = jnp.zeros_like(acc_ref)

    # ---------- FFN: stream w1/w2 over It-wide intermediate tiles, accumulate ----------
    h1 = h1_ref[...]                         # (Bt*S, H) f32
    ff = jnp.dot(h1.astype(cdt), w1_ref[0],
                 preferred_element_type=jnp.float32) + b1_ref[0]
    ff = jax.nn.gelu(ff, approximate=True)
    acc_ref[...] += jnp.dot(ff.astype(cdt), w2_ref[0],
                            preferred_element_type=jnp.float32)

    @pl.when(it == n_it - 1)
    def _():
        out = acc_ref[...] + b2_ref[0] + h1
        o_ref[...] = _layer_norm(out, l2g_ref[0], l2b_ref[0]).reshape(Bt, S, H)


# -----------------------------------------------------------------------------
# VMEM budgeting and tile selection
# -----------------------------------------------------------------------------
def _vmem_capacity_bytes():
    try:
        return int(pltpu.get_tpu_info().vmem_capacity_bytes)
    except Exception:
        return 64 << 20   # conservative fallback: v7x per-TensorCore VMEM


def _estimate_vmem_bytes(Bt, It, S, H, nH, cbytes):
    # double-buffered per-layer weight stream (qkvo + one (H,It)/(It,H) FFN tile)
    wbytes = 2 * ((4 * H * H + 2 * H * It) * cbytes + (10 * H + 2 * It) * 4)
    # residual blocks (input + carried output, double-buffered) + two f32 scratches
    act = 6 * Bt * S * H * 4
    # rough upper bound on in-kernel temporaries: projections, head-split / rope
    # copies, f32 + bf16 scores, context, FFN-tile intermediates
    tmp = (14 * Bt * S * H + 3 * Bt * nH * S * S + 3 * Bt * S * It) * 4
    return wbytes + act + tmp + (2 << 20)


def _choose_tiles(B, S, H, I, nH, cbytes, budget):
    """Pick (Bt, It): Bt batch rows per block, It FFN-intermediate tile width."""
    it_cands = [I] + [t for t in range(((I - 1) // 128) * 128, 0, -128) if I % t == 0]
    bt_cands = [d for d in range(min(B, 8), 0, -1) if B % d == 0]
    # v7x megacore: prefer >= 2 blocks on the parallel batch axis so both
    # TensorCores get work; among those take the largest Bt that fits.
    pref = [d for d in bt_cands if B // d >= 2] or bt_cands
    order = pref + [d for d in bt_cands if d not in pref]
    for bt in order:
        for it in it_cands:
            if _estimate_vmem_bytes(bt, it, S, H, nH, cbytes) <= budget:
                return bt, it
    # TODO(synk): configs that still do not fit (very long S) need flash-tiled attention.
    return 1, it_cands[-1]


# -----------------------------------------------------------------------------
# pallas_call wrapper
# -----------------------------------------------------------------------------
def _fused_call(x, sin, cos, emb_g, emb_b, w, num_heads, head_dim):
    B, S, H = x.shape
    NL = w["wq"].shape[0]
    I = w["w1"].shape[-1]
    cbytes = w["wq"].dtype.itemsize

    cap = _vmem_capacity_bytes()
    Bt, It = _choose_tiles(B, S, H, I, num_heads, cbytes, cap - (8 << 20))
    nI = I // It
    vmem_limit = int(min(max(_estimate_vmem_bytes(Bt, It, S, H, num_heads, cbytes),
                             32 << 20),
                         cap - (4 << 20)))

    layer_map = lambda b, l, i: (l, 0, 0)
    w1_map = lambda b, l, i: (l, 0, i)
    w2_map = lambda b, l, i: (l, i, 0)
    const_map = lambda b, l, i: (0, 0)

    def lw(shape, imap):   # per-layer stacked weight/bias: stream one layer block
        return pl.BlockSpec((1,) + shape, imap)

    in_specs = [
        pl.BlockSpec((Bt, S, H), lambda b, l, i: (b, 0, 0)),   # embedded inputs
        pl.BlockSpec(sin.shape, const_map),
        pl.BlockSpec(cos.shape, const_map),
        pl.BlockSpec(emb_g.shape, const_map),
        pl.BlockSpec(emb_b.shape, const_map),
        lw((H, H), layer_map), lw((1, H), layer_map),          # wq, bq
        lw((H, H), layer_map), lw((1, H), layer_map),          # wk, bk
        lw((H, H), layer_map), lw((1, H), layer_map),          # wv, bv
        lw((H, H), layer_map), lw((1, H), layer_map),          # wo, bo
        lw((1, H), layer_map), lw((1, H), layer_map),          # ln1 gamma/beta
        lw((H, It), w1_map), lw((1, It), w1_map),              # w1, b1 (I-tiled)
        lw((It, H), w2_map), lw((1, H), layer_map),            # w2 (I-tiled), b2
        lw((1, H), layer_map), lw((1, H), layer_map),          # ln2 gamma/beta
    ]
    kernel = functools.partial(fused_encoder_kernel,
                               num_heads=num_heads, head_dim=head_dim)
    return pl.pallas_call(
        kernel,
        out_shape=jax.ShapeDtypeStruct((B, S, H), jnp.float32),
        grid=(B // Bt, NL, nI),
        in_specs=in_specs,
        out_specs=pl.BlockSpec((Bt, S, H), lambda b, l, i: (b, 0, 0)),
        scratch_shapes=[pltpu.VMEM((Bt * S, H), jnp.float32),   # h1 (post-attn LN)
                        pltpu.VMEM((Bt * S, H), jnp.float32)],  # FFN accumulator
        compiler_params=pltpu.CompilerParams(
            dimension_semantics=("parallel", "arbitrary", "arbitrary"),
            vmem_limit_bytes=vmem_limit),
    )(x, sin, cos, emb_g, emb_b,
      w["wq"], w["bq"], w["wk"], w["bk"], w["wv"], w["bv"],
      w["wo"], w["bo"], w["ln1_g"], w["ln1_b"],
      w["w1"], w["b1"], w["w2"], w["b2"], w["ln2_g"], w["ln2_b"])


# -----------------------------------------------------------------------------
# Glue: rope tables, one-time weight prep (stack + de-interleave + scale + cast)
# -----------------------------------------------------------------------------
def _rope_tables(S, head_dim):
    inv = 1.0 / (10000.0 ** (jnp.arange(0, head_dim, 2, dtype=jnp.float32) / head_dim))
    ang = jnp.arange(S, dtype=jnp.float32)[:, None] * inv[None, :]      # (S, dh/2)
    sin, cos = jnp.sin(ang), jnp.cos(ang)
    # rotate-half form with the rotation's negation folded into the sin table:
    #   rope(t) = t * cos_h + concat([t[half:], t[:half]]) * sin_signed
    sin_signed = jnp.concatenate([-sin, sin], axis=-1)                  # (S, dh)
    cos_h = jnp.concatenate([cos, cos], axis=-1)
    return sin_signed, cos_h


def _deinterleave_perm(H, num_heads):
    dh = H // num_heads
    per_head = jnp.concatenate([jnp.arange(0, dh, 2), jnp.arange(1, dh, 2)])
    return (jnp.arange(num_heads)[:, None] * dh + per_head[None, :]).reshape(-1)


def init_params(key, H, num_heads, inter, num_layers):
    std = 0.02
    kcls, ktt, key = jax.random.split(key, 3)
    params = {
        "cls": jax.random.normal(kcls, (1, 1, H), jnp.float32),       # nn.init.normal_
        "tt_emb": std * jax.random.normal(ktt, (1, H), jnp.float32),  # token_type row 0
        "emb_ln_g": jnp.ones((1, H), jnp.float32),
        "emb_ln_b": jnp.zeros((1, H), jnp.float32),
        "layers": [],
    }
    for _ in range(num_layers):
        key, *ks = jax.random.split(key, 7)
        w = lambda k, shp: std * jax.random.normal(k, shp, jnp.float32)
        params["layers"].append({
            "wq": w(ks[0], (H, H)), "bq": jnp.zeros((1, H), jnp.float32),
            "wk": w(ks[1], (H, H)), "bk": jnp.zeros((1, H), jnp.float32),
            "wv": w(ks[2], (H, H)), "bv": jnp.zeros((1, H), jnp.float32),
            "wo": w(ks[3], (H, H)), "bo": jnp.zeros((1, H), jnp.float32),
            "ln1_g": jnp.ones((1, H), jnp.float32),
            "ln1_b": jnp.zeros((1, H), jnp.float32),
            "w1": w(ks[4], (H, inter)), "b1": jnp.zeros((1, inter), jnp.float32),
            "w2": w(ks[5], (inter, H)), "b2": jnp.zeros((1, H), jnp.float32),
            "ln2_g": jnp.ones((1, H), jnp.float32),
            "ln2_b": jnp.zeros((1, H), jnp.float32),
        })
    return params


def prepare_weights(params, num_heads, compute_dtype=jnp.bfloat16):
    """One-time prep: stack per-layer weights along a leading layer axis, apply the
    per-head q/k de-interleave permutation (rotate-half RoPE form; orthogonal change
    of basis shared by q and k so scores match HF's interleaved form), fold the
    1/sqrt(head_dim) score scale into wq/bq, and cast matmul weights to
    compute_dtype (biases / LN params stay f32)."""
    H = params["cls"].shape[-1]
    dh = H // num_heads
    scale = 1.0 / (dh ** 0.5)
    perm = _deinterleave_perm(H, num_heads)

    def stack(name):
        return jnp.stack([lp[name] for lp in params["layers"]], axis=0)

    return {
        "wq": (stack("wq") * scale)[:, :, perm].astype(compute_dtype),
        "bq": (stack("bq") * scale)[:, :, perm],
        "wk": stack("wk")[:, :, perm].astype(compute_dtype),
        "bk": stack("bk")[:, :, perm],
        "wv": stack("wv").astype(compute_dtype), "bv": stack("bv"),
        "wo": stack("wo").astype(compute_dtype), "bo": stack("bo"),
        "ln1_g": stack("ln1_g"), "ln1_b": stack("ln1_b"),
        "w1": stack("w1").astype(compute_dtype), "b1": stack("b1"),
        "w2": stack("w2").astype(compute_dtype), "b2": stack("b2"),
        "ln2_g": stack("ln2_g"), "ln2_b": stack("ln2_b"),
    }


def eeg_sleep_backbone_forward(eeg, params, prepared, *, num_heads):
    """forward(eeg) -> last_hidden_state, shape (B, L+1, H)."""
    B, L, H = eeg.shape
    dh = H // num_heads
    S = L + 1
    x = jnp.concatenate([jnp.broadcast_to(params["cls"], (B, 1, H)), eeg], axis=1)
    x = x + params["tt_emb"]            # token_type_ids == 0 embedding row (XLA)
    sin, cos = _rope_tables(S, dh)
    return _fused_call(x, sin, cos, params["emb_ln_g"], params["emb_ln_b"],
                       prepared, num_heads, dh)


# -----------------------------------------------------------------------------
# Pure-JAX reference (HF-style interleaved rotary) for validation
# -----------------------------------------------------------------------------
def _reference_forward(eeg, params, *, num_heads, weight_dtype=jnp.float32):
    cast = lambda a: a.astype(weight_dtype).astype(jnp.float32)
    B, L, H = eeg.shape
    dh = H // num_heads
    x = jnp.concatenate([jnp.broadcast_to(params["cls"], (B, 1, H)), eeg], axis=1)
    S = L + 1
    h = _layer_norm(x + params["tt_emb"], params["emb_ln_g"], params["emb_ln_b"])
    inv = 1.0 / (10000.0 ** (jnp.arange(0, dh, 2, dtype=jnp.float32) / dh))
    ang = jnp.arange(S, dtype=jnp.float32)[:, None] * inv[None, :]
    sin_i = jnp.repeat(jnp.sin(ang), 2, axis=-1)
    cos_i = jnp.repeat(jnp.cos(ang), 2, axis=-1)

    def rope_i(t):  # t: (B, nH, S, dh), HF interleaved rotate
        rot = jnp.stack([-t[..., 1::2], t[..., 0::2]], axis=-1).reshape(t.shape)
        return t * cos_i + rot * sin_i

    for lp in params["layers"]:
        def proj(w, b):
            return (h @ w + b).reshape(B, S, num_heads, dh).transpose(0, 2, 1, 3)
        q = rope_i(proj(cast(lp["wq"]), lp["bq"]))
        k = rope_i(proj(cast(lp["wk"]), lp["bk"]))
        v = proj(cast(lp["wv"]), lp["bv"])
        s = jnp.einsum("bhqd,bhkd->bhqk", q, k) / (dh ** 0.5)
        p = jax.nn.softmax(s, axis=-1)
        ctx = jnp.einsum("bhqk,bhkd->bhqd", p, v).transpose(0, 2, 1, 3).reshape(B, S, H)
        h = _layer_norm(ctx @ cast(lp["wo"]) + lp["bo"] + h, lp["ln1_g"], lp["ln1_b"])
        ff = jax.nn.gelu(h @ cast(lp["w1"]) + lp["b1"], approximate=True)
        ff = ff @ cast(lp["w2"]) + lp["b2"]
        h = _layer_norm(ff + h, lp["ln2_g"], lp["ln2_b"])
    return h


if __name__ == "__main__":
    B, L = 4, 8                  # batch, eeg sequence length (batch-blocked: Bt=2)
    H, NH, I, NL = 32, 4, 64, 2  # hidden, heads, intermediate, layers

    key = jax.random.PRNGKey(0)
    k_eeg, k_params = jax.random.split(key)
    eeg = jax.random.normal(k_eeg, (B, L, H), dtype=jnp.float32)
    params = init_params(k_params, H, NH, I, NL)

    # --- f32 path: tight check against the pure-JAX reference -----------------
    w32 = prepare_weights(params, NH, jnp.float32)
    out32 = jax.block_until_ready(
        eeg_sleep_backbone_forward(eeg, params, w32, num_heads=NH))
    assert out32.shape == (B, L + 1, H)
    assert bool(jnp.all(jnp.isfinite(out32)))
    ref32 = jax.block_until_ready(_reference_forward(eeg, params, num_heads=NH))
    assert bool(jnp.allclose(out32, ref32, atol=5e-3, rtol=5e-3))

    # --- bf16 fast path (bf16 weights/matmul inputs, f32 accumulation/LN) -----
    wbf = prepare_weights(params, NH, jnp.bfloat16)
    outbf = jax.block_until_ready(
        eeg_sleep_backbone_forward(eeg, params, wbf, num_heads=NH))
    assert bool(jnp.all(jnp.isfinite(outbf)))
    refbf = jax.block_until_ready(
        _reference_forward(eeg, params, num_heads=NH, weight_dtype=jnp.bfloat16))
    assert float(jnp.max(jnp.abs(outbf - refbf))) < 0.2

    print("KERNEL_OK")
</pallas_src>

<mosaic_0001>
module attributes {stable_mosaic.version = 11 : i64} {
  func.func @fused_encoder_kernel(%arg0: i32, %arg1: i32, %arg2: i32, %arg3: memref<2x9x32xf32, #tpu.memory_space<vmem>>, %arg4: memref<9x8xf32, #tpu.memory_space<vmem>>, %arg5: memref<9x8xf32, #tpu.memory_space<vmem>>, %arg6: memref<1x32xf32, #tpu.memory_space<vmem>>, %arg7: memref<1x32xf32, #tpu.memory_space<vmem>>, %arg8: memref<1x32x32xf32, #tpu.memory_space<vmem>>, %arg9: memref<1x1x32xf32, #tpu.memory_space<vmem>>, %arg10: memref<1x32x32xf32, #tpu.memory_space<vmem>>, %arg11: memref<1x1x32xf32, #tpu.memory_space<vmem>>, %arg12: memref<1x32x32xf32, #tpu.memory_space<vmem>>, %arg13: memref<1x1x32xf32, #tpu.memory_space<vmem>>, %arg14: memref<1x32x32xf32, #tpu.memory_space<vmem>>, %arg15: memref<1x1x32xf32, #tpu.memory_space<vmem>>, %arg16: memref<1x1x32xf32, #tpu.memory_space<vmem>>, %arg17: memref<1x1x32xf32, #tpu.memory_space<vmem>>, %arg18: memref<1x32x64xf32, #tpu.memory_space<vmem>>, %arg19: memref<1x1x64xf32, #tpu.memory_space<vmem>>, %arg20: memref<1x64x32xf32, #tpu.memory_space<vmem>>, %arg21: memref<1x1x32xf32, #tpu.memory_space<vmem>>, %arg22: memref<1x1x32xf32, #tpu.memory_space<vmem>>, %arg23: memref<1x1x32xf32, #tpu.memory_space<vmem>>, %arg24: memref<2x9x32xf32, #tpu.memory_space<vmem>>, %arg25: memref<18x32xf32, #tpu.memory_space<vmem>>, %arg26: memref<18x32xf32, #tpu.memory_space<vmem>>) attributes {dimension_semantics = [#tpu.dimension_semantics<parallel>, #tpu.dimension_semantics<arbitrary>, #tpu.dimension_semantics<arbitrary>], iteration_bounds = array<i64: 2, 2, 1>, scalar_prefetch = 0 : i64, scratch_operands = 2 : i64, tpu.core_type = #tpu.core_type<tc>, window_params = [{transform_indices = @transform_0, window_bounds = array<i64: 2, 9, 32>}, {pipeline_mode = #tpu.pipeline_mode<synchronous>, transform_indices = @transform_1, window_bounds = array<i64: 9, 8>}, {pipeline_mode = #tpu.pipeline_mode<synchronous>, transform_indices = @transform_2, window_bounds = array<i64: 9, 8>}, {pipeline_mode = #tpu.pipeline_mode<synchronous>, transform_indices = @transform_3, window_bounds = array<i64: 1, 32>}, {pipeline_mode = #tpu.pipeline_mode<synchronous>, transform_indices = @transform_4, window_bounds = array<i64: 1, 32>}, {transform_indices = @transform_5, window_bounds = array<i64: 1, 32, 32>}, {transform_indices = @transform_6, window_bounds = array<i64: 1, 1, 32>}, {transform_indices = @transform_7, window_bounds = array<i64: 1, 32, 32>}, {transform_indices = @transform_8, window_bounds = array<i64: 1, 1, 32>}, {transform_indices = @transform_9, window_bounds = array<i64: 1, 32, 32>}, {transform_indices = @transform_10, window_bounds = array<i64: 1, 1, 32>}, {transform_indices = @transform_11, window_bounds = array<i64: 1, 32, 32>}, {transform_indices = @transform_12, window_bounds = array<i64: 1, 1, 32>}, {transform_indices = @transform_13, window_bounds = array<i64: 1, 1, 32>}, {transform_indices = @transform_14, window_bounds = array<i64: 1, 1, 32>}, {transform_indices = @transform_15, window_bounds = array<i64: 1, 32, 64>}, {transform_indices = @transform_16, window_bounds = array<i64: 1, 1, 64>}, {transform_indices = @transform_17, window_bounds = array<i64: 1, 64, 32>}, {transform_indices = @transform_18, window_bounds = array<i64: 1, 1, 32>}, {transform_indices = @transform_19, window_bounds = array<i64: 1, 1, 32>}, {transform_indices = @transform_20, window_bounds = array<i64: 1, 1, 32>}, {transform_indices = @transform_21, window_bounds = array<i64: 2, 9, 32>}]} {
    %c0_i32 = arith.constant 0 : i32
    %0 = arith.cmpi eq, %arg2, %c0_i32 : i32
    %1 = arith.extui %0 : i1 to i32
    %c0_i32_0 = arith.constant 0 : i32
    %2 = arith.cmpi ne, %1, %c0_i32_0 : i32
    scf.if %2 {
      %c0_i32_22 = arith.constant 0 : i32
      %33 = arith.cmpi eq, %arg1, %c0_i32_22 : i32
      %34 = arith.extui %33 : i1 to i32
      %c0_i32_23 = arith.constant 0 : i32
      %35 = arith.cmpi ne, %34, %c0_i32_23 : i32
      scf.if %35 {
        %c0_79 = arith.constant 0 : index
        %c0_80 = arith.constant 0 : index
        %c0_81 = arith.constant 0 : index
        %139 = vector.load %arg3[%c0_79, %c0_80, %c0_81] : memref<2x9x32xf32, #tpu.memory_space<vmem>>, vector<2x9x32xf32>
        %140 = vector.shape_cast %139 : vector<2x9x32xf32> to vector<18x32xf32>
        %c0_82 = arith.constant 0 : index
        %c0_83 = arith.constant 0 : index
        %141 = vector.load %arg6[%c0_82, %c0_83] : memref<1x32xf32, #tpu.memory_space<vmem>>, vector<1x32xf32>
        %c0_84 = arith.constant 0 : index
        %c0_85 = arith.constant 0 : index
        %142 = vector.load %arg7[%c0_84, %c0_85] : memref<1x32xf32, #tpu.memory_space<vmem>>, vector<1x32xf32>
        %cst_86 = arith.constant dense<0.000000e+00> : vector<18xf32>
        %143 = vector.multi_reduction <add>, %140, %cst_86 [1] : vector<18x32xf32> to vector<18xf32>
        %144 = vector.shape_cast %143 : vector<18xf32> to vector<18x1xf32>
        %cst_87 = arith.constant 3.200000e+01 : f32
        %145 = vector.broadcast %cst_87 : f32 to vector<18x1xf32>
        %146 = arith.divf %144, %145 : vector<18x1xf32>
        %147 = vector.broadcast %146 : vector<18x1xf32> to vector<18x32xf32>
        %148 = arith.subf %140, %147 : vector<18x32xf32>
        %149 = arith.mulf %148, %148 : vector<18x32xf32>
        %cst_88 = arith.constant dense<0.000000e+00> : vector<18xf32>
        %150 = vector.multi_reduction <add>, %149, %cst_88 [1] : vector<18x32xf32> to vector<18xf32>
        %151 = vector.shape_cast %150 : vector<18xf32> to vector<18x1xf32>
        %cst_89 = arith.constant 3.200000e+01 : f32
        %152 = vector.broadcast %cst_89 : f32 to vector<18x1xf32>
        %153 = arith.divf %151, %152 : vector<18x1xf32>
        %154 = vector.broadcast %146 : vector<18x1xf32> to vector<18x32xf32>
        %155 = arith.subf %140, %154 : vector<18x32xf32>
        %cst_90 = arith.constant 9.99999996E-13 : f32
        %156 = vector.broadcast %cst_90 : f32 to vector<18x1xf32>
        %157 = arith.addf %153, %156 : vector<18x1xf32>
        %158 = math.rsqrt %157 : vector<18x1xf32>
        %159 = vector.broadcast %158 : vector<18x1xf32> to vector<18x32xf32>
        %160 = arith.mulf %155, %159 : vector<18x32xf32>
        %161 = vector.broadcast %141 : vector<1x32xf32> to vector<18x32xf32>
        %162 = arith.mulf %160, %161 : vector<18x32xf32>
        %163 = vector.broadcast %142 : vector<1x32xf32> to vector<18x32xf32>
        %164 = arith.addf %162, %163 : vector<18x32xf32>
        %165 = vector.shape_cast %164 : vector<18x32xf32> to vector<2x9x32xf32>
        %c0_91 = arith.constant 0 : index
        %c0_92 = arith.constant 0 : index
        %c0_93 = arith.constant 0 : index
        %166 = vector.load %arg24[%c0_91, %c0_92, %c0_93] : memref<2x9x32xf32, #tpu.memory_space<vmem>>, vector<2x9x32xf32>
        tpu.vector_store %arg24[%c0_91, %c0_92, %c0_93], %165 {strides = array<i32>} : memref<2x9x32xf32, #tpu.memory_space<vmem>>, vector<2x9x32xf32>,
      } else {
      }
      %c0_24 = arith.constant 0 : index
      %c0_25 = arith.constant 0 : index
      %c0_26 = arith.constant 0 : index
      %36 = vector.load %arg24[%c0_24, %c0_25, %c0_26] : memref<2x9x32xf32, #tpu.memory_space<vmem>>, vector<2x9x32xf32>
      %37 = vector.shape_cast %36 : vector<2x9x32xf32> to vector<18x32xf32>
      %c0_27 = arith.constant 0 : index
      %c0_28 = arith.constant 0 : index
      %c0_29 = arith.constant 0 : index
      %38 = vector.load %arg8[%c0_27, %c0_28, %c0_29] : memref<1x32x32xf32, #tpu.memory_space<vmem>>, vector<1x32x32xf32>
      %39 = vector.shape_cast %38 : vector<1x32x32xf32> to vector<32x32xf32>
      %cst_30 = arith.constant dense<0.000000e+00> : vector<18x32xf32>
      %40 = tpu.matmul %37, %39, %cst_30 {dimension_numbers = #tpu.dot_dimension_numbers<[1], [0], [0], [1], [0, 0, 1, 1], [], []>} : vector<18x32xf32>, vector<32x32xf32>, vector<18x32xf32> -> vector<18x32xf32>
      %c0_31 = arith.constant 0 : index
      %c0_32 = arith.constant 0 : index
      %c0_33 = arith.constant 0 : index
      %41 = vector.load %arg9[%c0_31, %c0_32, %c0_33] : memref<1x1x32xf32, #tpu.memory_space<vmem>>, vector<1x1x32xf32>
      %42 = vector.shape_cast %41 : vector<1x1x32xf32> to vector<1x32xf32>
      %43 = vector.broadcast %42 : vector<1x32xf32> to vector<18x32xf32>
      %44 = arith.addf %40, %43 : vector<18x32xf32>
      %c0_34 = arith.constant 0 : index
      %c0_35 = arith.constant 0 : index
      %c0_36 = arith.constant 0 : index
      %45 = vector.load %arg10[%c0_34, %c0_35, %c0_36] : memref<1x32x32xf32, #tpu.memory_space<vmem>>, vector<1x32x32xf32>
      %46 = vector.shape_cast %45 : vector<1x32x32xf32> to vector<32x32xf32>
      %cst_37 = arith.constant dense<0.000000e+00> : vector<18x32xf32>
      %47 = tpu.matmul %37, %46, %cst_37 {dimension_numbers = #tpu.dot_dimension_numbers<[1], [0], [0], [1], [0, 0, 1, 1], [], []>} : vector<18x32xf32>, vector<32x32xf32>, vector<18x32xf32> -> vector<18x32xf32>
      %c0_38 = arith.constant 0 : index
      %c0_39 = arith.constant 0 : index
      %c0_40 = arith.constant 0 : index
      %48 = vector.load %arg11[%c0_38, %c0_39, %c0_40] : memref<1x1x32xf32, #tpu.memory_space<vmem>>, vector<1x1x32xf32>
      %49 = vector.shape_cast %48 : vector<1x1x32xf32> to vector<1x32xf32>
      %50 = vector.broadcast %49 : vector<1x32xf32> to vector<18x32xf32>
      %51 = arith.addf %47, %50 : vector<18x32xf32>
      %c0_41 = arith.constant 0 : index
      %c0_42 = arith.constant 0 : index
      %c0_43 = arith.constant 0 : index
      %52 = vector.load %arg12[%c0_41, %c0_42, %c0_43] : memref<1x32x32xf32, #tpu.memory_space<vmem>>, vector<1x32x32xf32>
      %53 = vector.shape_cast %52 : vector<1x32x32xf32> to vector<32x32xf32>
      %cst_44 = arith.constant dense<0.000000e+00> : vector<18x32xf32>
      %54 = tpu.matmul %37, %53, %cst_44 {dimension_numbers = #tpu.dot_dimension_numbers<[1], [0], [0], [1], [0, 0, 1, 1], [], []>} : vector<18x32xf32>, vector<32x32xf32>, vector<18x32xf32> -> vector<18x32xf32>
      %c0_45 = arith.constant 0 : index
      %c0_46 = arith.constant 0 : index
      %c0_47 = arith.constant 0 : index
      %55 = vector.load %arg13[%c0_45, %c0_46, %c0_47] : memref<1x1x32xf32, #tpu.memory_space<vmem>>, vector<1x1x32xf32>
      %56 = vector.shape_cast %55 : vector<1x1x32xf32> to vector<1x32xf32>
      %57 = vector.broadcast %56 : vector<1x32xf32> to vector<18x32xf32>
      %58 = arith.addf %54, %57 : vector<18x32xf32>
      %c0_48 = arith.constant 0 : index
      %c0_49 = arith.constant 0 : index
      %59 = vector.load %arg4[%c0_48, %c0_49] : memref<9x8xf32, #tpu.memory_space<vmem>>, vector<9x8xf32>
      %60 = vector.shape_cast %59 : vector<9x8xf32> to vector<1x9x8xf32>
      %c0_50 = arith.constant 0 : index
      %c0_51 = arith.constant 0 : index
      %61 = vector.load %arg5[%c0_50, %c0_51] : memref<9x8xf32, #tpu.memory_space<vmem>>, vector<9x8xf32>
      %62 = vector.shape_cast %61 : vector<9x8xf32> to vector<1x9x8xf32>
      %63 = vector.shape_cast %44 : vector<18x32xf32> to vector<2x9x4x8xf32>
      %64 = tpu.transpose %63, [0, 2, 1, 3] : vector<2x9x4x8xf32> -> vector<2x4x9x8xf32>
      %65 = vector.shape_cast %64 : vector<2x4x9x8xf32> to vector<8x9x8xf32>
      %66 = vector.extract_strided_slice %65 {offsets = [0, 0, 4], sizes = [8, 9, 4], strides = [1, 1, 1]} : vector<8x9x8xf32> to vector<8x9x4xf32>
      %67 = vector.extract_strided_slice %65 {offsets = [0, 0, 0], sizes = [8, 9, 4], strides = [1, 1, 1]} : vector<8x9x8xf32> to vector<8x9x4xf32>
      %68 = tpu.concatenate %66, %67 in 2 : vector<8x9x4xf32>, vector<8x9x4xf32> -> vector<8x9x8xf32>
      %69 = vector.broadcast %62 : vector<1x9x8xf32> to vector<8x9x8xf32>
      %70 = arith.mulf %65, %69 : vector<8x9x8xf32>
      %71 = vector.broadcast %60 : vector<1x9x8xf32> to vector<8x9x8xf32>
      %72 = arith.mulf %68, %71 : vector<8x9x8xf32>
      %73 = arith.addf %70, %72 : vector<8x9x8xf32>
      %74 = vector.shape_cast %51 : vector<18x32xf32> to vector<2x9x4x8xf32>
      %75 = tpu.transpose %74, [0, 2, 1, 3] : vector<2x9x4x8xf32> -> vector<2x4x9x8xf32>
      %76 = vector.shape_cast %75 : vector<2x4x9x8xf32> to vector<8x9x8xf32>
      %77 = vector.extract_strided_slice %76 {offsets = [0, 0, 4], sizes = [8, 9, 4], strides = [1, 1, 1]} : vector<8x9x8xf32> to vector<8x9x4xf32>
      %78 = vector.extract_strided_slice %76 {offsets = [0, 0, 0], sizes = [8, 9, 4], strides = [1, 1, 1]} : vector<8x9x8xf32> to vector<8x9x4xf32>
      %79 = tpu.concatenate %77, %78 in 2 : vector<8x9x4xf32>, vector<8x9x4xf32> -> vector<8x9x8xf32>
      %80 = vector.broadcast %62 : vector<1x9x8xf32> to vector<8x9x8xf32>
      %81 = arith.mulf %76, %80 : vector<8x9x8xf32>
      %82 = vector.broadcast %60 : vector<1x9x8xf32> to vector<8x9x8xf32>
      %83 = arith.mulf %79, %82 : vector<8x9x8xf32>
      %84 = arith.addf %81, %83 : vector<8x9x8xf32>
      %85 = vector.shape_cast %58 : vector<18x32xf32> to vector<2x9x4x8xf32>
      %86 = tpu.transpose %85, [0, 2, 1, 3] : vector<2x9x4x8xf32> -> vector<2x4x9x8xf32>
      %87 = vector.shape_cast %86 : vector<2x4x9x8xf32> to vector<8x9x8xf32>
      "tpu.trace_start"() <{level = 10 : i32, message = "bqd,bkd->bqk"}> : () -> ()
      %cst_52 = arith.constant dense<0.000000e+00> : vector<8x9x9xf32>
      %88 = tpu.matmul %73, %84, %cst_52 {dimension_numbers = #tpu.dot_dimension_numbers<[2], [2], [1], [1], [0, 0, 0, 1, 1, 1], [0], [0]>} : vector<8x9x8xf32>, vector<8x9x8xf32>, vector<8x9x9xf32> -> vector<8x9x9xf32>
      "tpu.trace_stop"() : () -> ()
      %cst_53 = arith.constant dense<0xFF800000> : vector<8x9xf32>
      %89 = vector.multi_reduction <maximumf>, %88, %cst_53 [2] : vector<8x9x9xf32> to vector<8x9xf32>
      %90 = vector.shape_cast %89 : vector<8x9xf32> to vector<8x9x1xf32>
      %91 = vector.broadcast %90 : vector<8x9x1xf32> to vector<8x9x9xf32>
      %92 = arith.subf %88, %91 : vector<8x9x9xf32>
      %93 = math.exp %92 : vector<8x9x9xf32>
      %cst_54 = arith.constant dense<0.000000e+00> : vector<8x9xf32>
      %94 = vector.multi_reduction <add>, %93, %cst_54 [2] : vector<8x9x9xf32> to vector<8x9xf32>
      %95 = vector.shape_cast %94 : vector<8x9xf32> to vector<8x9x1xf32>
      %96 = vector.broadcast %95 : vector<8x9x1xf32> to vector<8x9x9xf32>
      %97 = arith.divf %93, %96 : vector<8x9x9xf32>
      "tpu.trace_start"() <{level = 10 : i32, message = "bqk,bkd->bqd"}> : () -> ()
      %cst_55 = arith.constant dense<0.000000e+00> : vector<8x9x8xf32>
      %98 = tpu.matmul %97, %87, %cst_55 {dimension_numbers = #tpu.dot_dimension_numbers<[2], [1], [1], [2], [0, 0, 0, 1, 1, 2], [0], [0]>} : vector<8x9x9xf32>, vector<8x9x8xf32>, vector<8x9x8xf32> -> vector<8x9x8xf32>
      "tpu.trace_stop"() : () -> ()
      %99 = vector.shape_cast %98 : vector<8x9x8xf32> to vector<2x4x9x8xf32>
      %100 = tpu.transpose %99, [0, 2, 1, 3] : vector<2x4x9x8xf32> -> vector<2x9x4x8xf32>
      %101 = vector.shape_cast %100 : vector<2x9x4x8xf32> to vector<18x32xf32>
      %c0_56 = arith.constant 0 : index
      %c0_57 = arith.constant 0 : index
      %c0_58 = arith.constant 0 : index
      %102 = vector.load %arg14[%c0_56, %c0_57, %c0_58] : memref<1x32x32xf32, #tpu.memory_space<vmem>>, vector<1x32x32xf32>
      %103 = vector.shape_cast %102 : vector<1x32x32xf32> to vector<32x32xf32>
      %cst_59 = arith.constant dense<0.000000e+00> : vector<18x32xf32>
      %104 = tpu.matmul %101, %103, %cst_59 {dimension_numbers = #tpu.dot_dimension_numbers<[1], [0], [0], [1], [0, 0, 1, 1], [], []>} : vector<18x32xf32>, vector<32x32xf32>, vector<18x32xf32> -> vector<18x32xf32>
      %c0_60 = arith.constant 0 : index
      %c0_61 = arith.constant 0 : index
      %c0_62 = arith.constant 0 : index
      %105 = vector.load %arg15[%c0_60, %c0_61, %c0_62] : memref<1x1x32xf32, #tpu.memory_space<vmem>>, vector<1x1x32xf32>
      %106 = vector.shape_cast %105 : vector<1x1x32xf32> to vector<1x32xf32>
      %107 = vector.broadcast %106 : vector<1x32xf32> to vector<18x32xf32>
      %108 = arith.addf %104, %107 : vector<18x32xf32>
      %109 = arith.addf %108, %37 : vector<18x32xf32>
      %c0_63 = arith.constant 0 : index
      %c0_64 = arith.constant 0 : index
      %c0_65 = arith.constant 0 : index
      %110 = vector.load %arg16[%c0_63, %c0_64, %c0_65] : memref<1x1x32xf32, #tpu.memory_space<vmem>>, vector<1x1x32xf32>
      %111 = vector.shape_cast %110 : vector<1x1x32xf32> to vector<1x32xf32>
      %c0_66 = arith.constant 0 : index
      %c0_67 = arith.constant 0 : index
      %c0_68 = arith.constant 0 : index
      %112 = vector.load %arg17[%c0_66, %c0_67, %c0_68] : memref<1x1x32xf32, #tpu.memory_space<vmem>>, vector<1x1x32xf32>
      %113 = vector.shape_cast %112 : vector<1x1x32xf32> to vector<1x32xf32>
      %cst_69 = arith.constant dense<0.000000e+00> : vector<18xf32>
      %114 = vector.multi_reduction <add>, %109, %cst_69 [1] : vector<18x32xf32> to vector<18xf32>
      %115 = vector.shape_cast %114 : vector<18xf32> to vector<18x1xf32>
      %cst_70 = arith.constant 3.200000e+01 : f32
      %116 = vector.broadcast %cst_70 : f32 to vector<18x1xf32>
      %117 = arith.divf %115, %116 : vector<18x1xf32>
      %118 = vector.broadcast %117 : vector<18x1xf32> to vector<18x32xf32>
      %119 = arith.subf %109, %118 : vector<18x32xf32>
      %120 = arith.mulf %119, %119 : vector<18x32xf32>
      %cst_71 = arith.constant dense<0.000000e+00> : vector<18xf32>
      %121 = vector.multi_reduction <add>, %120, %cst_71 [1] : vector<18x32xf32> to vector<18xf32>
      %122 = vector.shape_cast %121 : vector<18xf32> to vector<18x1xf32>
      %cst_72 = arith.constant 3.200000e+01 : f32
      %123 = vector.broadcast %cst_72 : f32 to vector<18x1xf32>
      %124 = arith.divf %122, %123 : vector<18x1xf32>
      %125 = vector.broadcast %117 : vector<18x1xf32> to vector<18x32xf32>
      %126 = arith.subf %109, %125 : vector<18x32xf32>
      %cst_73 = arith.constant 9.99999996E-13 : f32
      %127 = vector.broadcast %cst_73 : f32 to vector<18x1xf32>
      %128 = arith.addf %124, %127 : vector<18x1xf32>
      %129 = math.rsqrt %128 : vector<18x1xf32>
      %130 = vector.broadcast %129 : vector<18x1xf32> to vector<18x32xf32>
      %131 = arith.mulf %126, %130 : vector<18x32xf32>
      %132 = vector.broadcast %111 : vector<1x32xf32> to vector<18x32xf32>
      %133 = arith.mulf %131, %132 : vector<18x32xf32>
      %134 = vector.broadcast %113 : vector<1x32xf32> to vector<18x32xf32>
      %135 = arith.addf %133, %134 : vector<18x32xf32>
      %c0_74 = arith.constant 0 : index
      %c0_75 = arith.constant 0 : index
      %136 = vector.load %arg25[%c0_74, %c0_75] : memref<18x32xf32, #tpu.memory_space<vmem>>, vector<18x32xf32>
      tpu.vector_store %arg25[%c0_74, %c0_75], %135 {strides = array<i32>} : memref<18x32xf32, #tpu.memory_space<vmem>>, vector<18x32xf32>,
      %cst_76 = arith.constant 0.000000e+00 : f32
      %137 = vector.broadcast %cst_76 : f32 to vector<18x32xf32>
      %c0_77 = arith.constant 0 : index
      %c0_78 = arith.constant 0 : index
      %138 = vector.load %arg26[%c0_77, %c0_78] : memref<18x32xf32, #tpu.memory_space<vmem>>, vector<18x32xf32>
      tpu.vector_store %arg26[%c0_77, %c0_78], %137 {strides = array<i32>} : memref<18x32xf32, #tpu.memory_space<vmem>>, vector<18x32xf32>,
    } else {
    }
    %c0 = arith.constant 0 : index
    %c0_1 = arith.constant 0 : index
    %3 = vector.load %arg25[%c0, %c0_1] : memref<18x32xf32, #tpu.memory_space<vmem>>, vector<18x32xf32>
    %c0_2 = arith.constant 0 : index
    %c0_3 = arith.constant 0 : index
    %c0_4 = arith.constant 0 : index
    %4 = vector.load %arg18[%c0_2, %c0_3, %c0_4] : memref<1x32x64xf32, #tpu.memory_space<vmem>>, vector<1x32x64xf32>
    %5 = vector.shape_cast %4 : vector<1x32x64xf32> to vector<32x64xf32>
    %cst = arith.constant dense<0.000000e+00> : vector<18x64xf32>
    %6 = tpu.matmul %3, %5, %cst {dimension_numbers = #tpu.dot_dimension_numbers<[1], [0], [0], [1], [0, 0, 1, 1], [], []>} : vector<18x32xf32>, vector<32x64xf32>, vector<18x64xf32> -> vector<18x64xf32>
    %c0_5 = arith.constant 0 : index
    %c0_6 = arith.constant 0 : index
    %c0_7 = arith.constant 0 : index
    %7 = vector.load %arg19[%c0_5, %c0_6, %c0_7] : memref<1x1x64xf32, #tpu.memory_space<vmem>>, vector<1x1x64xf32>
    %8 = vector.shape_cast %7 : vector<1x1x64xf32> to vector<1x64xf32>
    %9 = vector.broadcast %8 : vector<1x64xf32> to vector<18x64xf32>
    %10 = arith.addf %6, %9 : vector<18x64xf32>
    %11 = arith.mulf %10, %10 : vector<18x64xf32>
    %12 = arith.mulf %10, %11 : vector<18x64xf32>
    %cst_8 = arith.constant 4.471500e-02 : f32
    %13 = vector.broadcast %cst_8 : f32 to vector<18x64xf32>
    %14 = arith.mulf %13, %12 : vector<18x64xf32>
    %15 = arith.addf %10, %14 : vector<18x64xf32>
    %cst_9 = arith.constant 0.797884583 : f32
    %16 = vector.broadcast %cst_9 : f32 to vector<18x64xf32>
    %17 = arith.mulf %16, %15 : vector<18x64xf32>
    %18 = math.tanh %17 : vector<18x64xf32>
    %cst_10 = arith.constant 1.000000e+00 : f32
    %19 = vector.broadcast %cst_10 : f32 to vector<18x64xf32>
    %20 = arith.addf %19, %18 : vector<18x64xf32>
    %cst_11 = arith.constant 5.000000e-01 : f32
    %21 = vector.broadcast %cst_11 : f32 to vector<18x64xf32>
    %22 = arith.mulf %21, %20 : vector<18x64xf32>
    %23 = arith.mulf %10, %22 : vector<18x64xf32>
    %c0_12 = arith.constant 0 : index
    %c0_13 = arith.constant 0 : index
    %24 = vector.load %arg26[%c0_12, %c0_13] : memref<18x32xf32, #tpu.memory_space<vmem>>, vector<18x32xf32>
    %c0_14 = arith.constant 0 : index
    %c0_15 = arith.constant 0 : index
    %c0_16 = arith.constant 0 : index
    %25 = vector.load %arg20[%c0_14, %c0_15, %c0_16] : memref<1x64x32xf32, #tpu.memory_space<vmem>>, vector<1x64x32xf32>
    %26 = vector.shape_cast %25 : vector<1x64x32xf32> to vector<64x32xf32>
    %cst_17 = arith.constant dense<0.000000e+00> : vector<18x32xf32>
    %27 = tpu.matmul %23, %26, %cst_17 {dimension_numbers = #tpu.dot_dimension_numbers<[1], [0], [0], [1], [0, 0, 1, 1], [], []>} : vector<18x64xf32>, vector<64x32xf32>, vector<18x32xf32> -> vector<18x32xf32>
    %28 = arith.addf %24, %27 : vector<18x32xf32>
    %c0_18 = arith.constant 0 : index
    %c0_19 = arith.constant 0 : index
    %29 = vector.load %arg26[%c0_18, %c0_19] : memref<18x32xf32, #tpu.memory_space<vmem>>, vector<18x32xf32>
    tpu.vector_store %arg26[%c0_18, %c0_19], %28 {strides = array<i32>} : memref<18x32xf32, #tpu.memory_space<vmem>>, vector<18x32xf32>,
    %c0_i32_20 = arith.constant 0 : i32
    %30 = arith.cmpi eq, %arg2, %c0_i32_20 : i32
    %31 = arith.extui %30 : i1 to i32
    %c0_i32_21 = arith.constant 0 : i32
    %32 = arith.cmpi ne, %31, %c0_i32_21 : i32
    scf.if %32 {
      %c0_22 = arith.constant 0 : index
      %c0_23 = arith.constant 0 : index
      %33 = vector.load %arg26[%c0_22, %c0_23] : memref<18x32xf32, #tpu.memory_space<vmem>>, vector<18x32xf32>
      %c0_24 = arith.constant 0 : index
      %c0_25 = arith.constant 0 : index
      %c0_26 = arith.constant 0 : index
      %34 = vector.load %arg21[%c0_24, %c0_25, %c0_26] : memref<1x1x32xf32, #tpu.memory_space<vmem>>, vector<1x1x32xf32>
      %35 = vector.shape_cast %34 : vector<1x1x32xf32> to vector<1x32xf32>
      %36 = vector.broadcast %35 : vector<1x32xf32> to vector<18x32xf32>
      %37 = arith.addf %33, %36 : vector<18x32xf32>
      %38 = arith.addf %37, %3 : vector<18x32xf32>
      %c0_27 = arith.constant 0 : index
      %c0_28 = arith.constant 0 : index
      %c0_29 = arith.constant 0 : index
      %39 = vector.load %arg22[%c0_27, %c0_28, %c0_29] : memref<1x1x32xf32, #tpu.memory_space<vmem>>, vector<1x1x32xf32>
      %40 = vector.shape_cast %39 : vector<1x1x32xf32> to vector<1x32xf32>
      %c0_30 = arith.constant 0 : index
      %c0_31 = arith.constant 0 : index
      %c0_32 = arith.constant 0 : index
      %41 = vector.load %arg23[%c0_30, %c0_31, %c0_32] : memref<1x1x32xf32, #tpu.memory_space<vmem>>, vector<1x1x32xf32>
      %42 = vector.shape_cast %41 : vector<1x1x32xf32> to vector<1x32xf32>
      %cst_33 = arith.constant dense<0.000000e+00> : vector<18xf32>
      %43 = vector.multi_reduction <add>, %38, %cst_33 [1] : vector<18x32xf32> to vector<18xf32>
      %44 = vector.shape_cast %43 : vector<18xf32> to vector<18x1xf32>
      %cst_34 = arith.constant 3.200000e+01 : f32
      %45 = vector.broadcast %cst_34 : f32 to vector<18x1xf32>
      %46 = arith.divf %44, %45 : vector<18x1xf32>
      %47 = vector.broadcast %46 : vector<18x1xf32> to vector<18x32xf32>
      %48 = arith.subf %38, %47 : vector<18x32xf32>
      %49 = arith.mulf %48, %48 : vector<18x32xf32>
      %cst_35 = arith.constant dense<0.000000e+00> : vector<18xf32>
      %50 = vector.multi_reduction <add>, %49, %cst_35 [1] : vector<18x32xf32> to vector<18xf32>
      %51 = vector.shape_cast %50 : vector<18xf32> to vector<18x1xf32>
      %cst_36 = arith.constant 3.200000e+01 : f32
      %52 = vector.broadcast %cst_36 : f32 to vector<18x1xf32>
      %53 = arith.divf %51, %52 : vector<18x1xf32>
      %54 = vector.broadcast %46 : vector<18x1xf32> to vector<18x32xf32>
      %55 = arith.subf %38, %54 : vector<18x32xf32>
      %cst_37 = arith.constant 9.99999996E-13 : f32
      %56 = vector.broadcast %cst_37 : f32 to vector<18x1xf32>
      %57 = arith.addf %53, %56 : vector<18x1xf32>
      %58 = math.rsqrt %57 : vector<18x1xf32>
      %59 = vector.broadcast %58 : vector<18x1xf32> to vector<18x32xf32>
      %60 = arith.mulf %55, %59 : vector<18x32xf32>
      %61 = vector.broadcast %40 : vector<1x32xf32> to vector<18x32xf32>
      %62 = arith.mulf %60, %61 : vector<18x32xf32>
      %63 = vector.broadcast %42 : vector<1x32xf32> to vector<18x32xf32>
      %64 = arith.addf %62, %63 : vector<18x32xf32>
      %65 = vector.shape_cast %64 : vector<18x32xf32> to vector<2x9x32xf32>
      %c0_38 = arith.constant 0 : index
      %c0_39 = arith.constant 0 : index
      %c0_40 = arith.constant 0 : index
      %66 = vector.load %arg24[%c0_38, %c0_39, %c0_40] : memref<2x9x32xf32, #tpu.memory_space<vmem>>, vector<2x9x32xf32>
      tpu.vector_store %arg24[%c0_38, %c0_39, %c0_40], %65 {strides = array<i32>} : memref<2x9x32xf32, #tpu.memory_space<vmem>>, vector<2x9x32xf32>,
    } else {
    }
    return
  }
  func.func @transform_0(%arg0: i32, %arg1: i32, %arg2: i32) -> (i32, i32, i32) {
    %c0_i32 = arith.constant 0 : i32
    %c0_i32_0 = arith.constant 0 : i32
    %c0_i32_1 = arith.constant 0 : i32
    return %arg0, %c0_i32, %c0_i32_0 : i32, i32, i32
  }
  func.func @transform_1(%arg0: i32, %arg1: i32, %arg2: i32) -> (i32, i32) {
    %c0_i32 = arith.constant 0 : i32
    %c0_i32_0 = arith.constant 0 : i32
    %c0_i32_1 = arith.constant 0 : i32
    return %c0_i32, %c0_i32_0 : i32, i32
  }
  func.func @transform_2(%arg0: i32, %arg1: i32, %arg2: i32) -> (i32, i32) {
    %c0_i32 = arith.constant 0 : i32
    %c0_i32_0 = arith.constant 0 : i32
    %c0_i32_1 = arith.constant 0 : i32
    return %c0_i32, %c0_i32_0 : i32, i32
  }
  func.func @transform_3(%arg0: i32, %arg1: i32, %arg2: i32) -> (i32, i32) {
    %c0_i32 = arith.constant 0 : i32
    %c0_i32_0 = arith.constant 0 : i32
    %c0_i32_1 = arith.constant 0 : i32
    return %c0_i32, %c0_i32_0 : i32, i32
  }
  func.func @transform_4(%arg0: i32, %arg1: i32, %arg2: i32) -> (i32, i32) {
    %c0_i32 = arith.constant 0 : i32
    %c0_i32_0 = arith.constant 0 : i32
    %c0_i32_1 = arith.constant 0 : i32
    return %c0_i32, %c0_i32_0 : i32, i32
  }
  func.func @transform_5(%arg0: i32, %arg1: i32, %arg2: i32) -> (i32, i32, i32) {
    %c0_i32 = arith.constant 0 : i32
    %c0_i32_0 = arith.constant 0 : i32
    %c0_i32_1 = arith.constant 0 : i32
    return %arg1, %c0_i32, %c0_i32_0 : i32, i32, i32
  }
  func.func @transform_6(%arg0: i32, %arg1: i32, %arg2: i32) -> (i32, i32, i32) {
    %c0_i32 = arith.constant 0 : i32
    %c0_i32_0 = arith.constant 0 : i32
    %c0_i32_1 = arith.constant 0 : i32
    return %arg1, %c0_i32, %c0_i32_0 : i32, i32, i32
  }
  func.func @transform_7(%arg0: i32, %arg1: i32, %arg2: i32) -> (i32, i32, i32) {
    %c0_i32 = arith.constant 0 : i32
    %c0_i32_0 = arith.constant 0 : i32
    %c0_i32_1 = arith.constant 0 : i32
    return %arg1, %c0_i32, %c0_i32_0 : i32, i32, i32
  }
  func.func @transform_8(%arg0: i32, %arg1: i32, %arg2: i32) -> (i32, i32, i32) {
    %c0_i32 = arith.constant 0 : i32
    %c0_i32_0 = arith.constant 0 : i32
    %c0_i32_1 = arith.constant 0 : i32
    return %arg1, %c0_i32, %c0_i32_0 : i32, i32, i32
  }
  func.func @transform_9(%arg0: i32, %arg1: i32, %arg2: i32) -> (i32, i32, i32) {
    %c0_i32 = arith.constant 0 : i32
    %c0_i32_0 = arith.constant 0 : i32
    %c0_i32_1 = arith.constant 0 : i32
    return %arg1, %c0_i32, %c0_i32_0 : i32, i32, i32
  }
  func.func @transform_10(%arg0: i32, %arg1: i32, %arg2: i32) -> (i32, i32, i32) {
    %c0_i32 = arith.constant 0 : i32
    %c0_i32_0 = arith.constant 0 : i32
    %c0_i32_1 = arith.constant 0 : i32
    return %arg1, %c0_i32, %c0_i32_0 : i32, i32, i32
  }
  func.func @transform_11(%arg0: i32, %arg1: i32, %arg2: i32) -> (i32, i32, i32) {
    %c0_i32 = arith.constant 0 : i32
    %c0_i32_0 = arith.constant 0 : i32
    %c0_i32_1 = arith.constant 0 : i32
    return %arg1, %c0_i32, %c0_i32_0 : i32, i32, i32
  }
  func.func @transform_12(%arg0: i32, %arg1: i32, %arg2: i32) -> (i32, i32, i32) {
    %c0_i32 = arith.constant 0 : i32
    %c0_i32_0 = arith.constant 0 : i32
    %c0_i32_1 = arith.constant 0 : i32
    return %arg1, %c0_i32, %c0_i32_0 : i32, i32, i32
  }
  func.func @transform_13(%arg0: i32, %arg1: i32, %arg2: i32) -> (i32, i32, i32) {
    %c0_i32 = arith.constant 0 : i32
    %c0_i32_0 = arith.constant 0 : i32
    %c0_i32_1 = arith.constant 0 : i32
    return %arg1, %c0_i32, %c0_i32_0 : i32, i32, i32
  }
  func.func @transform_14(%arg0: i32, %arg1: i32, %arg2: i32) -> (i32, i32, i32) {
    %c0_i32 = arith.constant 0 : i32
    %c0_i32_0 = arith.constant 0 : i32
    %c0_i32_1 = arith.constant 0 : i32
    return %arg1, %c0_i32, %c0_i32_0 : i32, i32, i32
  }
  func.func @transform_15(%arg0: i32, %arg1: i32, %arg2: i32) -> (i32, i32, i32) {
    %c0_i32 = arith.constant 0 : i32
    %c0_i32_0 = arith.constant 0 : i32
    return %arg1, %c0_i32, %arg2 : i32, i32, i32
  }
  func.func @transform_16(%arg0: i32, %arg1: i32, %arg2: i32) -> (i32, i32, i32) {
    %c0_i32 = arith.constant 0 : i32
    %c0_i32_0 = arith.constant 0 : i32
    return %arg1, %c0_i32, %arg2 : i32, i32, i32
  }
  func.func @transform_17(%arg0: i32, %arg1: i32, %arg2: i32) -> (i32, i32, i32) {
    %c0_i32 = arith.constant 0 : i32
    %c0_i32_0 = arith.constant 0 : i32
    return %arg1, %arg2, %c0_i32 : i32, i32, i32
  }
  func.func @transform_18(%arg0: i32, %arg1: i32, %arg2: i32) -> (i32, i32, i32) {
    %c0_i32 = arith.constant 0 : i32
    %c0_i32_0 = arith.constant 0 : i32
    %c0_i32_1 = arith.constant 0 : i32
    return %arg1, %c0_i32, %c0_i32_0 : i32, i32, i32
  }
  func.func @transform_19(%arg0: i32, %arg1: i32, %arg2: i32) -> (i32, i32, i32) {
    %c0_i32 = arith.constant 0 : i32
    %c0_i32_0 = arith.constant 0 : i32
    %c0_i32_1 = arith.constant 0 : i32
    return %arg1, %c0_i32, %c0_i32_0 : i32, i32, i32
  }
  func.func @transform_20(%arg0: i32, %arg1: i32, %arg2: i32) -> (i32, i32, i32) {
    %c0_i32 = arith.constant 0 : i32
    %c0_i32_0 = arith.constant 0 : i32
    %c0_i32_1 = arith.constant 0 : i32
    return %arg1, %c0_i32, %c0_i32_0 : i32, i32, i32
  }
  func.func @transform_21(%arg0: i32, %arg1: i32, %arg2: i32) -> (i32, i32, i32) {
    %c0_i32 = arith.constant 0 : i32
    %c0_i32_0 = arith.constant 0 : i32
    %c0_i32_1 = arith.constant 0 : i32
    return %arg0, %c0_i32, %c0_i32_0 : i32, i32, i32
  }
}

</mosaic_0001>

<llo_original>
// kernel: tpu_custom_call.1
$region0: #{tpu_custom_call.1}
  #allocation0 [shape = 'u32[]', space=smem, size = 0x4, offset = 0x4, fixed_abs, tag = 'smem constant byte address 0x4 - core index']
  #allocation1 [shape = 'u32[144,128]{1,0:T(1,128)}', space=vmem, size = 0x12000, scoped, tag = 'internal scratch']
  #allocation2 [shape = 'f32[18,32]{1,0:T(8,128)}', space=vmem, size = 0x3000, scoped, tag = 'scratch operand']
  #allocation3 [shape = 'f32[18,32]{1,0:T(8,128)}', space=vmem, size = 0x3000, scoped, tag = 'scratch operand']
  %s0 = inlined_call_operand.vmem [shape: f32[4,9,32], index: 0, kind: input, shape index: {}]
  %s1 = inlined_call_operand.vmem [shape: f32[9,8], index: 1, kind: input, shape index: {}]
  %s2 = inlined_call_operand.vmem [shape: f32[9,8], index: 2, kind: input, shape index: {}]
  %s3 = inlined_call_operand.vmem [shape: f32[1,32], index: 3, kind: input, shape index: {}]
  %s4 = inlined_call_operand.vmem [shape: f32[1,32], index: 4, kind: input, shape index: {}]
  %s5 = inlined_call_operand.vmem [shape: f32[2,32,32], index: 5, kind: input, shape index: {}]
  %s6 = inlined_call_operand.vmem [shape: f32[2,1,32], index: 6, kind: input, shape index: {}]
  %s7 = inlined_call_operand.vmem [shape: f32[2,32,32], index: 7, kind: input, shape index: {}]
  %s8 = inlined_call_operand.vmem [shape: f32[2,1,32], index: 8, kind: input, shape index: {}]
  %s9 = inlined_call_operand.vmem [shape: f32[2,32,32], index: 9, kind: input, shape index: {}]
  %s10 = inlined_call_operand.vmem [shape: f32[2,1,32], index: 10, kind: input, shape index: {}]
  %s11 = inlined_call_operand.vmem [shape: f32[2,32,32], index: 11, kind: input, shape index: {}]
  %s12 = inlined_call_operand.vmem [shape: f32[2,1,32], index: 12, kind: input, shape index: {}]
  %s13 = inlined_call_operand.vmem [shape: f32[2,1,32], index: 13, kind: input, shape index: {}]
  %s14 = inlined_call_operand.vmem [shape: f32[2,1,32], index: 14, kind: input, shape index: {}]
  %s15 = inlined_call_operand.vmem [shape: f32[2,32,64], index: 15, kind: input, shape index: {}]
  %s16 = inlined_call_operand.vmem [shape: f32[2,1,64], index: 16, kind: input, shape index: {}]
  %s17 = inlined_call_operand.vmem [shape: f32[2,64,32], index: 17, kind: input, shape index: {}]
  %s18 = inlined_call_operand.vmem [shape: f32[2,1,32], index: 18, kind: input, shape index: {}]
  %s19 = inlined_call_operand.vmem [shape: f32[2,1,32], index: 19, kind: input, shape index: {}]
  %s20 = inlined_call_operand.vmem [shape: f32[2,1,32], index: 20, kind: input, shape index: {}]
  %s21 = inlined_call_operand.vmem [shape: f32[4,9,32], index: 21, kind: output, shape index: {}]
  %s22 = sld [smem:[#allocation0]]
  $region129: #{tpu_custom_call.1} parent=0
    _
  %s24 = ssub.s32 1, %s22
  %s25 = scalar_select 0, %s24, %s22
  loop: start=0, step=1, limit=6
  $region2: #{tpu_custom_call.1} parent=0 // loop_pre_header
    _
  $region3: #{tpu_custom_call.1} parent=0 // loop_header
    %s27 = sphi 0, %s31
    %p28 = scmp.ge.s32.totalorder %s27, 6
    %s34 = sphi 0, %s53
    %s35 = sphi 0, %s49
    %s36 = sphi 0, %s45
    %s37 = sphi 0, %s34
    %s38 = sphi 0, %s35
    %s39 = sphi 0, %s36
    %s40 = sphi 0, %s37
    %s41 = sphi 0, %s38
    %s42 = sphi 0, %s39
    %s56 = sphi 0, %s58
    %s59 = sphi 0, %s56
    %s60 = sphi 0, %s59
    %s76 = sphi 0, %s60
    %s80 = sphi 0, %s80
    %s82 = sphi 0, %s80
    %s83 = sphi 0, %s82
    %s97 = sphi 0, %s83
    %s101 = sphi 0, %s101
    %s103 = sphi 0, %s101
    %s104 = sphi 0, %s103
    %s118 = sphi 0, %s104
    %s122 = sphi 0, %s122
    %s124 = sphi 0, %s122
    %s125 = sphi 0, %s124
    %s139 = sphi 0, %s125
    %s143 = sphi 0, %s143
    %s145 = sphi 0, %s143
    %s146 = sphi 0, %s145
    %s160 = sphi 0, %s146
    %s166 = sphi 0, %s168
    %s169 = sphi 0, %s166
    %s170 = sphi 0, %s169
    %s186 = sphi 0, %s170
    %s192 = sphi 0, %s194
    %s195 = sphi 0, %s192
    %s196 = sphi 0, %s195
    %s212 = sphi 0, %s196
    %s218 = sphi 0, %s220
    %s221 = sphi 0, %s218
    %s222 = sphi 0, %s221
    %s238 = sphi 0, %s222
    %s244 = sphi 0, %s246
    %s247 = sphi 0, %s244
    %s248 = sphi 0, %s247
    %s264 = sphi 0, %s248
    %s270 = sphi 0, %s272
    %s273 = sphi 0, %s270
    %s274 = sphi 0, %s273
    %s290 = sphi 0, %s274
    %s296 = sphi 0, %s298
    %s299 = sphi 0, %s296
    %s300 = sphi 0, %s299
    %s316 = sphi 0, %s300
    %s322 = sphi 0, %s324
    %s325 = sphi 0, %s322
    %s326 = sphi 0, %s325
    %s342 = sphi 0, %s326
    %s348 = sphi 0, %s350
    %s351 = sphi 0, %s348
    %s352 = sphi 0, %s351
    %s368 = sphi 0, %s352
    %s374 = sphi 0, %s376
    %s377 = sphi 0, %s374
    %s378 = sphi 0, %s377
    %s394 = sphi 0, %s378
    %s400 = sphi 0, %s402
    %s403 = sphi 0, %s400
    %s404 = sphi 0, %s403
    %s420 = sphi 0, %s404
    %s428 = sphi 0, %s430
    %s431 = sphi 0, %s428
    %s432 = sphi 0, %s431
    %s448 = sphi 0, %s432
    %s456 = sphi 0, %s458
    %s459 = sphi 0, %s456
    %s460 = sphi 0, %s459
    %s476 = sphi 0, %s460
    %s484 = sphi 0, %s486
    %s487 = sphi 0, %s484
    %s488 = sphi 0, %s487
    %s504 = sphi 0, %s488
    %s510 = sphi 0, %s512
    %s513 = sphi 0, %s510
    %s514 = sphi 0, %s513
    %s530 = sphi 0, %s514
    %s536 = sphi 0, %s538
    %s539 = sphi 0, %s536
    %s540 = sphi 0, %s539
    %s556 = sphi 0, %s540
    %s562 = sphi 0, %s564
    %s565 = sphi 0, %s562
    %s566 = sphi 0, %s565
    %s582 = sphi 0, %s566
    %s588 = sphi 0, %s590
    %s591 = sphi 0, %s588
    %s592 = sphi 0, %s591
    %s608 = sphi 0, %s592
  $region4: #{tpu_custom_call.1} parent=0 // loop_header_branch
    %30 = sbr.rel (%p28) target = $region8
  $region5: #{tpu_custom_call.1} parent=0 // loop_body
    %s32 = ssub.s32 %s27, 1
    %s33 = ssub.s32 %s27, 2
    %s43 = sadd.s32 1, %s36
    %p44 = scmp.ge.s32.totalorder %s43, 1
    %s45 = scalar_select %p44, 0, %s43
    %s46 = sadd.s32 1, %s35
    %s47 = scalar_select %p44, %s46, %s35
    %p48 = scmp.ge.s32.totalorder %s47, 2
    %s49 = scalar_select %p48, 0, %s47
    %s50 = sadd.s32 1, %s34
    %s51 = scalar_select %p48, %s50, %s34
    %p52 = scmp.ge.s32.totalorder %s51, 2
    %s53 = scalar_select %p52, 0, %s51
    %s54 = ssub.s32 %s34, %s53
    %p55 = scmp.eq.s32.totalorder %s54, 0
    %s57 = sadd.s32 %s56, 1
    %s58 = scalar_select %p55, %s56, %s57
    %p61 = pneg %p55
    %p62 = scmp.eq.s32.totalorder %s27, 3
    %p63 = por %p61, %p62
    %p64 = scmp.ne.s32.totalorder %s56, %s59
    %p65 = scmp.eq.s32.totalorder %s27, 0
    %p66 = por %p64, %p65
    %p67 = scmp.ne.s32.totalorder %s56, %s59
    %p68 = scmp.eq.s32.totalorder %s32, 3
    %p69 = por %p67, %p68
    %p70 = scmp.ne.s32.totalorder %s59, %s60
    %p71 = scmp.eq.s32.totalorder %s32, 0
    %p72 = por %p70, %p71
    %p73 = scmp.ne.s32.totalorder %s59, %s60
    %p74 = scmp.eq.s32.totalorder %s33, 3
    %p75 = por %p73, %p74
    %p77 = scmp.ne.s32.totalorder %s60, %s76
    %p78 = scmp.eq.s32.totalorder %s33, 0
    %p79 = por %p77, %p78
    %s81 = sadd.s32 %s80, 1
    %p84 = scmp.eq.s32.totalorder %s27, 3
    %p85 = scmp.ne.s32.totalorder %s80, %s82
    %p86 = scmp.eq.s32.totalorder %s27, 0
    %p87 = por %p85, %p86
    %p88 = scmp.ne.s32.totalorder %s80, %s82
    %p89 = scmp.eq.s32.totalorder %s32, 3
    %p90 = por %p88, %p89
    %p91 = scmp.ne.s32.totalorder %s82, %s83
    %p92 = scmp.eq.s32.totalorder %s32, 0
    %p93 = por %p91, %p92
    %p94 = scmp.ne.s32.totalorder %s82, %s83
    %p95 = scmp.eq.s32.totalorder %s33, 3
    %p96 = por %p94, %p95
    %p98 = scmp.ne.s32.totalorder %s83, %s97
    %p99 = scmp.eq.s32.totalorder %s33, 0
    %p100 = por %p98, %p99
    %s102 = sadd.s32 %s101, 1
    %p105 = scmp.eq.s32.totalorder %s27, 3
    %p106 = scmp.ne.s32.totalorder %s101, %s103
    %p107 = scmp.eq.s32.totalorder %s27, 0
    %p108 = por %p106, %p107
    %p109 = scmp.ne.s32.totalorder %s101, %s103
    %p110 = scmp.eq.s32.totalorder %s32, 3
    %p111 = por %p109, %p110
    %p112 = scmp.ne.s32.totalorder %s103, %s104
    %p113 = scmp.eq.s32.totalorder %s32, 0
    %p114 = por %p112, %p113
    %p115 = scmp.ne.s32.totalorder %s103, %s104
    %p116 = scmp.eq.s32.totalorder %s33, 3
    %p117 = por %p115, %p116
    %p119 = scmp.ne.s32.totalorder %s104, %s118
    %p120 = scmp.eq.s32.totalorder %s33, 0
    %p121 = por %p119, %p120
    %s123 = sadd.s32 %s122, 1
    %p126 = scmp.eq.s32.totalorder %s27, 3
    %p127 = scmp.ne.s32.totalorder %s122, %s124
    %p128 = scmp.eq.s32.totalorder %s27, 0
    %p129 = por %p127, %p128
    %p130 = scmp.ne.s32.totalorder %s122, %s124
    %p131 = scmp.eq.s32.totalorder %s32, 3
    %p132 = por %p130, %p131
    %p133 = scmp.ne.s32.totalorder %s124, %s125
    %p134 = scmp.eq.s32.totalorder %s32, 0
    %p135 = por %p133, %p134
    %p136 = scmp.ne.s32.totalorder %s124, %s125
    %p137 = scmp.eq.s32.totalorder %s33, 3
    %p138 = por %p136, %p137
    %p140 = scmp.ne.s32.totalorder %s125, %s139
    %p141 = scmp.eq.s32.totalorder %s33, 0
    %p142 = por %p140, %p141
    %s144 = sadd.s32 %s143, 1
    %p147 = scmp.eq.s32.totalorder %s27, 3
    %p148 = scmp.ne.s32.totalorder %s143, %s145
    %p149 = scmp.eq.s32.totalorder %s27, 0
    %p150 = por %p148, %p149
    %p151 = scmp.ne.s32.totalorder %s143, %s145
    %p152 = scmp.eq.s32.totalorder %s32, 3
    %p153 = por %p151, %p152
    %p154 = scmp.ne.s32.totalorder %s145, %s146
    %p155 = scmp.eq.s32.totalorder %s32, 0
    %p156 = por %p154, %p155
    %p157 = scmp.ne.s32.totalorder %s145, %s146
    %p158 = scmp.eq.s32.totalorder %s33, 3
    %p159 = por %p157, %p158
    %p161 = scmp.ne.s32.totalorder %s146, %s160
    %p162 = scmp.eq.s32.totalorder %s33, 0
    %p163 = por %p161, %p162
    %s164 = ssub.s32 %s35, %s49
    %p165 = scmp.eq.s32.totalorder %s164, 0
    %s167 = sadd.s32 %s166, 1
    %s168 = scalar_select %p165, %s166, %s167
    %p171 = pneg %p165
    %p172 = scmp.eq.s32.totalorder %s27, 3
    %p173 = por %p171, %p172
    %p174 = scmp.ne.s32.totalorder %s166, %s169
    %p175 = scmp.eq.s32.totalorder %s27, 0
    %p176 = por %p174, %p175
    %p177 = scmp.ne.s32.totalorder %s166, %s169
    %p178 = scmp.eq.s32.totalorder %s32, 3
    %p179 = por %p177, %p178
    %p180 = scmp.ne.s32.totalorder %s169, %s170
    %p181 = scmp.eq.s32.totalorder %s32, 0
    %p182 = por %p180, %p181
    %p183 = scmp.ne.s32.totalorder %s169, %s170
    %p184 = scmp.eq.s32.totalorder %s33, 3
    %p185 = por %p183, %p184
    %p187 = scmp.ne.s32.totalorder %s170, %s186
    %p188 = scmp.eq.s32.totalorder %s33, 0
    %p189 = por %p187, %p188
    %s190 = ssub.s32 %s35, %s49
    %p191 = scmp.eq.s32.totalorder %s190, 0
    %s193 = sadd.s32 %s192, 1
    %s194 = scalar_select %p191, %s192, %s193
    %p197 = pneg %p191
    %p198 = scmp.eq.s32.totalorder %s27, 3
    %p199 = por %p197, %p198
    %p200 = scmp.ne.s32.totalorder %s192, %s195
    %p201 = scmp.eq.s32.totalorder %s27, 0
    %p202 = por %p200, %p201
    %p203 = scmp.ne.s32.totalorder %s192, %s195
    %p204 = scmp.eq.s32.totalorder %s32, 3
    %p205 = por %p203, %p204
    %p206 = scmp.ne.s32.totalorder %s195, %s196
    %p207 = scmp.eq.s32.totalorder %s32, 0
    %p208 = por %p206, %p207
    %p209 = scmp.ne.s32.totalorder %s195, %s196
    %p210 = scmp.eq.s32.totalorder %s33, 3
    %p211 = por %p209, %p210
    %p213 = scmp.ne.s32.totalorder %s196, %s212
    %p214 = scmp.eq.s32.totalorder %s33, 0
    %p215 = por %p213, %p214
    %s216 = ssub.s32 %s35, %s49
    %p217 = scmp.eq.s32.totalorder %s216, 0
    %s219 = sadd.s32 %s218, 1
    %s220 = scalar_select %p217, %s218, %s219
    %p223 = pneg %p217
    %p224 = scmp.eq.s32.totalorder %s27, 3
    %p225 = por %p223, %p224
    %p226 = scmp.ne.s32.totalorder %s218, %s221
    %p227 = scmp.eq.s32.totalorder %s27, 0
    %p228 = por %p226, %p227
    %p229 = scmp.ne.s32.totalorder %s218, %s221
    %p230 = scmp.eq.s32.totalorder %s32, 3
    %p231 = por %p229, %p230
    %p232 = scmp.ne.s32.totalorder %s221, %s222
    %p233 = scmp.eq.s32.totalorder %s32, 0
    %p234 = por %p232, %p233
    %p235 = scmp.ne.s32.totalorder %s221, %s222
    %p236 = scmp.eq.s32.totalorder %s33, 3
    %p237 = por %p235, %p236
    %p239 = scmp.ne.s32.totalorder %s222, %s238
    %p240 = scmp.eq.s32.totalorder %s33, 0
    %p241 = por %p239, %p240
    %s242 = ssub.s32 %s35, %s49
    %p243 = scmp.eq.s32.totalorder %s242, 0
    %s245 = sadd.s32 %s244, 1
    %s246 = scalar_select %p243, %s244, %s245
    %p249 = pneg %p243
    %p250 = scmp.eq.s32.totalorder %s27, 3
    %p251 = por %p249, %p250
    %p252 = scmp.ne.s32.totalorder %s244, %s247
    %p253 = scmp.eq.s32.totalorder %s27, 0
    %p254 = por %p252, %p253
    %p255 = scmp.ne.s32.totalorder %s244, %s247
    %p256 = scmp.eq.s32.totalorder %s32, 3
    %p257 = por %p255, %p256
    %p258 = scmp.ne.s32.totalorder %s247, %s248
    %p259 = scmp.eq.s32.totalorder %s32, 0
    %p260 = por %p258, %p259
    %p261 = scmp.ne.s32.totalorder %s247, %s248
    %p262 = scmp.eq.s32.totalorder %s33, 3
    %p263 = por %p261, %p262
    %p265 = scmp.ne.s32.totalorder %s248, %s264
    %p266 = scmp.eq.s32.totalorder %s33, 0
    %p267 = por %p265, %p266
    %s268 = ssub.s32 %s35, %s49
    %p269 = scmp.eq.s32.totalorder %s268, 0
    %s271 = sadd.s32 %s270, 1
    %s272 = scalar_select %p269, %s270, %s271
    %p275 = pneg %p269
    %p276 = scmp.eq.s32.totalorder %s27, 3
    %p277 = por %p275, %p276
    %p278 = scmp.ne.s32.totalorder %s270, %s273
    %p279 = scmp.eq.s32.totalorder %s27, 0
    %p280 = por %p278, %p279
    %p281 = scmp.ne.s32.totalorder %s270, %s273
    %p282 = scmp.eq.s32.totalorder %s32, 3
    %p283 = por %p281, %p282
    %p284 = scmp.ne.s32.totalorder %s273, %s274
    %p285 = scmp.eq.s32.totalorder %s32, 0
    %p286 = por %p284, %p285
    %p287 = scmp.ne.s32.totalorder %s273, %s274
    %p288 = scmp.eq.s32.totalorder %s33, 3
    %p289 = por %p287, %p288
    %p291 = scmp.ne.s32.totalorder %s274, %s290
    %p292 = scmp.eq.s32.totalorder %s33, 0
    %p293 = por %p291, %p292
    %s294 = ssub.s32 %s35, %s49
    %p295 = scmp.eq.s32.totalorder %s294, 0
    %s297 = sadd.s32 %s296, 1
    %s298 = scalar_select %p295, %s296, %s297
    %p301 = pneg %p295
    %p302 = scmp.eq.s32.totalorder %s27, 3
    %p303 = por %p301, %p302
    %p304 = scmp.ne.s32.totalorder %s296, %s299
    %p305 = scmp.eq.s32.totalorder %s27, 0
    %p306 = por %p304, %p305
    %p307 = scmp.ne.s32.totalorder %s296, %s299
    %p308 = scmp.eq.s32.totalorder %s32, 3
    %p309 = por %p307, %p308
    %p310 = scmp.ne.s32.totalorder %s299, %s300
    %p311 = scmp.eq.s32.totalorder %s32, 0
    %p312 = por %p310, %p311
    %p313 = scmp.ne.s32.totalorder %s299, %s300
    %p314 = scmp.eq.s32.totalorder %s33, 3
    %p315 = por %p313, %p314
    %p317 = scmp.ne.s32.totalorder %s300, %s316
    %p318 = scmp.eq.s32.totalorder %s33, 0
    %p319 = por %p317, %p318
    %s320 = ssub.s32 %s35, %s49
    %p321 = scmp.eq.s32.totalorder %s320, 0
    %s323 = sadd.s32 %s322, 1
    %s324 = scalar_select %p321, %s322, %s323
    %p327 = pneg %p321
    %p328 = scmp.eq.s32.totalorder %s27, 3
    %p329 = por %p327, %p328
    %p330 = scmp.ne.s32.totalorder %s322, %s325
    %p331 = scmp.eq.s32.totalorder %s27, 0
    %p332 = por %p330, %p331
    %p333 = scmp.ne.s32.totalorder %s322, %s325
    %p334 = scmp.eq.s32.totalorder %s32, 3
    %p335 = por %p333, %p334
    %p336 = scmp.ne.s32.totalorder %s325, %s326
    %p337 = scmp.eq.s32.totalorder %s32, 0
    %p338 = por %p336, %p337
    %p339 = scmp.ne.s32.totalorder %s325, %s326
    %p340 = scmp.eq.s32.totalorder %s33, 3
    %p341 = por %p339, %p340
    %p343 = scmp.ne.s32.totalorder %s326, %s342
    %p344 = scmp.eq.s32.totalorder %s33, 0
    %p345 = por %p343, %p344
    %s346 = ssub.s32 %s35, %s49
    %p347 = scmp.eq.s32.totalorder %s346, 0
    %s349 = sadd.s32 %s348, 1
    %s350 = scalar_select %p347, %s348, %s349
    %p353 = pneg %p347
    %p354 = scmp.eq.s32.totalorder %s27, 3
    %p355 = por %p353, %p354
    %p356 = scmp.ne.s32.totalorder %s348, %s351
    %p357 = scmp.eq.s32.totalorder %s27, 0
    %p358 = por %p356, %p357
    %p359 = scmp.ne.s32.totalorder %s348, %s351
    %p360 = scmp.eq.s32.totalorder %s32, 3
    %p361 = por %p359, %p360
    %p362 = scmp.ne.s32.totalorder %s351, %s352
    %p363 = scmp.eq.s32.totalorder %s32, 0
    %p364 = por %p362, %p363
    %p365 = scmp.ne.s32.totalorder %s351, %s352
    %p366 = scmp.eq.s32.totalorder %s33, 3
    %p367 = por %p365, %p366
    %p369 = scmp.ne.s32.totalorder %s352, %s368
    %p370 = scmp.eq.s32.totalorder %s33, 0
    %p371 = por %p369, %p370
    %s372 = ssub.s32 %s35, %s49
    %p373 = scmp.eq.s32.totalorder %s372, 0
    %s375 = sadd.s32 %s374, 1
    %s376 = scalar_select %p373, %s374, %s375
    %p379 = pneg %p373
    %p380 = scmp.eq.s32.totalorder %s27, 3
    %p381 = por %p379, %p380
    %p382 = scmp.ne.s32.totalorder %s374, %s377
    %p383 = scmp.eq.s32.totalorder %s27, 0
    %p384 = por %p382, %p383
    %p385 = scmp.ne.s32.totalorder %s374, %s377
    %p386 = scmp.eq.s32.totalorder %s32, 3
    %p387 = por %p385, %p386
    %p388 = scmp.ne.s32.totalorder %s377, %s378
    %p389 = scmp.eq.s32.totalorder %s32, 0
    %p390 = por %p388, %p389
    %p391 = scmp.ne.s32.totalorder %s377, %s378
    %p392 = scmp.eq.s32.totalorder %s33, 3
    %p393 = por %p391, %p392
    %p395 = scmp.ne.s32.totalorder %s378, %s394
    %p396 = scmp.eq.s32.totalorder %s33, 0
    %p397 = por %p395, %p396
    %s398 = ssub.s32 %s35, %s49
    %p399 = scmp.eq.s32.totalorder %s398, 0
    %s401 = sadd.s32 %s400, 1
    %s402 = scalar_select %p399, %s400, %s401
    %p405 = pneg %p399
    %p406 = scmp.eq.s32.totalorder %s27, 3
    %p407 = por %p405, %p406
    %p408 = scmp.ne.s32.totalorder %s400, %s403
    %p409 = scmp.eq.s32.totalorder %s27, 0
    %p410 = por %p408, %p409
    %p411 = scmp.ne.s32.totalorder %s400, %s403
    %p412 = scmp.eq.s32.totalorder %s32, 3
    %p413 = por %p411, %p412
    %p414 = scmp.ne.s32.totalorder %s403, %s404
    %p415 = scmp.eq.s32.totalorder %s32, 0
    %p416 = por %p414, %p415
    %p417 = scmp.ne.s32.totalorder %s403, %s404
    %p418 = scmp.eq.s32.totalorder %s33, 3
    %p419 = por %p417, %p418
    %p421 = scmp.ne.s32.totalorder %s404, %s420
    %p422 = scmp.eq.s32.totalorder %s33, 0
    %p423 = por %p421, %p422
    %s424 = ssub.s32 %s35, %s49
    %s425 = ssub.s32 %s36, %s45
    %s426 = sor.u32 %s424, %s425
    %p427 = scmp.eq.s32.totalorder %s426, 0
    %s429 = sadd.s32 %s428, 1
    %s430 = scalar_select %p427, %s428, %s429
    %p433 = pneg %p427
    %p434 = scmp.eq.s32.totalorder %s27, 3
    %p435 = por %p433, %p434
    %p436 = scmp.ne.s32.totalorder %s428, %s431
    %p437 = scmp.eq.s32.totalorder %s27, 0
    %p438 = por %p436, %p437
    %p439 = scmp.ne.s32.totalorder %s428, %s431
    %p440 = scmp.eq.s32.totalorder %s32, 3
    %p441 = por %p439, %p440
    %p442 = scmp.ne.s32.totalorder %s431, %s432
    %p443 = scmp.eq.s32.totalorder %s32, 0
    %p444 = por %p442, %p443
    %p445 = scmp.ne.s32.totalorder %s431, %s432
    %p446 = scmp.eq.s32.totalorder %s33, 3
    %p447 = por %p445, %p446
    %p449 = scmp.ne.s32.totalorder %s432, %s448
    %p450 = scmp.eq.s32.totalorder %s33, 0
    %p451 = por %p449, %p450
    %s452 = ssub.s32 %s35, %s49
    %s453 = ssub.s32 %s36, %s45
    %s454 = sor.u32 %s452, %s453
    %p455 = scmp.eq.s32.totalorder %s454, 0
    %s457 = sadd.s32 %s456, 1
    %s458 = scalar_select %p455, %s456, %s457
    %p461 = pneg %p455
    %p462 = scmp.eq.s32.totalorder %s27, 3
    %p463 = por %p461, %p462
    %p464 = scmp.ne.s32.totalorder %s456, %s459
    %p465 = scmp.eq.s32.totalorder %s27, 0
    %p466 = por %p464, %p465
    %p467 = scmp.ne.s32.totalorder %s456, %s459
    %p468 = scmp.eq.s32.totalorder %s32, 3
    %p469 = por %p467, %p468
    %p470 = scmp.ne.s32.totalorder %s459, %s460
    %p471 = scmp.eq.s32.totalorder %s32, 0
    %p472 = por %p470, %p471
    %p473 = scmp.ne.s32.totalorder %s459, %s460
    %p474 = scmp.eq.s32.totalorder %s33, 3
    %p475 = por %p473, %p474
    %p477 = scmp.ne.s32.totalorder %s460, %s476
    %p478 = scmp.eq.s32.totalorder %s33, 0
    %p479 = por %p477, %p478
    %s480 = ssub.s32 %s35, %s49
    %s481 = ssub.s32 %s36, %s45
    %s482 = sor.u32 %s480, %s481
    %p483 = scmp.eq.s32.totalorder %s482, 0
    %s485 = sadd.s32 %s484, 1
    %s486 = scalar_select %p483, %s484, %s485
    %p489 = pneg %p483
    %p490 = scmp.eq.s32.totalorder %s27, 3
    %p491 = por %p489, %p490
    %p492 = scmp.ne.s32.totalorder %s484, %s487
    %p493 = scmp.eq.s32.totalorder %s27, 0
    %p494 = por %p492, %p493
    %p495 = scmp.ne.s32.totalorder %s484, %s487
    %p496 = scmp.eq.s32.totalorder %s32, 3
    %p497 = por %p495, %p496
    %p498 = scmp.ne.s32.totalorder %s487, %s488
    %p499 = scmp.eq.s32.totalorder %s32, 0
    %p500 = por %p498, %p499
    %p501 = scmp.ne.s32.totalorder %s487, %s488
    %p502 = scmp.eq.s32.totalorder %s33, 3
    %p503 = por %p501, %p502
    %p505 = scmp.ne.s32.totalorder %s488, %s504
    %p506 = scmp.eq.s32.totalorder %s33, 0
    %p507 = por %p505, %p506
    %s508 = ssub.s32 %s35, %s49
    %p509 = scmp.eq.s32.totalorder %s508, 0
    %s511 = sadd.s32 %s510, 1
    %s512 = scalar_select %p509, %s510, %s511
    %p515 = pneg %p509
    %p516 = scmp.eq.s32.totalorder %s27, 3
    %p517 = por %p515, %p516
    %p518 = scmp.ne.s32.totalorder %s510, %s513
    %p519 = scmp.eq.s32.totalorder %s27, 0
    %p520 = por %p518, %p519
    %p521 = scmp.ne.s32.totalorder %s510, %s513
    %p522 = scmp.eq.s32.totalorder %s32, 3
    %p523 = por %p521, %p522
    %p524 = scmp.ne.s32.totalorder %s513, %s514
    %p525 = scmp.eq.s32.totalorder %s32, 0
    %p526 = por %p524, %p525
    %p527 = scmp.ne.s32.totalorder %s513, %s514
    %p528 = scmp.eq.s32.totalorder %s33, 3
    %p529 = por %p527, %p528
    %p531 = scmp.ne.s32.totalorder %s514, %s530
    %p532 = scmp.eq.s32.totalorder %s33, 0
    %p533 = por %p531, %p532
    %s534 = ssub.s32 %s35, %s49
    %p535 = scmp.eq.s32.totalorder %s534, 0
    %s537 = sadd.s32 %s536, 1
    %s538 = scalar_select %p535, %s536, %s537
    %p541 = pneg %p535
    %p542 = scmp.eq.s32.totalorder %s27, 3
    %p543 = por %p541, %p542
    %p544 = scmp.ne.s32.totalorder %s536, %s539
    %p545 = scmp.eq.s32.totalorder %s27, 0
    %p546 = por %p544, %p545
    %p547 = scmp.ne.s32.totalorder %s536, %s539
    %p548 = scmp.eq.s32.totalorder %s32, 3
    %p549 = por %p547, %p548
    %p550 = scmp.ne.s32.totalorder %s539, %s540
    %p551 = scmp.eq.s32.totalorder %s32, 0
    %p552 = por %p550, %p551
    %p553 = scmp.ne.s32.totalorder %s539, %s540
    %p554 = scmp.eq.s32.totalorder %s33, 3
    %p555 = por %p553, %p554
    %p557 = scmp.ne.s32.totalorder %s540, %s556
    %p558 = scmp.eq.s32.totalorder %s33, 0
    %p559 = por %p557, %p558
    %s560 = ssub.s32 %s35, %s49
    %p561 = scmp.eq.s32.totalorder %s560, 0
    %s563 = sadd.s32 %s562, 1
    %s564 = scalar_select %p561, %s562, %s563
    %p567 = pneg %p561
    %p568 = scmp.eq.s32.totalorder %s27, 3
    %p569 = por %p567, %p568
    %p570 = scmp.ne.s32.totalorder %s562, %s565
    %p571 = scmp.eq.s32.totalorder %s27, 0
    %p572 = por %p570, %p571
    %p573 = scmp.ne.s32.totalorder %s562, %s565
    %p574 = scmp.eq.s32.totalorder %s32, 3
    %p575 = por %p573, %p574
    %p576 = scmp.ne.s32.totalorder %s565, %s566
    %p577 = scmp.eq.s32.totalorder %s32, 0
    %p578 = por %p576, %p577
    %p579 = scmp.ne.s32.totalorder %s565, %s566
    %p580 = scmp.eq.s32.totalorder %s33, 3
    %p581 = por %p579, %p580
    %p583 = scmp.ne.s32.totalorder %s566, %s582
    %p584 = scmp.eq.s32.totalorder %s33, 0
    %p585 = por %p583, %p584
    %s586 = ssub.s32 %s34, %s53
    %p587 = scmp.eq.s32.totalorder %s586, 0
    %s589 = sadd.s32 %s588, 1
    %s590 = scalar_select %p587, %s588, %s589
    %p593 = pneg %p587
    %p594 = scmp.eq.s32.totalorder %s27, 3
    %p595 = por %p593, %p594
    %p596 = scmp.ne.s32.totalorder %s588, %s591
    %p597 = scmp.eq.s32.totalorder %s27, 0
    %p598 = por %p596, %p597
    %p599 = scmp.ne.s32.totalorder %s588, %s591
    %p600 = scmp.eq.s32.totalorder %s32, 3
    %p601 = por %p599, %p600
    %p602 = scmp.ne.s32.totalorder %s591, %s592
    %p603 = scmp.eq.s32.totalorder %s32, 0
    %p604 = por %p602, %p603
    %p605 = scmp.ne.s32.totalorder %s591, %s592
    %p606 = scmp.eq.s32.totalorder %s33, 3
    %p607 = por %p605, %p606
    %p609 = scmp.ne.s32.totalorder %s592, %s608
    %p610 = scmp.eq.s32.totalorder %s33, 0
    %p611 = por %p609, %p610
    %p612 = scmp.le.s32.totalorder 1, %s27
    %p613 = scmp.lt.s32.totalorder %s27, 5
    %p614 = pnand %p612, %p613
    %p615 = pneg %p614
    // Predicated region
    $region9: #{tpu_custom_call.1} parent=5 // pred_check
      _
    $region10: #{tpu_custom_call.1} parent=5 // pred_check_branch
      %617 = sbr.rel (%p614) target = $region12
    $region11: #{tpu_custom_call.1} parent=5 // pred_region
      %s618 = ssub.s32 %s27, 1
      // Predicated region
      $region13: #{tpu_custom_call.1} parent=11 // pred_check
        %p619 = pneg %p93
      $region14: #{tpu_custom_call.1} parent=11 // pred_check_branch
        %621 = sbr.rel (%p619) target = $region16
      $region15: #{tpu_custom_call.1} parent=11 // pred_region
        _
      $region16: #{tpu_custom_call.1} parent=11 // pred_fallthru
        _
      // Predicated region
      $region17: #{tpu_custom_call.1} parent=11 // pred_check
        %p622 = pneg %p114
      $region18: #{tpu_custom_call.1} parent=11 // pred_check_branch
        %624 = sbr.rel (%p622) target = $region20
      $region19: #{tpu_custom_call.1} parent=11 // pred_region
        _
      $region20: #{tpu_custom_call.1} parent=11 // pred_fallthru
        _
      // Predicated region
      $region21: #{tpu_custom_call.1} parent=11 // pred_check
        %p625 = pneg %p135
      $region22: #{tpu_custom_call.1} parent=11 // pred_check_branch
        %627 = sbr.rel (%p625) target = $region24
      $region23: #{tpu_custom_call.1} parent=11 // pred_region
        _
      $region24: #{tpu_custom_call.1} parent=11 // pred_fallthru
        _
      // Predicated region
      $region25: #{tpu_custom_call.1} parent=11 // pred_check
        %p628 = pneg %p156
      $region26: #{tpu_custom_call.1} parent=11 // pred_check_branch
        %630 = sbr.rel (%p628) target = $region28
      $region27: #{tpu_custom_call.1} parent=11 // pred_region
        _
      $region28: #{tpu_custom_call.1} parent=11 // pred_fallthru
        _
    $region12: #{tpu_custom_call.1} parent=5 // pred_fallthru
      _
    %p631 = scmp.lt.s32.totalorder %s27, 4
    // Predicated region
    $region29: #{tpu_custom_call.1} parent=5 // pred_check
      %p632 = pneg %p631
    $region30: #{tpu_custom_call.1} parent=5 // pred_check_branch
      %634 = sbr.rel (%p632) target = $region32
    $region31: #{tpu_custom_call.1} parent=5 // pred_region
      // Predicated region
      $region33: #{tpu_custom_call.1} parent=31 // pred_check
        %p635 = pneg %p66
      $region34: #{tpu_custom_call.1} parent=31 // pred_check_branch
        %637 = sbr.rel (%p635) target = $region36
      $region35: #{tpu_custom_call.1} parent=31 // pred_region
        %s638 = smul.u32 2, %s34
        %p639 = scmp.lt.s32.totalorder %s638, 3
        %s640 = scalar_select %p639, %s638, 3
        %s641 = smul.addr %s640, 2
        %s642 = smul.addr %s641, 8
        %s643 = scalar_lea.vmem %s0, %s642
        %s644 = smul.u32 2, %s34
      $region36: #{tpu_custom_call.1} parent=31 // pred_fallthru
        _
      // Predicated region
      $region37: #{tpu_custom_call.1} parent=31 // pred_check
        %p645 = pneg %p176
      $region38: #{tpu_custom_call.1} parent=31 // pred_check_branch
        %647 = sbr.rel (%p645) target = $region40
      $region39: #{tpu_custom_call.1} parent=31 // pred_region
        %p648 = scmp.lt.s32.totalorder %s35, 1
        %s649 = scalar_select %p648, %s35, 1
        %s650 = smul.addr %s649, 4
        %s651 = smul.addr %s650, 8
        %s652 = scalar_lea.vmem %s5, %s651
      $region40: #{tpu_custom_call.1} parent=31 // pred_fallthru
        _
      // Predicated region
      $region41: #{tpu_custom_call.1} parent=31 // pred_check
        %p653 = pneg %p202
      $region42: #{tpu_custom_call.1} parent=31 // pred_check_branch
        %655 = sbr.rel (%p653) target = $region44
      $region43: #{tpu_custom_call.1} parent=31 // pred_region
        %p656 = scmp.lt.s32.totalorder %s35, 1
        %s657 = scalar_select %p656, %s35, 1
        %s658 = scalar_lea.vmem %s6, %s657
      $region44: #{tpu_custom_call.1} parent=31 // pred_fallthru
        _
      // Predicated region
      $region45: #{tpu_custom_call.1} parent=31 // pred_check
        %p659 = pneg %p228
      $region46: #{tpu_custom_call.1} parent=31 // pred_check_branch
        %661 = sbr.rel (%p659) target = $region48
      $region47: #{tpu_custom_call.1} parent=31 // pred_region
        %p662 = scmp.lt.s32.totalorder %s35, 1
        %s663 = scalar_select %p662, %s35, 1
        %s664 = smul.addr %s663, 4
        %s665 = smul.addr %s664, 8
        %s666 = scalar_lea.vmem %s7, %s665
      $region48: #{tpu_custom_call.1} parent=31 // pred_fallthru
        _
      // Predicated region
      $region49: #{tpu_custom_call.1} parent=31 // pred_check
        %p667 = pneg %p254
      $region50: #{tpu_custom_call.1} parent=31 // pred_check_branch
        %669 = sbr.rel (%p667) target = $region52
      $region51: #{tpu_custom_call.1} parent=31 // pred_region
        %p670 = scmp.lt.s32.totalorder %s35, 1
        %s671 = scalar_select %p670, %s35, 1
        %s672 = scalar_lea.vmem %s8, %s671
      $region52: #{tpu_custom_call.1} parent=31 // pred_fallthru
        _
      // Predicated region
      $region53: #{tpu_custom_call.1} parent=31 // pred_check
        %p673 = pneg %p280
      $region54: #{tpu_custom_call.1} parent=31 // pred_check_branch
        %675 = sbr.rel (%p673) target = $region56
      $region55: #{tpu_custom_call.1} parent=31 // pred_region
        %p676 = scmp.lt.s32.totalorder %s35, 1
        %s677 = scalar_select %p676, %s35, 1
        %s678 = smul.addr %s677, 4
        %s679 = smul.addr %s678, 8
        %s680 = scalar_lea.vmem %s9, %s679
      $region56: #{tpu_custom_call.1} parent=31 // pred_fallthru
        _
      // Predicated region
      $region57: #{tpu_custom_call.1} parent=31 // pred_check
        %p681 = pneg %p306
      $region58: #{tpu_custom_call.1} parent=31 // pred_check_branch
        %683 = sbr.rel (%p681) target = $region60
      $region59: #{tpu_custom_call.1} parent=31 // pred_region
        %p684 = scmp.lt.s32.totalorder %s35, 1
        %s685 = scalar_select %p684, %s35, 1
        %s686 = scalar_lea.vmem %s10, %s685
      $region60: #{tpu_custom_call.1} parent=31 // pred_fallthru
        _
      // Predicated region
      $region61: #{tpu_custom_call.1} parent=31 // pred_check
        %p687 = pneg %p332
      $region62: #{tpu_custom_call.1} parent=31 // pred_check_branch
        %689 = sbr.rel (%p687) target = $region64
      $region63: #{tpu_custom_call.1} parent=31 // pred_region
        %p690 = scmp.lt.s32.totalorder %s35, 1
        %s691 = scalar_select %p690, %s35, 1
        %s692 = smul.addr %s691, 4
        %s693 = smul.addr %s692, 8
        %s694 = scalar_lea.vmem %s11, %s693
      $region64: #{tpu_custom_call.1} parent=31 // pred_fallthru
        _
      // Predicated region
      $region65: #{tpu_custom_call.1} parent=31 // pred_check
        %p695 = pneg %p358
      $region66: #{tpu_custom_call.1} parent=31 // pred_check_branch
        %697 = sbr.rel (%p695) target = $region68
      $region67: #{tpu_custom_call.1} parent=31 // pred_region
        %p698 = scmp.lt.s32.totalorder %s35, 1
        %s699 = scalar_select %p698, %s35, 1
        %s700 = scalar_lea.vmem %s12, %s699
      $region68: #{tpu_custom_call.1} parent=31 // pred_fallthru
        _
      // Predicated region
      $region69: #{tpu_custom_call.1} parent=31 // pred_check
        %p701 = pneg %p384
      $region70: #{tpu_custom_call.1} parent=31 // pred_check_branch
        %703 = sbr.rel (%p701) target = $region72
      $region71: #{tpu_custom_call.1} parent=31 // pred_region
        %p704 = scmp.lt.s32.totalorder %s35, 1
        %s705 = scalar_select %p704, %s35, 1
        %s706 = scalar_lea.vmem %s13, %s705
      $region72: #{tpu_custom_call.1} parent=31 // pred_fallthru
        _
      // Predicated region
      $region73: #{tpu_custom_call.1} parent=31 // pred_check
        %p707 = pneg %p410
      $region74: #{tpu_custom_call.1} parent=31 // pred_check_branch
        %709 = sbr.rel (%p707) target = $region76
      $region75: #{tpu_custom_call.1} parent=31 // pred_region
        %p710 = scmp.lt.s32.totalorder %s35, 1
        %s711 = scalar_select %p710, %s35, 1
        %s712 = scalar_lea.vmem %s14, %s711
      $region76: #{tpu_custom_call.1} parent=31 // pred_fallthru
        _
      // Predicated region
      $region77: #{tpu_custom_call.1} parent=31 // pred_check
        %p713 = pneg %p438
      $region78: #{tpu_custom_call.1} parent=31 // pred_check_branch
        %715 = sbr.rel (%p713) target = $region80
      $region79: #{tpu_custom_call.1} parent=31 // pred_region
        %p716 = scmp.lt.s32.totalorder %s35, 1
        %s717 = scalar_select %p716, %s35, 1
        %p718 = scmp.lt.s32.totalorder %s36, 0
        %s719 = scalar_select %p718, %s36, 0
        %s720 = smul.addr %s717, 4
        %s721 = sadd.s32 %s719, %s720
        %s722 = smul.addr %s721, 8
        %s723 = scalar_lea.vmem %s15, %s722
      $region80: #{tpu_custom_call.1} parent=31 // pred_fallthru
        _
      // Predicated region
      $region81: #{tpu_custom_call.1} parent=31 // pred_check
        %p724 = pneg %p466
      $region82: #{tpu_custom_call.1} parent=31 // pred_check_branch
        %726 = sbr.rel (%p724) target = $region84
      $region83: #{tpu_custom_call.1} parent=31 // pred_region
        %p727 = scmp.lt.s32.totalorder %s35, 1
        %s728 = scalar_select %p727, %s35, 1
        %p729 = scmp.lt.s32.totalorder %s36, 0
        %s730 = scalar_select %p729, %s36, 0
        %s731 = sadd.s32 %s730, %s728
        %s732 = scalar_lea.vmem %s16, %s731
      $region84: #{tpu_custom_call.1} parent=31 // pred_fallthru
        _
      // Predicated region
      $region85: #{tpu_custom_call.1} parent=31 // pred_check
        %p733 = pneg %p494
      $region86: #{tpu_custom_call.1} parent=31 // pred_check_branch
        %735 = sbr.rel (%p733) target = $region88
      $region87: #{tpu_custom_call.1} parent=31 // pred_region
        %s736 = smul.u32 8, %s36
        %p737 = scmp.lt.s32.totalorder %s35, 1
        %s738 = scalar_select %p737, %s35, 1
        %p739 = scmp.lt.s32.totalorder %s736, 7
        %s740 = scalar_select %p739, %s736, 7
        %s741 = smul.addr %s738, 8
        %s742 = sadd.s32 %s740, %s741
        %s743 = smul.addr %s742, 8
        %s744 = scalar_lea.vmem %s17, %s743
        %s745 = smul.u32 8, %s36
      $region88: #{tpu_custom_call.1} parent=31 // pred_fallthru
        _
      // Predicated region
      $region89: #{tpu_custom_call.1} parent=31 // pred_check
        %p746 = pneg %p520
      $region90: #{tpu_custom_call.1} parent=31 // pred_check_branch
        %748 = sbr.rel (%p746) target = $region92
      $region91: #{tpu_custom_call.1} parent=31 // pred_region
        %p749 = scmp.lt.s32.totalorder %s35, 1
        %s750 = scalar_select %p749, %s35, 1
        %s751 = scalar_lea.vmem %s18, %s750
      $region92: #{tpu_custom_call.1} parent=31 // pred_fallthru
        _
      // Predicated region
      $region93: #{tpu_custom_call.1} parent=31 // pred_check
        %p752 = pneg %p546
      $region94: #{tpu_custom_call.1} parent=31 // pred_check_branch
        %754 = sbr.rel (%p752) target = $region96
      $region95: #{tpu_custom_call.1} parent=31 // pred_region
        %p755 = scmp.lt.s32.totalorder %s35, 1
        %s756 = scalar_select %p755, %s35, 1
        %s757 = scalar_lea.vmem %s19, %s756
      $region96: #{tpu_custom_call.1} parent=31 // pred_fallthru
        _
      // Predicated region
      $region97: #{tpu_custom_call.1} parent=31 // pred_check
        %p758 = pneg %p572
      $region98: #{tpu_custom_call.1} parent=31 // pred_check_branch
        %760 = sbr.rel (%p758) target = $region100
      $region99: #{tpu_custom_call.1} parent=31 // pred_region
        %p761 = scmp.lt.s32.totalorder %s35, 1
        %s762 = scalar_select %p761, %s35, 1
        %s763 = scalar_lea.vmem %s20, %s762
      $region100: #{tpu_custom_call.1} parent=31 // pred_fallthru
        _
    $region32: #{tpu_custom_call.1} parent=5 // pred_fallthru
      _
    %p764 = scmp.le.s32.totalorder 1, %s27
    %p765 = scmp.lt.s32.totalorder %s27, 5
    %p766 = pnand %p764, %p765
    %p767 = pneg %p766
    // Predicated region
    $region101: #{tpu_custom_call.1} parent=5 // pred_check
      _
    $region102: #{tpu_custom_call.1} parent=5 // pred_check_branch
      %769 = sbr.rel (%p766) target = $region104
    $region103: #{tpu_custom_call.1} parent=5 // pred_region
      %s770 = ssub.s32 %s27, 1
      %s771 = smul.u32 2, %s37
      %p772 = scmp.lt.s32.totalorder %s771, 3
      %s773 = scalar_select %p772, %s771, 3
      %s774 = smul.addr %s773, 2
      %s775 = smul.addr %s774, 8
      %s776 = scalar_lea.vmem %s0, %s775
      %p777 = pneg %p72
      %p778 = pneg %p69
      %p779 = pneg %p93
      %p780 = pneg %p90
      %p781 = pneg %p114
      %p782 = pneg %p111
      %p783 = pneg %p135
      %p784 = pneg %p132
      %p785 = pneg %p156
      %p786 = pneg %p153
      %p787 = scmp.lt.s32.totalorder %s38, 1
      %s788 = scalar_select %p787, %s38, 1
      %s789 = smul.addr %s788, 4
      %s790 = smul.addr %s789, 8
      %s791 = scalar_lea.vmem %s5, %s790
      %p792 = pneg %p182
      %p793 = pneg %p179
      %p794 = scmp.lt.s32.totalorder %s38, 1
      %s795 = scalar_select %p794, %s38, 1
      %s796 = scalar_lea.vmem %s6, %s795
      %p797 = pneg %p208
      %p798 = pneg %p205
      %p799 = scmp.lt.s32.totalorder %s38, 1
      %s800 = scalar_select %p799, %s38, 1
      %s801 = smul.addr %s800, 4
      %s802 = smul.addr %s801, 8
      %s803 = scalar_lea.vmem %s7, %s802
      %p804 = pneg %p234
      %p805 = pneg %p231
      %p806 = scmp.lt.s32.totalorder %s38, 1
      %s807 = scalar_select %p806, %s38, 1
      %s808 = scalar_lea.vmem %s8, %s807
      %p809 = pneg %p260
      %p810 = pneg %p257
      %p811 = scmp.lt.s32.totalorder %s38, 1
      %s812 = scalar_select %p811, %s38, 1
      %s813 = smul.addr %s812, 4
      %s814 = smul.addr %s813, 8
      %s815 = scalar_lea.vmem %s9, %s814
      %p816 = pneg %p286
      %p817 = pneg %p283
      %p818 = scmp.lt.s32.totalorder %s38, 1
      %s819 = scalar_select %p818, %s38, 1
      %s820 = scalar_lea.vmem %s10, %s819
      %p821 = pneg %p312
      %p822 = pneg %p309
      %p823 = scmp.lt.s32.totalorder %s38, 1
      %s824 = scalar_select %p823, %s38, 1
      %s825 = smul.addr %s824, 4
      %s826 = smul.addr %s825, 8
      %s827 = scalar_lea.vmem %s11, %s826
      %p828 = pneg %p338
      %p829 = pneg %p335
      %p830 = scmp.lt.s32.totalorder %s38, 1
      %s831 = scalar_select %p830, %s38, 1
      %s832 = scalar_lea.vmem %s12, %s831
      %p833 = pneg %p364
      %p834 = pneg %p361
      %p835 = scmp.lt.s32.totalorder %s38, 1
      %s836 = scalar_select %p835, %s38, 1
      %s837 = scalar_lea.vmem %s13, %s836
      %p838 = pneg %p390
      %p839 = pneg %p387
      %p840 = scmp.lt.s32.totalorder %s38, 1
      %s841 = scalar_select %p840, %s38, 1
      %s842 = scalar_lea.vmem %s14, %s841
      %p843 = pneg %p416
      %p844 = pneg %p413
      %p845 = scmp.lt.s32.totalorder %s38, 1
      %s846 = scalar_select %p845, %s38, 1
      %p847 = scmp.lt.s32.totalorder %s39, 0
      %s848 = scalar_select %p847, %s39, 0
      %s849 = smul.addr %s846, 4
      %s850 = sadd.s32 %s848, %s849
      %s851 = smul.addr %s850, 8
      %s852 = scalar_lea.vmem %s15, %s851
      %p853 = pneg %p444
      %p854 = pneg %p441
      %p855 = scmp.lt.s32.totalorder %s38, 1
      %s856 = scalar_select %p855, %s38, 1
      %p857 = scmp.lt.s32.totalorder %s39, 0
      %s858 = scalar_select %p857, %s39, 0
      %s859 = sadd.s32 %s858, %s856
      %s860 = scalar_lea.vmem %s16, %s859
      %p861 = pneg %p472
      %p862 = pneg %p469
      %s863 = smul.u32 8, %s39
      %p864 = scmp.lt.s32.totalorder %s38, 1
      %s865 = scalar_select %p864, %s38, 1
      %p866 = scmp.lt.s32.totalorder %s863, 7
      %s867 = scalar_select %p866, %s863, 7
      %s868 = smul.addr %s865, 8
      %s869 = sadd.s32 %s867, %s868
      %s870 = smul.addr %s869, 8
      %s871 = scalar_lea.vmem %s17, %s870
      %p872 = pneg %p500
      %p873 = pneg %p497
      %p874 = scmp.lt.s32.totalorder %s38, 1
      %s875 = scalar_select %p874, %s38, 1
      %s876 = scalar_lea.vmem %s18, %s875
      %p877 = pneg %p526
      %p878 = pneg %p523
      %p879 = scmp.lt.s32.totalorder %s38, 1
      %s880 = scalar_select %p879, %s38, 1
      %s881 = scalar_lea.vmem %s19, %s880
      %p882 = pneg %p552
      %p883 = pneg %p549
      %p884 = scmp.lt.s32.totalorder %s38, 1
      %s885 = scalar_select %p884, %s38, 1
      %s886 = scalar_lea.vmem %s20, %s885
      %p887 = pneg %p578
      %p888 = pneg %p575
      %p889 = pneg %p604
      %p890 = pneg %p601
      %s891 = smul.u32 2, %s37
      %p892 = scmp.lt.s32.totalorder %s891, 3
      %s893 = scalar_select %p892, %s891, 3
      %s894 = smul.addr %s893, 2
      %s895 = smul.addr %s894, 8
      %s896 = scalar_lea.vmem %s21, %s895
      %s897 = smul.u32 2, %s37
      %p898 = scmp.lt.s32.totalorder %s897, 3
      %s899 = scalar_select %p898, %s897, 3
      %s900 = smul.addr %s899, 2
      %s901 = smul.addr %s900, 8
      %s902 = scalar_lea.vmem %s0, %s901
      %s903 = smul.u32 2, %s37
      %p904 = scmp.lt.s32.totalorder %s38, 1
      %s905 = scalar_select %p904, %s38, 1
      %s906 = smul.addr %s905, 4
      %s907 = smul.addr %s906, 8
      %s908 = scalar_lea.vmem %s5, %s907
      %p909 = scmp.lt.s32.totalorder %s38, 1
      %s910 = scalar_select %p909, %s38, 1
      %s911 = scalar_lea.vmem %s6, %s910
      %p912 = scmp.lt.s32.totalorder %s38, 1
      %s913 = scalar_select %p912, %s38, 1
      %s914 = smul.addr %s913, 4
      %s915 = smul.addr %s914, 8
      %s916 = scalar_lea.vmem %s7, %s915
      %p917 = scmp.lt.s32.totalorder %s38, 1
      %s918 = scalar_select %p917, %s38, 1
      %s919 = scalar_lea.vmem %s8, %s918
      %p920 = scmp.lt.s32.totalorder %s38, 1
      %s921 = scalar_select %p920, %s38, 1
      %s922 = smul.addr %s921, 4
      %s923 = smul.addr %s922, 8
      %s924 = scalar_lea.vmem %s9, %s923
      %p925 = scmp.lt.s32.totalorder %s38, 1
      %s926 = scalar_select %p925, %s38, 1
      %s927 = scalar_lea.vmem %s10, %s926
      %p928 = scmp.lt.s32.totalorder %s38, 1
      %s929 = scalar_select %p928, %s38, 1
      %s930 = smul.addr %s929, 4
      %s931 = smul.addr %s930, 8
      %s932 = scalar_lea.vmem %s11, %s931
      %p933 = scmp.lt.s32.totalorder %s38, 1
      %s934 = scalar_select %p933, %s38, 1
      %s935 = scalar_lea.vmem %s12, %s934
      %p936 = scmp.lt.s32.totalorder %s38, 1
      %s937 = scalar_select %p936, %s38, 1
      %s938 = scalar_lea.vmem %s13, %s937
      %p939 = scmp.lt.s32.totalorder %s38, 1
      %s940 = scalar_select %p939, %s38, 1
      %s941 = scalar_lea.vmem %s14, %s940
      %p942 = scmp.lt.s32.totalorder %s38, 1
      %s943 = scalar_select %p942, %s38, 1
      %p944 = scmp.lt.s32.totalorder %s39, 0
      %s945 = scalar_select %p944, %s39, 0
      %s946 = smul.addr %s943, 4
      %s947 = sadd.s32 %s945, %s946
      %s948 = smul.addr %s947, 8
      %s949 = scalar_lea.vmem %s15, %s948
      %p950 = scmp.lt.s32.totalorder %s38, 1
      %s951 = scalar_select %p950, %s38, 1
      %p952 = scmp.lt.s32.totalorder %s39, 0
      %s953 = scalar_select %p952, %s39, 0
      %s954 = sadd.s32 %s953, %s951
      %s955 = scalar_lea.vmem %s16, %s954
      %s956 = smul.u32 8, %s39
      %p957 = scmp.lt.s32.totalorder %s38, 1
      %s958 = scalar_select %p957, %s38, 1
      %p959 = scmp.lt.s32.totalorder %s956, 7
      %s960 = scalar_select %p959, %s956, 7
      %s961 = smul.addr %s958, 8
      %s962 = sadd.s32 %s960, %s961
      %s963 = smul.addr %s962, 8
      %s964 = scalar_lea.vmem %s17, %s963
      %s965 = smul.u32 8, %s39
      %p966 = scmp.lt.s32.totalorder %s38, 1
      %s967 = scalar_select %p966, %s38, 1
      %s968 = scalar_lea.vmem %s18, %s967
      %p969 = scmp.lt.s32.totalorder %s38, 1
      %s970 = scalar_select %p969, %s38, 1
      %s971 = scalar_lea.vmem %s19, %s970
      %p972 = scmp.lt.s32.totalorder %s38, 1
      %s973 = scalar_select %p972, %s38, 1
      %s974 = scalar_lea.vmem %s20, %s973
      %s975 = smul.u32 2, %s37
      %p976 = scmp.lt.s32.totalorder %s975, 3
      %s977 = scalar_select %p976, %s975, 3
      %s978 = smul.addr %s977, 2
      %s979 = smul.addr %s978, 8
      %s980 = scalar_lea.vmem %s21, %s979
      %s981 = smul.u32 2, %s37
      %p982 = scmp.eq.s32.totalorder %s39, 0
      // Predicated region
      $region105: #{tpu_custom_call.1} parent=103 // pred_check
        %p983 = pneg %p982
      $region106: #{tpu_custom_call.1} parent=103 // pred_check_branch
        %985 = sbr.rel (%p983) target = $region108
      $region107: #{tpu_custom_call.1} parent=103 // pred_region
        %p986 = scmp.eq.s32.totalorder %s38, 0
        // Predicated region
        $region109: #{tpu_custom_call.1} parent=107 // pred_check
          %p987 = pneg %p986
        $region110: #{tpu_custom_call.1} parent=107 // pred_check_branch
          %989 = sbr.rel (%p987) target = $region112
        $region111: #{tpu_custom_call.1} parent=107 // pred_region
          %v990 = vld [vmem:[%s902] sm:$0xff]
          %v991 = vld [vmem:[%s902 + $0x8] sm:$0x1]
          %v992 = vld [vmem:[%s902 + $0x10] sm:$0xff]
          %v993 = vld [vmem:[%s902 + $0x18] sm:$0x1]
          %v998 = vcombine.high %v990, %v990
          %v1000 = vunpack.c.l.s4 1966171168
          %v1001 = vunpack.c.0.s8 %v1000
          %v1002 = vlaneseq
          %v1003 = vshrl.u32 %v1002, 7
          %v1004 = vsub.s32 %v1001, %v1003
          %v1005 = vrot.slane %v990, %v1004
          %v1007 = vunpack.c.l.s4 1966171168
          %v1008 = vunpack.c.0.s8 %v1007
          %v1009 = vlaneseq
          %v1010 = vshrl.u32 %v1009, 7
          %v1011 = vsub.s32 %v1008, %v1010
          %v1012 = vrot.slane %v998, %v1011
          %v1013 = vcombine.high %v1005, %v1005
          %v1014 = vcombine.high %v1012, %v1012
          %v1016 = vunpack.c.l.s4 1966171168
          %v1017 = vunpack.c.0.s8 %v1016
          %v1018 = vlaneseq
          %v1019 = vshrl.u32 %v1018, 7
          %v1020 = vsub.s32 %v1017, %v1019
          %v1021 = vrot.slane %v1005, %v1020
          %v1023 = vunpack.c.l.s4 1966171168
          %v1024 = vunpack.c.0.s8 %v1023
          %v1025 = vlaneseq
          %v1026 = vshrl.u32 %v1025, 7
          %v1027 = vsub.s32 %v1024, %v1026
          %v1028 = vrot.slane %v1012, %v1027
          %v1030 = vunpack.c.l.s4 1966171168
          %v1031 = vunpack.c.0.s8 %v1030
          %v1032 = vlaneseq
          %v1033 = vshrl.u32 %v1032, 7
          %v1034 = vsub.s32 %v1031, %v1033
          %v1035 = vrot.slane %v1013, %v1034
          %v1037 = vunpack.c.l.s4 1966171168
          %v1038 = vunpack.c.0.s8 %v1037
          %v1039 = vlaneseq
          %v1040 = vshrl.u32 %v1039, 7
          %v1041 = vsub.s32 %v1038, %v1040
          %v1042 = vrot.slane %v1014, %v1041
          %v1043 = vcombine.high %v1021, %v1021
          %v1044 = vcombine.high %v1028, %v1028
          %v1045 = vcombine.high %v1035, %v1035
          %v1046 = vcombine.high %v1042, %v1042
          %v1048 = vunpack.c.l.s4 1966171168
          %v1049 = vunpack.c.0.s8 %v1048
          %v1050 = vlaneseq
          %v1051 = vshrl.u32 %v1050, 7
          %v1052 = vsub.s32 %v1049, %v1051
          %v1053 = vrot.slane %v991, %v1052
          %v1055 = vunpack.c.l.s4 1966171168
          %v1056 = vunpack.c.0.s8 %v1055
          %v1057 = vlaneseq
          %v1058 = vshrl.u32 %v1057, 7
          %v1059 = vsub.s32 %v1056, %v1058
          %v1060 = vrot.slane %v1053, %v1059
          %v1061 = vcombine.high %v992, %v992
          %v1063 = vunpack.c.l.s4 1966171168
          %v1064 = vunpack.c.0.s8 %v1063
          %v1065 = vlaneseq
          %v1066 = vshrl.u32 %v1065, 7
          %v1067 = vsub.s32 %v1064, %v1066
          %v1068 = vrot.slane %v992, %v1067
          %v1070 = vunpack.c.l.s4 1966171168
          %v1071 = vunpack.c.0.s8 %v1070
          %v1072 = vlaneseq
          %v1073 = vshrl.u32 %v1072, 7
          %v1074 = vsub.s32 %v1071, %v1073
          %v1075 = vrot.slane %v1061, %v1074
          %v1076 = vcombine.high %v1068, %v1068
          %v1077 = vcombine.high %v1075, %v1075
          %v1079 = vunpack.c.l.s4 1966171168
          %v1080 = vunpack.c.0.s8 %v1079
          %v1081 = vlaneseq
          %v1082 = vshrl.u32 %v1081, 7
          %v1083 = vsub.s32 %v1080, %v1082
          %v1084 = vrot.slane %v1068, %v1083
          %v1086 = vunpack.c.l.s4 1966171168
          %v1087 = vunpack.c.0.s8 %v1086
          %v1088 = vlaneseq
          %v1089 = vshrl.u32 %v1088, 7
          %v1090 = vsub.s32 %v1087, %v1089
          %v1091 = vrot.slane %v1075, %v1090
          %v1093 = vunpack.c.l.s4 1966171168
          %v1094 = vunpack.c.0.s8 %v1093
          %v1095 = vlaneseq
          %v1096 = vshrl.u32 %v1095, 7
          %v1097 = vsub.s32 %v1094, %v1096
          %v1098 = vrot.slane %v1076, %v1097
          %v1100 = vunpack.c.l.s4 1966171168
          %v1101 = vunpack.c.0.s8 %v1100
          %v1102 = vlaneseq
          %v1103 = vshrl.u32 %v1102, 7
          %v1104 = vsub.s32 %v1101, %v1103
          %v1105 = vrot.slane %v1077, %v1104
          %v1106 = vcombine.high %v1084, %v1084
          %v1107 = vcombine.high %v1091, %v1091
          %v1108 = vcombine.high %v1098, %v1098
          %v1109 = vcombine.high %v1105, %v1105
          %v1111 = vunpack.c.l.s4 1966171168
          %v1112 = vunpack.c.0.s8 %v1111
          %v1113 = vlaneseq
          %v1114 = vshrl.u32 %v1113, 7
          %v1115 = vsub.s32 %v1112, %v1114
          %v1116 = vrot.slane %v993, %v1115
          %v1118 = vunpack.c.l.s4 1966171168
          %v1119 = vunpack.c.0.s8 %v1118
          %v1120 = vlaneseq
          %v1121 = vshrl.u32 %v1120, 7
          %v1122 = vsub.s32 %v1119, %v1121
          %v1123 = vrot.slane %v1116, %v1122
          %v1142 = vld [vmem:[%s3] sm:$0x1]
          %v1143 = vld [vmem:[%s4] sm:$0x1]
          %v1144 = vcombine.low %v1021, %v1035
          %v1145 = vcombine.low %v1043, %v1045
          %v1146 = vcombine.low %v1028, %v1042
          %v1147 = vcombine.low %v1044, %v1046
          %v1149 = vunpack.c.l.s4 1966171168
          %v1150 = vunpack.c.0.s8 %v1149
          %v1151 = vlaneseq
          %v1152 = vshrl.u32 %v1151, 7
          %v1153 = vsub.s32 %v1150, %v1152
          %v1154 = vrot.slane %v1144, %v1153
          %v1156 = vunpack.c.l.s4 1966171168
          %v1157 = vunpack.c.0.s8 %v1156
          %v1158 = vlaneseq
          %v1159 = vshrl.u32 %v1158, 7
          %v1160 = vsub.s32 %v1157, %v1159
          %v1161 = vrot.slane %v1145, %v1160
          %v1163 = vunpack.c.l.s4 1966171168
          %v1164 = vunpack.c.0.s8 %v1163
          %v1165 = vlaneseq
          %v1166 = vshrl.u32 %v1165, 7
          %v1167 = vsub.s32 %v1164, %v1166
          %v1168 = vrot.slane %v1146, %v1167
          %v1170 = vunpack.c.l.s4 1966171168
          %v1171 = vunpack.c.0.s8 %v1170
          %v1172 = vlaneseq
          %v1173 = vshrl.u32 %v1172, 7
          %v1174 = vsub.s32 %v1171, %v1173
          %v1175 = vrot.slane %v1147, %v1174
          %v1176 = vcombine.low %v1154, %v1161
          %v1177 = vcombine.low %v1168, %v1175
          %v1179 = vunpack.c.l.s4 1966171168
          %v1180 = vunpack.c.0.s8 %v1179
          %v1181 = vlaneseq
          %v1182 = vshrl.u32 %v1181, 7
          %v1183 = vsub.s32 %v1180, %v1182
          %v1184 = vrot.slane %v1176, %v1183
          %v1186 = vunpack.c.l.s4 1966171168
          %v1187 = vunpack.c.0.s8 %v1186
          %v1188 = vlaneseq
          %v1189 = vshrl.u32 %v1188, 7
          %v1190 = vsub.s32 %v1187, %v1189
          %v1191 = vrot.slane %v1177, %v1190
          %v1192 = vcombine.low %v1184, %v1191
          %v1193 = vcombine.low %v1060, %v1084
          %v1194 = vcombine.low %v1098, %v1106
          %v1195 = vcombine.low %v1108, %v1091
          %v1196 = vcombine.low %v1105, %v1107
          %v1198 = vunpack.c.l.s4 1966171168
          %v1199 = vunpack.c.0.s8 %v1198
          %v1200 = vlaneseq
          %v1201 = vshrl.u32 %v1200, 7
          %v1202 = vsub.s32 %v1199, %v1201
          %v1203 = vrot.slane %v1193, %v1202
          %v1205 = vunpack.c.l.s4 1966171168
          %v1206 = vunpack.c.0.s8 %v1205
          %v1207 = vlaneseq
          %v1208 = vshrl.u32 %v1207, 7
          %v1209 = vsub.s32 %v1206, %v1208
          %v1210 = vrot.slane %v1194, %v1209
          %v1212 = vunpack.c.l.s4 1966171168
          %v1213 = vunpack.c.0.s8 %v1212
          %v1214 = vlaneseq
          %v1215 = vshrl.u32 %v1214, 7
          %v1216 = vsub.s32 %v1213, %v1215
          %v1217 = vrot.slane %v1195, %v1216
          %v1219 = vunpack.c.l.s4 1966171168
          %v1220 = vunpack.c.0.s8 %v1219
          %v1221 = vlaneseq
          %v1222 = vshrl.u32 %v1221, 7
          %v1223 = vsub.s32 %v1220, %v1222
          %v1224 = vrot.slane %v1196, %v1223
          %v1225 = vcombine.low %v1203, %v1210
          %v1226 = vcombine.low %v1217, %v1224
          %v1228 = vunpack.c.l.s4 1966171168
          %v1229 = vunpack.c.0.s8 %v1228
          %v1230 = vlaneseq
          %v1231 = vshrl.u32 %v1230, 7
          %v1232 = vsub.s32 %v1229, %v1231
          %v1233 = vrot.slane %v1225, %v1232
          %v1235 = vunpack.c.l.s4 1966171168
          %v1236 = vunpack.c.0.s8 %v1235
          %v1237 = vlaneseq
          %v1238 = vshrl.u32 %v1237, 7
          %v1239 = vsub.s32 %v1236, %v1238
          %v1240 = vrot.slane %v1226, %v1239
          %v1241 = vcombine.low %v1233, %v1240
          %v1242 = vcombine.low %v1109, %v1123
          %v1244 = vunpack.c.l.s4 1966171168
          %v1245 = vunpack.c.0.s8 %v1244
          %v1246 = vlaneseq
          %v1247 = vshrl.u32 %v1246, 7
          %v1248 = vsub.s32 %v1245, %v1247
          %v1249 = vrot.slane %v1242, %v1248
          %v1251 = vunpack.c.l.s4 1966171168
          %v1252 = vunpack.c.0.s8 %v1251
          %v1253 = vlaneseq
          %v1254 = vshrl.u32 %v1253, 7
          %v1255 = vsub.s32 %v1252, %v1254
          %v1256 = vrot.slane %v1249, %v1255
          %vm1260 = vcmask 261120
          %v1261 = vsel %vm1260, %v1192, 0.0
          %1262 = vadd.xlane.f32.xlu0 %v1261
          %v1263 = vpop.xlane.xlu0 %1262
          %v1264 = vsel %vm1260, %v1241, 0.0
          %1265 = vadd.xlane.f32.xlu0 %v1264
          %v1266 = vpop.xlane.xlu0 %1265
          %vm1267 = vcmask 254976
          %v1268 = vsel %vm1267, %v1256, 0.0
          %1269 = vadd.xlane.f32.xlu0 %v1268
          %v1270 = vpop.xlane.xlu0 %1269
          %v1271 = vrcp.pop 32.0
          %v1272 = vmul.f32 %v1263, %v1271
          %v1273 = vmul.f32 %v1266, %v1271
          %v1274 = vmul.f32 %v1270, %v1271
          %v1278 = vlaneseq
          %v1279 = vshrl.u32 %v1278, 7
          %v1280 = vsub.s32 0, %v1279
          %v1281 = vrot.slane %v1272, %v1280
          %v1282 = vlaneseq
          %v1283 = vshrl.u32 %v1282, 7
          %v1284 = vsub.s32 1, %v1283
          %v1285 = vrot.slane %v1272, %v1284
          %v1286 = vlaneseq
          %v1287 = vshrl.u32 %v1286, 7
          %v1288 = vsub.s32 2, %v1287
          %v1289 = vrot.slane %v1272, %v1288
          %v1290 = vlaneseq
          %v1291 = vshrl.u32 %v1290, 7
          %v1292 = vsub.s32 3, %v1291
          %v1293 = vrot.slane %v1272, %v1292
          %v1294 = vlaneseq
          %v1295 = vshrl.u32 %v1294, 7
          %v1296 = vsub.s32 4, %v1295
          %v1297 = vrot.slane %v1272, %v1296
          %v1298 = vlaneseq
          %v1299 = vshrl.u32 %v1298, 7
          %v1300 = vsub.s32 5, %v1299
          %v1301 = vrot.slane %v1272, %v1300
          %v1302 = vlaneseq
          %v1303 = vshrl.u32 %v1302, 7
          %v1304 = vsub.s32 6, %v1303
          %v1305 = vrot.slane %v1272, %v1304
          %v1306 = vlaneseq
          %v1307 = vshrl.u32 %v1306, 7
          %v1308 = vsub.s32 7, %v1307
          %v1309 = vrot.slane %v1272, %v1308
          %v1310 = vlaneseq
          %v1311 = vshrl.u32 %v1310, 7
          %v1312 = vsub.s32 0, %v1311
          %v1313 = vrot.slane %v1273, %v1312
          %v1314 = vlaneseq
          %v1315 = vshrl.u32 %v1314, 7
          %v1316 = vsub.s32 1, %v1315
          %v1317 = vrot.slane %v1273, %v1316
          %v1318 = vlaneseq
          %v1319 = vshrl.u32 %v1318, 7
          %v1320 = vsub.s32 2, %v1319
          %v1321 = vrot.slane %v1273, %v1320
          %v1322 = vlaneseq
          %v1323 = vshrl.u32 %v1322, 7
          %v1324 = vsub.s32 3, %v1323
          %v1325 = vrot.slane %v1273, %v1324
          %v1326 = vlaneseq
          %v1327 = vshrl.u32 %v1326, 7
          %v1328 = vsub.s32 4, %v1327
          %v1329 = vrot.slane %v1273, %v1328
          %v1330 = vlaneseq
          %v1331 = vshrl.u32 %v1330, 7
          %v1332 = vsub.s32 5, %v1331
          %v1333 = vrot.slane %v1273, %v1332
          %v1334 = vlaneseq
          %v1335 = vshrl.u32 %v1334, 7
          %v1336 = vsub.s32 6, %v1335
          %v1337 = vrot.slane %v1273, %v1336
          %v1338 = vlaneseq
          %v1339 = vshrl.u32 %v1338, 7
          %v1340 = vsub.s32 7, %v1339
          %v1341 = vrot.slane %v1273, %v1340
          %v1342 = vlaneseq
          %v1343 = vshrl.u32 %v1342, 7
          %v1344 = vsub.s32 0, %v1343
          %v1345 = vrot.slane %v1274, %v1344
          %v1346 = vlaneseq
          %v1347 = vshrl.u32 %v1346, 7
          %v1348 = vsub.s32 1, %v1347
          %v1349 = vrot.slane %v1274, %v1348
          %v1368 = vsub.f32 %v1021, %v1281
          %v1369 = vsub.f32 %v1035, %v1285
          %v1370 = vsub.f32 %v1043, %v1289
          %v1371 = vsub.f32 %v1045, %v1293
          %v1372 = vsub.f32 %v1028, %v1297
          %v1373 = vsub.f32 %v1042, %v1301
          %v1374 = vsub.f32 %v1044, %v1305
          %v1375 = vsub.f32 %v1046, %v1309
          %v1376 = vsub.f32 %v1060, %v1313
          %v1377 = vsub.f32 %v1084, %v1317
          %v1378 = vsub.f32 %v1098, %v1321
          %v1379 = vsub.f32 %v1106, %v1325
          %v1380 = vsub.f32 %v1108, %v1329
          %v1381 = vsub.f32 %v1091, %v1333
          %v1382 = vsub.f32 %v1105, %v1337
          %v1383 = vsub.f32 %v1107, %v1341
          %v1384 = vsub.f32 %v1109, %v1345
          %v1385 = vsub.f32 %v1123, %v1349
          %v1386 = vmul.f32 %v1368, %v1368
          %v1387 = vmul.f32 %v1369, %v1369
          %v1388 = vmul.f32 %v1370, %v1370
          %v1389 = vmul.f32 %v1371, %v1371
          %v1390 = vmul.f32 %v1372, %v1372
          %v1391 = vmul.f32 %v1373, %v1373
          %v1392 = vmul.f32 %v1374, %v1374
          %v1393 = vmul.f32 %v1375, %v1375
          %v1394 = vmul.f32 %v1376, %v1376
          %v1395 = vmul.f32 %v1377, %v1377
          %v1396 = vmul.f32 %v1378, %v1378
          %v1397 = vmul.f32 %v1379, %v1379
          %v1398 = vmul.f32 %v1380, %v1380
          %v1399 = vmul.f32 %v1381, %v1381
          %v1400 = vmul.f32 %v1382, %v1382
          %v1401 = vmul.f32 %v1383, %v1383
          %v1402 = vmul.f32 %v1384, %v1384
          %v1403 = vmul.f32 %v1385, %v1385
          %v1422 = vcombine.low %v1386, %v1387
          %v1423 = vcombine.low %v1388, %v1389
          %v1424 = vcombine.low %v1390, %v1391
          %v1425 = vcombine.low %v1392, %v1393
          %v1427 = vunpack.c.l.s4 1966171168
          %v1428 = vunpack.c.0.s8 %v1427
          %v1429 = vlaneseq
          %v1430 = vshrl.u32 %v1429, 7
          %v1431 = vsub.s32 %v1428, %v1430
          %v1432 = vrot.slane %v1422, %v1431
          %v1434 = vunpack.c.l.s4 1966171168
          %v1435 = vunpack.c.0.s8 %v1434
          %v1436 = vlaneseq
          %v1437 = vshrl.u32 %v1436, 7
          %v1438 = vsub.s32 %v1435, %v1437
          %v1439 = vrot.slane %v1423, %v1438
          %v1441 = vunpack.c.l.s4 1966171168
          %v1442 = vunpack.c.0.s8 %v1441
          %v1443 = vlaneseq
          %v1444 = vshrl.u32 %v1443, 7
          %v1445 = vsub.s32 %v1442, %v1444
          %v1446 = vrot.slane %v1424, %v1445
          %v1448 = vunpack.c.l.s4 1966171168
          %v1449 = vunpack.c.0.s8 %v1448
          %v1450 = vlaneseq
          %v1451 = vshrl.u32 %v1450, 7
          %v1452 = vsub.s32 %v1449, %v1451
          %v1453 = vrot.slane %v1425, %v1452
          %v1454 = vcombine.low %v1432, %v1439
          %v1455 = vcombine.low %v1446, %v1453
          %v1457 = vunpack.c.l.s4 1966171168
          %v1458 = vunpack.c.0.s8 %v1457
          %v1459 = vlaneseq
          %v1460 = vshrl.u32 %v1459, 7
          %v1461 = vsub.s32 %v1458, %v1460
          %v1462 = vrot.slane %v1454, %v1461
          %v1464 = vunpack.c.l.s4 1966171168
          %v1465 = vunpack.c.0.s8 %v1464
          %v1466 = vlaneseq
          %v1467 = vshrl.u32 %v1466, 7
          %v1468 = vsub.s32 %v1465, %v1467
          %v1469 = vrot.slane %v1455, %v1468
          %v1470 = vcombine.low %v1462, %v1469
          %v1471 = vcombine.low %v1394, %v1395
          %v1472 = vcombine.low %v1396, %v1397
          %v1473 = vcombine.low %v1398, %v1399
          %v1474 = vcombine.low %v1400, %v1401
          %v1476 = vunpack.c.l.s4 1966171168
          %v1477 = vunpack.c.0.s8 %v1476
          %v1478 = vlaneseq
          %v1479 = vshrl.u32 %v1478, 7
          %v1480 = vsub.s32 %v1477, %v1479
          %v1481 = vrot.slane %v1471, %v1480
          %v1483 = vunpack.c.l.s4 1966171168
          %v1484 = vunpack.c.0.s8 %v1483
          %v1485 = vlaneseq
          %v1486 = vshrl.u32 %v1485, 7
          %v1487 = vsub.s32 %v1484, %v1486
          %v1488 = vrot.slane %v1472, %v1487
          %v1490 = vunpack.c.l.s4 1966171168
          %v1491 = vunpack.c.0.s8 %v1490
          %v1492 = vlaneseq
          %v1493 = vshrl.u32 %v1492, 7
          %v1494 = vsub.s32 %v1491, %v1493
          %v1495 = vrot.slane %v1473, %v1494
          %v1497 = vunpack.c.l.s4 1966171168
          %v1498 = vunpack.c.0.s8 %v1497
          %v1499 = vlaneseq
          %v1500 = vshrl.u32 %v1499, 7
          %v1501 = vsub.s32 %v1498, %v1500
          %v1502 = vrot.slane %v1474, %v1501
          %v1503 = vcombine.low %v1481, %v1488
          %v1504 = vcombine.low %v1495, %v1502
          %v1506 = vunpack.c.l.s4 1966171168
          %v1507 = vunpack.c.0.s8 %v1506
          %v1508 = vlaneseq
          %v1509 = vshrl.u32 %v1508, 7
          %v1510 = vsub.s32 %v1507, %v1509
          %v1511 = vrot.slane %v1503, %v1510
          %v1513 = vunpack.c.l.s4 1966171168
          %v1514 = vunpack.c.0.s8 %v1513
          %v1515 = vlaneseq
          %v1516 = vshrl.u32 %v1515, 7
          %v1517 = vsub.s32 %v1514, %v1516
          %v1518 = vrot.slane %v1504, %v1517
          %v1519 = vcombine.low %v1511, %v1518
          %v1520 = vcombine.low %v1402, %v1403
          %v1522 = vunpack.c.l.s4 1966171168
          %v1523 = vunpack.c.0.s8 %v1522
          %v1524 = vlaneseq
          %v1525 = vshrl.u32 %v1524, 7
          %v1526 = vsub.s32 %v1523, %v1525
          %v1527 = vrot.slane %v1520, %v1526
          %v1529 = vunpack.c.l.s4 1966171168
          %v1530 = vunpack.c.0.s8 %v1529
          %v1531 = vlaneseq
          %v1532 = vshrl.u32 %v1531, 7
          %v1533 = vsub.s32 %v1530, %v1532
          %v1534 = vrot.slane %v1527, %v1533
          %v1538 = vsel %vm1260, %v1470, 0.0
          %1539 = vadd.xlane.f32.xlu0 %v1538
          %v1540 = vpop.xlane.xlu0 %1539
          %v1541 = vsel %vm1260, %v1519, 0.0
          %1542 = vadd.xlane.f32.xlu0 %v1541
          %v1543 = vpop.xlane.xlu0 %1542
          %v1544 = vsel %vm1267, %v1534, 0.0
          %1545 = vadd.xlane.f32.xlu0 %v1544
          %v1546 = vpop.xlane.xlu0 %1545
          %v1547 = vmul.f32 %v1540, %v1271
          %v1548 = vmul.f32 %v1543, %v1271
          %v1549 = vmul.f32 %v1546, %v1271
          %v1550 = vadd.f32 %v1547, 1e-12
          %v1551 = vadd.f32 %v1548, 1e-12
          %v1552 = vadd.f32 %v1549, 1e-12
          %v1553 = vrsqrt.pop %v1550
          %v1554 = vrsqrt.pop %v1551
          %v1555 = vrsqrt.pop %v1552
          %v1559 = vlaneseq
          %v1560 = vshrl.u32 %v1559, 7
          %v1561 = vsub.s32 0, %v1560
          %v1562 = vrot.slane %v1553, %v1561
          %v1563 = vlaneseq
          %v1564 = vshrl.u32 %v1563, 7
          %v1565 = vsub.s32 1, %v1564
          %v1566 = vrot.slane %v1553, %v1565
          %v1567 = vlaneseq
          %v1568 = vshrl.u32 %v1567, 7
          %v1569 = vsub.s32 2, %v1568
          %v1570 = vrot.slane %v1553, %v1569
          %v1571 = vlaneseq
          %v1572 = vshrl.u32 %v1571, 7
          %v1573 = vsub.s32 3, %v1572
          %v1574 = vrot.slane %v1553, %v1573
          %v1575 = vlaneseq
          %v1576 = vshrl.u32 %v1575, 7
          %v1577 = vsub.s32 4, %v1576
          %v1578 = vrot.slane %v1553, %v1577
          %v1579 = vlaneseq
          %v1580 = vshrl.u32 %v1579, 7
          %v1581 = vsub.s32 5, %v1580
          %v1582 = vrot.slane %v1553, %v1581
          %v1583 = vlaneseq
          %v1584 = vshrl.u32 %v1583, 7
          %v1585 = vsub.s32 6, %v1584
          %v1586 = vrot.slane %v1553, %v1585
          %v1587 = vlaneseq
          %v1588 = vshrl.u32 %v1587, 7
          %v1589 = vsub.s32 7, %v1588
          %v1590 = vrot.slane %v1553, %v1589
          %v1591 = vlaneseq
          %v1592 = vshrl.u32 %v1591, 7
          %v1593 = vsub.s32 0, %v1592
          %v1594 = vrot.slane %v1554, %v1593
          %v1595 = vlaneseq
          %v1596 = vshrl.u32 %v1595, 7
          %v1597 = vsub.s32 1, %v1596
          %v1598 = vrot.slane %v1554, %v1597
          %v1599 = vlaneseq
          %v1600 = vshrl.u32 %v1599, 7
          %v1601 = vsub.s32 2, %v1600
          %v1602 = vrot.slane %v1554, %v1601
          %v1603 = vlaneseq
          %v1604 = vshrl.u32 %v1603, 7
          %v1605 = vsub.s32 3, %v1604
          %v1606 = vrot.slane %v1554, %v1605
          %v1607 = vlaneseq
          %v1608 = vshrl.u32 %v1607, 7
          %v1609 = vsub.s32 4, %v1608
          %v1610 = vrot.slane %v1554, %v1609
          %v1611 = vlaneseq
          %v1612 = vshrl.u32 %v1611, 7
          %v1613 = vsub.s32 5, %v1612
          %v1614 = vrot.slane %v1554, %v1613
          %v1615 = vlaneseq
          %v1616 = vshrl.u32 %v1615, 7
          %v1617 = vsub.s32 6, %v1616
          %v1618 = vrot.slane %v1554, %v1617
          %v1619 = vlaneseq
          %v1620 = vshrl.u32 %v1619, 7
          %v1621 = vsub.s32 7, %v1620
          %v1622 = vrot.slane %v1554, %v1621
          %v1623 = vlaneseq
          %v1624 = vshrl.u32 %v1623, 7
          %v1625 = vsub.s32 0, %v1624
          %v1626 = vrot.slane %v1555, %v1625
          %v1627 = vlaneseq
          %v1628 = vshrl.u32 %v1627, 7
          %v1629 = vsub.s32 1, %v1628
          %v1630 = vrot.slane %v1555, %v1629
          %v1649 = vmul.f32 %v1368, %v1562
          %v1650 = vmul.f32 %v1369, %v1566
          %v1651 = vmul.f32 %v1370, %v1570
          %v1652 = vmul.f32 %v1371, %v1574
          %v1653 = vmul.f32 %v1372, %v1578
          %v1654 = vmul.f32 %v1373, %v1582
          %v1655 = vmul.f32 %v1374, %v1586
          %v1656 = vmul.f32 %v1375, %v1590
          %v1657 = vmul.f32 %v1376, %v1594
          %v1658 = vmul.f32 %v1377, %v1598
          %v1659 = vmul.f32 %v1378, %v1602
          %v1660 = vmul.f32 %v1379, %v1606
          %v1661 = vmul.f32 %v1380, %v1610
          %v1662 = vmul.f32 %v1381, %v1614
          %v1663 = vmul.f32 %v1382, %v1618
          %v1664 = vmul.f32 %v1383, %v1622
          %v1665 = vmul.f32 %v1384, %v1626
          %v1666 = vmul.f32 %v1385, %v1630
          %v1668 = vlaneseq
          %v1669 = vshrl.u32 %v1668, 7
          %v1670 = vsub.s32 0, %v1669
          %v1671 = vrot.slane %v1142, %v1670
          %v1672 = vcombine.high %v1671, %v1671
          %v1674 = vunpack.c.l.s4 1966171168
          %v1675 = vunpack.c.0.s8 %v1674
          %v1676 = vlaneseq
          %v1677 = vshrl.u32 %v1676, 7
          %v1678 = vsub.s32 %v1675, %v1677
          %v1679 = vrot.slane %v1671, %v1678
          %v1681 = vunpack.c.l.s4 1966171168
          %v1682 = vunpack.c.0.s8 %v1681
          %v1683 = vlaneseq
          %v1684 = vshrl.u32 %v1683, 7
          %v1685 = vsub.s32 %v1682, %v1684
          %v1686 = vrot.slane %v1672, %v1685
          %v1687 = vcombine.high %v1679, %v1679
          %v1688 = vcombine.high %v1686, %v1686
          %v1690 = vunpack.c.l.s4 1966171168
          %v1691 = vunpack.c.0.s8 %v1690
          %v1692 = vlaneseq
          %v1693 = vshrl.u32 %v1692, 7
          %v1694 = vsub.s32 %v1691, %v1693
          %v1695 = vrot.slane %v1679, %v1694
          %v1697 = vunpack.c.l.s4 1966171168
          %v1698 = vunpack.c.0.s8 %v1697
          %v1699 = vlaneseq
          %v1700 = vshrl.u32 %v1699, 7
          %v1701 = vsub.s32 %v1698, %v1700
          %v1702 = vrot.slane %v1686, %v1701
          %v1704 = vunpack.c.l.s4 1966171168
          %v1705 = vunpack.c.0.s8 %v1704
          %v1706 = vlaneseq
          %v1707 = vshrl.u32 %v1706, 7
          %v1708 = vsub.s32 %v1705, %v1707
          %v1709 = vrot.slane %v1687, %v1708
          %v1711 = vunpack.c.l.s4 1966171168
          %v1712 = vunpack.c.0.s8 %v1711
          %v1713 = vlaneseq
          %v1714 = vshrl.u32 %v1713, 7
          %v1715 = vsub.s32 %v1712, %v1714
          %v1716 = vrot.slane %v1688, %v1715
          %v1717 = vcombine.high %v1695, %v1695
          %v1718 = vcombine.high %v1702, %v1702
          %v1719 = vcombine.high %v1709, %v1709
          %v1720 = vcombine.high %v1716, %v1716
          %v1729 = vmul.f32 %v1649, %v1695
          %v1730 = vmul.f32 %v1650, %v1709
          %v1731 = vmul.f32 %v1651, %v1717
          %v1732 = vmul.f32 %v1652, %v1719
          %v1733 = vmul.f32 %v1653, %v1702
          %v1734 = vmul.f32 %v1654, %v1716
          %v1735 = vmul.f32 %v1655, %v1718
          %v1736 = vmul.f32 %v1656, %v1720
          %v1737 = vmul.f32 %v1657, %v1695
          %v1738 = vmul.f32 %v1658, %v1709
          %v1739 = vmul.f32 %v1659, %v1717
          %v1740 = vmul.f32 %v1660, %v1719
          %v1741 = vmul.f32 %v1661, %v1702
          %v1742 = vmul.f32 %v1662, %v1716
          %v1743 = vmul.f32 %v1663, %v1718
          %v1744 = vmul.f32 %v1664, %v1720
          %v1745 = vmul.f32 %v1665, %v1695
          %v1746 = vmul.f32 %v1666, %v1709
          %v1748 = vlaneseq
          %v1749 = vshrl.u32 %v1748, 7
          %v1750 = vsub.s32 0, %v1749
          %v1751 = vrot.slane %v1143, %v1750
          %v1752 = vcombine.high %v1751, %v1751
          %v1754 = vunpack.c.l.s4 1966171168
          %v1755 = vunpack.c.0.s8 %v1754
          %v1756 = vlaneseq
          %v1757 = vshrl.u32 %v1756, 7
          %v1758 = vsub.s32 %v1755, %v1757
          %v1759 = vrot.slane %v1751, %v1758
          %v1761 = vunpack.c.l.s4 1966171168
          %v1762 = vunpack.c.0.s8 %v1761
          %v1763 = vlaneseq
          %v1764 = vshrl.u32 %v1763, 7
          %v1765 = vsub.s32 %v1762, %v1764
          %v1766 = vrot.slane %v1752, %v1765
          %v1767 = vcombine.high %v1759, %v1759
          %v1768 = vcombine.high %v1766, %v1766
          %v1770 = vunpack.c.l.s4 1966171168
          %v1771 = vunpack.c.0.s8 %v1770
          %v1772 = vlaneseq
          %v1773 = vshrl.u32 %v1772, 7
          %v1774 = vsub.s32 %v1771, %v1773
          %v1775 = vrot.slane %v1759, %v1774
          %v1777 = vunpack.c.l.s4 1966171168
          %v1778 = vunpack.c.0.s8 %v1777
          %v1779 = vlaneseq
          %v1780 = vshrl.u32 %v1779, 7
          %v1781 = vsub.s32 %v1778, %v1780
          %v1782 = vrot.slane %v1766, %v1781
          %v1784 = vunpack.c.l.s4 1966171168
          %v1785 = vunpack.c.0.s8 %v1784
          %v1786 = vlaneseq
          %v1787 = vshrl.u32 %v1786, 7
          %v1788 = vsub.s32 %v1785, %v1787
          %v1789 = vrot.slane %v1767, %v1788
          %v1791 = vunpack.c.l.s4 1966171168
          %v1792 = vunpack.c.0.s8 %v1791
          %v1793 = vlaneseq
          %v1794 = vshrl.u32 %v1793, 7
          %v1795 = vsub.s32 %v1792, %v1794
          %v1796 = vrot.slane %v1768, %v1795
          %v1797 = vcombine.high %v1775, %v1775
          %v1798 = vcombine.high %v1782, %v1782
          %v1799 = vcombine.high %v1789, %v1789
          %v1800 = vcombine.high %v1796, %v1796
          %v1809 = vadd.f32 %v1729, %v1775
          %v1810 = vadd.f32 %v1730, %v1789
          %v1811 = vadd.f32 %v1731, %v1797
          %v1812 = vadd.f32 %v1732, %v1799
          %v1813 = vadd.f32 %v1733, %v1782
          %v1814 = vadd.f32 %v1734, %v1796
          %v1815 = vadd.f32 %v1735, %v1798
          %v1816 = vadd.f32 %v1736, %v1800
          %v1817 = vadd.f32 %v1737, %v1775
          %v1818 = vadd.f32 %v1738, %v1789
          %v1819 = vadd.f32 %v1739, %v1797
          %v1820 = vadd.f32 %v1740, %v1799
          %v1821 = vadd.f32 %v1741, %v1782
          %v1822 = vadd.f32 %v1742, %v1796
          %v1823 = vadd.f32 %v1743, %v1798
          %v1824 = vadd.f32 %v1744, %v1800
          %v1825 = vadd.f32 %v1745, %v1775
          %v1826 = vadd.f32 %v1746, %v1789
          %v1845 = vcombine.low %v1809, %v1810
          %v1846 = vcombine.low %v1811, %v1812
          %v1847 = vcombine.low %v1813, %v1814
          %v1848 = vcombine.low %v1815, %v1816
          %v1850 = vunpack.c.l.s4 1966171168
          %v1851 = vunpack.c.0.s8 %v1850
          %v1852 = vlaneseq
          %v1853 = vshrl.u32 %v1852, 7
          %v1854 = vsub.s32 %v1851, %v1853
          %v1855 = vrot.slane %v1845, %v1854
          %v1857 = vunpack.c.l.s4 1966171168
          %v1858 = vunpack.c.0.s8 %v1857
          %v1859 = vlaneseq
          %v1860 = vshrl.u32 %v1859, 7
          %v1861 = vsub.s32 %v1858, %v1860
          %v1862 = vrot.slane %v1846, %v1861
          %v1864 = vunpack.c.l.s4 1966171168
          %v1865 = vunpack.c.0.s8 %v1864
          %v1866 = vlaneseq
          %v1867 = vshrl.u32 %v1866, 7
          %v1868 = vsub.s32 %v1865, %v1867
          %v1869 = vrot.slane %v1847, %v1868
          %v1871 = vunpack.c.l.s4 1966171168
          %v1872 = vunpack.c.0.s8 %v1871
          %v1873 = vlaneseq
          %v1874 = vshrl.u32 %v1873, 7
          %v1875 = vsub.s32 %v1872, %v1874
          %v1876 = vrot.slane %v1848, %v1875
          %v1877 = vcombine.low %v1855, %v1862
          %v1878 = vcombine.low %v1869, %v1876
          %v1880 = vunpack.c.l.s4 1966171168
          %v1881 = vunpack.c.0.s8 %v1880
          %v1882 = vlaneseq
          %v1883 = vshrl.u32 %v1882, 7
          %v1884 = vsub.s32 %v1881, %v1883
          %v1885 = vrot.slane %v1877, %v1884
          %v1887 = vunpack.c.l.s4 1966171168
          %v1888 = vunpack.c.0.s8 %v1887
          %v1889 = vlaneseq
          %v1890 = vshrl.u32 %v1889, 7
          %v1891 = vsub.s32 %v1888, %v1890
          %v1892 = vrot.slane %v1878, %v1891
          %v1893 = vcombine.low %v1885, %v1892
          %v1895 = vunpack.c.l.s4 1966171168
          %v1896 = vunpack.c.0.s8 %v1895
          %v1897 = vlaneseq
          %v1898 = vshrl.u32 %v1897, 7
          %v1899 = vsub.s32 %v1896, %v1898
          %v1900 = vrot.slane %v1817, %v1899
          %v1902 = vunpack.c.l.s4 1966171168
          %v1903 = vunpack.c.0.s8 %v1902
          %v1904 = vlaneseq
          %v1905 = vshrl.u32 %v1904, 7
          %v1906 = vsub.s32 %v1903, %v1905
          %v1907 = vrot.slane %v1900, %v1906
          %v1908 = vcombine.low %v1818, %v1819
          %v1909 = vcombine.low %v1820, %v1821
          %v1910 = vcombine.low %v1822, %v1823
          %v1911 = vcombine.low %v1824, %v1825
          %v1913 = vunpack.c.l.s4 1966171168
          %v1914 = vunpack.c.0.s8 %v1913
          %v1915 = vlaneseq
          %v1916 = vshrl.u32 %v1915, 7
          %v1917 = vsub.s32 %v1914, %v1916
          %v1918 = vrot.slane %v1908, %v1917
          %v1920 = vunpack.c.l.s4 1966171168
          %v1921 = vunpack.c.0.s8 %v1920
          %v1922 = vlaneseq
          %v1923 = vshrl.u32 %v1922, 7
          %v1924 = vsub.s32 %v1921, %v1923
          %v1925 = vrot.slane %v1909, %v1924
          %v1927 = vunpack.c.l.s4 1966171168
          %v1928 = vunpack.c.0.s8 %v1927
          %v1929 = vlaneseq
          %v1930 = vshrl.u32 %v1929, 7
          %v1931 = vsub.s32 %v1928, %v1930
          %v1932 = vrot.slane %v1910, %v1931
          %v1934 = vunpack.c.l.s4 1966171168
          %v1935 = vunpack.c.0.s8 %v1934
          %v1936 = vlaneseq
          %v1937 = vshrl.u32 %v1936, 7
          %v1938 = vsub.s32 %v1935, %v1937
          %v1939 = vrot.slane %v1911, %v1938
          %v1940 = vcombine.low %v1918, %v1925
          %v1941 = vcombine.low %v1932, %v1939
          %v1943 = vunpack.c.l.s4 1966171168
          %v1944 = vunpack.c.0.s8 %v1943
          %v1945 = vlaneseq
          %v1946 = vshrl.u32 %v1945, 7
          %v1947 = vsub.s32 %v1944, %v1946
          %v1948 = vrot.slane %v1940, %v1947
          %v1950 = vunpack.c.l.s4 1966171168
          %v1951 = vunpack.c.0.s8 %v1950
          %v1952 = vlaneseq
          %v1953 = vshrl.u32 %v1952, 7
          %v1954 = vsub.s32 %v1951, %v1953
          %v1955 = vrot.slane %v1941, %v1954
          %v1956 = vcombine.low %v1948, %v1955
          %v1958 = vunpack.c.l.s4 1966171168
          %v1959 = vunpack.c.0.s8 %v1958
          %v1960 = vlaneseq
          %v1961 = vshrl.u32 %v1960, 7
          %v1962 = vsub.s32 %v1959, %v1961
          %v1963 = vrot.slane %v1826, %v1962
          %v1965 = vunpack.c.l.s4 1966171168
          %v1966 = vunpack.c.0.s8 %v1965
          %v1967 = vlaneseq
          %v1968 = vshrl.u32 %v1967, 7
          %v1969 = vsub.s32 %v1966, %v1968
          %v1970 = vrot.slane %v1963, %v1969
          %1975 = vst.msk [vmem:[%s980] sm:$0xff] %vm1260, %v1893
          %vm1976 = vcmask 253952
          %1977 = vst.msk [vmem:[%s980 + $0x8] sm:$0x1] %vm1976, %v1907
          %1978 = vst.msk [vmem:[%s980 + $0x10] sm:$0xff] %vm1260, %v1956
          %1979 = vst.msk [vmem:[%s980 + $0x18] sm:$0x1] %vm1976, %v1970
        $region112: #{tpu_custom_call.1} parent=107 // pred_fallthru
          _
        %v1980 = vld [vmem:[%s980] sm:$0xff]
        %v1981 = vld [vmem:[%s980 + $0x8] sm:$0x1]
        %v1982 = vld [vmem:[%s980 + $0x10] sm:$0xff]
        %v1983 = vld [vmem:[%s980 + $0x18] sm:$0x1]
        %v1988 = vcombine.high %v1980, %v1980
        %v1990 = vunpack.c.l.s4 1966171168
        %v1991 = vunpack.c.0.s8 %v1990
        %v1992 = vlaneseq
        %v1993 = vshrl.u32 %v1992, 7
        %v1994 = vsub.s32 %v1991, %v1993
        %v1995 = vrot.slane %v1980, %v1994
        %v1997 = vunpack.c.l.s4 1966171168
        %v1998 = vunpack.c.0.s8 %v1997
        %v1999 = vlaneseq
        %v2000 = vshrl.u32 %v1999, 7
        %v2001 = vsub.s32 %v1998, %v2000
        %v2002 = vrot.slane %v1988, %v2001
        %v2003 = vcombine.high %v1995, %v1995
        %v2004 = vcombine.high %v2002, %v2002
        %v2006 = vunpack.c.l.s4 1966171168
        %v2007 = vunpack.c.0.s8 %v2006
        %v2008 = vlaneseq
        %v2009 = vshrl.u32 %v2008, 7
        %v2010 = vsub.s32 %v2007, %v2009
        %v2011 = vrot.slane %v1995, %v2010
        %v2013 = vunpack.c.l.s4 1966171168
        %v2014 = vunpack.c.0.s8 %v2013
        %v2015 = vlaneseq
        %v2016 = vshrl.u32 %v2015, 7
        %v2017 = vsub.s32 %v2014, %v2016
        %v2018 = vrot.slane %v2002, %v2017
        %v2020 = vunpack.c.l.s4 1966171168
        %v2021 = vunpack.c.0.s8 %v2020
        %v2022 = vlaneseq
        %v2023 = vshrl.u32 %v2022, 7
        %v2024 = vsub.s32 %v2021, %v2023
        %v2025 = vrot.slane %v2003, %v2024
        %v2027 = vunpack.c.l.s4 1966171168
        %v2028 = vunpack.c.0.s8 %v2027
        %v2029 = vlaneseq
        %v2030 = vshrl.u32 %v2029, 7
        %v2031 = vsub.s32 %v2028, %v2030
        %v2032 = vrot.slane %v2004, %v2031
        %v2033 = vcombine.high %v2011, %v2011
        %v2034 = vcombine.high %v2018, %v2018
        %v2035 = vcombine.high %v2025, %v2025
        %v2036 = vcombine.high %v2032, %v2032
        %v2038 = vunpack.c.l.s4 1966171168
        %v2039 = vunpack.c.0.s8 %v2038
        %v2040 = vlaneseq
        %v2041 = vshrl.u32 %v2040, 7
        %v2042 = vsub.s32 %v2039, %v2041
        %v2043 = vrot.slane %v1981, %v2042
        %v2045 = vunpack.c.l.s4 1966171168
        %v2046 = vunpack.c.0.s8 %v2045
        %v2047 = vlaneseq
        %v2048 = vshrl.u32 %v2047, 7
        %v2049 = vsub.s32 %v2046, %v2048
        %v2050 = vrot.slane %v2043, %v2049
        %v2051 = vcombine.high %v1982, %v1982
        %v2053 = vunpack.c.l.s4 1966171168
        %v2054 = vunpack.c.0.s8 %v2053
        %v2055 = vlaneseq
        %v2056 = vshrl.u32 %v2055, 7
        %v2057 = vsub.s32 %v2054, %v2056
        %v2058 = vrot.slane %v1982, %v2057
        %v2060 = vunpack.c.l.s4 1966171168
        %v2061 = vunpack.c.0.s8 %v2060
        %v2062 = vlaneseq
        %v2063 = vshrl.u32 %v2062, 7
        %v2064 = vsub.s32 %v2061, %v2063
        %v2065 = vrot.slane %v2051, %v2064
        %v2066 = vcombine.high %v2058, %v2058
        %v2067 = vcombine.high %v2065, %v2065
        %v2069 = vunpack.c.l.s4 1966171168
        %v2070 = vunpack.c.0.s8 %v2069
        %v2071 = vlaneseq
        %v2072 = vshrl.u32 %v2071, 7
        %v2073 = vsub.s32 %v2070, %v2072
        %v2074 = vrot.slane %v2058, %v2073
        %v2076 = vunpack.c.l.s4 1966171168
        %v2077 = vunpack.c.0.s8 %v2076
        %v2078 = vlaneseq
        %v2079 = vshrl.u32 %v2078, 7
        %v2080 = vsub.s32 %v2077, %v2079
        %v2081 = vrot.slane %v2065, %v2080
        %v2083 = vunpack.c.l.s4 1966171168
        %v2084 = vunpack.c.0.s8 %v2083
        %v2085 = vlaneseq
        %v2086 = vshrl.u32 %v2085, 7
        %v2087 = vsub.s32 %v2084, %v2086
        %v2088 = vrot.slane %v2066, %v2087
        %v2090 = vunpack.c.l.s4 1966171168
        %v2091 = vunpack.c.0.s8 %v2090
        %v2092 = vlaneseq
        %v2093 = vshrl.u32 %v2092, 7
        %v2094 = vsub.s32 %v2091, %v2093
        %v2095 = vrot.slane %v2067, %v2094
        %v2096 = vcombine.high %v2074, %v2074
        %v2097 = vcombine.high %v2081, %v2081
        %v2098 = vcombine.high %v2088, %v2088
        %v2099 = vcombine.high %v2095, %v2095
        %v2101 = vunpack.c.l.s4 1966171168
        %v2102 = vunpack.c.0.s8 %v2101
        %v2103 = vlaneseq
        %v2104 = vshrl.u32 %v2103, 7
        %v2105 = vsub.s32 %v2102, %v2104
        %v2106 = vrot.slane %v1983, %v2105
        %v2108 = vunpack.c.l.s4 1966171168
        %v2109 = vunpack.c.0.s8 %v2108
        %v2110 = vlaneseq
        %v2111 = vshrl.u32 %v2110, 7
        %v2112 = vsub.s32 %v2109, %v2111
        %v2113 = vrot.slane %v2106, %v2112
        %v2114 = vld [vmem:[%s908] sm:$0xff]
        %v2115 = vld [vmem:[%s908 + $0x8] sm:$0xff]
        %v2116 = vld [vmem:[%s908 + $0x10] sm:$0xff]
        %v2117 = vld [vmem:[%s908 + $0x18] sm:$0xff]
        %v2118 = vld [vmem:[%s911] sm:$0x1]
        %v2120 = vlaneseq
        %v2121 = vshrl.u32 %v2120, 7
        %v2122 = vsub.s32 0, %v2121
        %v2123 = vrot.slane %v2118, %v2122
        %v2125 = vcombine.low %v2011, %v2025
        %v2126 = vcombine.low %v2033, %v2035
        %v2127 = vcombine.low %v2018, %v2032
        %v2128 = vcombine.low %v2034, %v2036
        %v2130 = vunpack.c.l.s4 1966171168
        %v2131 = vunpack.c.0.s8 %v2130
        %v2132 = vlaneseq
        %v2133 = vshrl.u32 %v2132, 7
        %v2134 = vsub.s32 %v2131, %v2133
        %v2135 = vrot.slane %v2125, %v2134
        %v2137 = vunpack.c.l.s4 1966171168
        %v2138 = vunpack.c.0.s8 %v2137
        %v2139 = vlaneseq
        %v2140 = vshrl.u32 %v2139, 7
        %v2141 = vsub.s32 %v2138, %v2140
        %v2142 = vrot.slane %v2126, %v2141
        %v2144 = vunpack.c.l.s4 1966171168
        %v2145 = vunpack.c.0.s8 %v2144
        %v2146 = vlaneseq
        %v2147 = vshrl.u32 %v2146, 7
        %v2148 = vsub.s32 %v2145, %v2147
        %v2149 = vrot.slane %v2127, %v2148
        %v2151 = vunpack.c.l.s4 1966171168
        %v2152 = vunpack.c.0.s8 %v2151
        %v2153 = vlaneseq
        %v2154 = vshrl.u32 %v2153, 7
        %v2155 = vsub.s32 %v2152, %v2154
        %v2156 = vrot.slane %v2128, %v2155
        %v2157 = vcombine.low %v2135, %v2142
        %v2158 = vcombine.low %v2149, %v2156
        %v2160 = vunpack.c.l.s4 1966171168
        %v2161 = vunpack.c.0.s8 %v2160
        %v2162 = vlaneseq
        %v2163 = vshrl.u32 %v2162, 7
        %v2164 = vsub.s32 %v2161, %v2163
        %v2165 = vrot.slane %v2157, %v2164
        %v2167 = vunpack.c.l.s4 1966171168
        %v2168 = vunpack.c.0.s8 %v2167
        %v2169 = vlaneseq
        %v2170 = vshrl.u32 %v2169, 7
        %v2171 = vsub.s32 %v2168, %v2170
        %v2172 = vrot.slane %v2158, %v2171
        %v2173 = vcombine.low %v2165, %v2172
        %v2174 = vcombine.low %v2050, %v2074
        %v2175 = vcombine.low %v2088, %v2096
        %v2176 = vcombine.low %v2098, %v2081
        %v2177 = vcombine.low %v2095, %v2097
        %v2179 = vunpack.c.l.s4 1966171168
        %v2180 = vunpack.c.0.s8 %v2179
        %v2181 = vlaneseq
        %v2182 = vshrl.u32 %v2181, 7
        %v2183 = vsub.s32 %v2180, %v2182
        %v2184 = vrot.slane %v2174, %v2183
        %v2186 = vunpack.c.l.s4 1966171168
        %v2187 = vunpack.c.0.s8 %v2186
        %v2188 = vlaneseq
        %v2189 = vshrl.u32 %v2188, 7
        %v2190 = vsub.s32 %v2187, %v2189
        %v2191 = vrot.slane %v2175, %v2190
        %v2193 = vunpack.c.l.s4 1966171168
        %v2194 = vunpack.c.0.s8 %v2193
        %v2195 = vlaneseq
        %v2196 = vshrl.u32 %v2195, 7
        %v2197 = vsub.s32 %v2194, %v2196
        %v2198 = vrot.slane %v2176, %v2197
        %v2200 = vunpack.c.l.s4 1966171168
        %v2201 = vunpack.c.0.s8 %v2200
        %v2202 = vlaneseq
        %v2203 = vshrl.u32 %v2202, 7
        %v2204 = vsub.s32 %v2201, %v2203
        %v2205 = vrot.slane %v2177, %v2204
        %v2206 = vcombine.low %v2184, %v2191
        %v2207 = vcombine.low %v2198, %v2205
        %v2209 = vunpack.c.l.s4 1966171168
        %v2210 = vunpack.c.0.s8 %v2209
        %v2211 = vlaneseq
        %v2212 = vshrl.u32 %v2211, 7
        %v2213 = vsub.s32 %v2210, %v2212
        %v2214 = vrot.slane %v2206, %v2213
        %v2216 = vunpack.c.l.s4 1966171168
        %v2217 = vunpack.c.0.s8 %v2216
        %v2218 = vlaneseq
        %v2219 = vshrl.u32 %v2218, 7
        %v2220 = vsub.s32 %v2217, %v2219
        %v2221 = vrot.slane %v2207, %v2220
        %v2222 = vcombine.low %v2214, %v2221
        %v2223 = vcombine.low %v2099, %v2113
        %v2225 = vunpack.c.l.s4 1966171168
        %v2226 = vunpack.c.0.s8 %v2225
        %v2227 = vlaneseq
        %v2228 = vshrl.u32 %v2227, 7
        %v2229 = vsub.s32 %v2226, %v2228
        %v2230 = vrot.slane %v2223, %v2229
        %v2232 = vunpack.c.l.s4 1966171168
        %v2233 = vunpack.c.0.s8 %v2232
        %v2234 = vlaneseq
        %v2235 = vshrl.u32 %v2234, 7
        %v2236 = vsub.s32 %v2233, %v2235
        %v2237 = vrot.slane %v2230, %v2236
        %vm2238 = vcmask 261120
        %v2239 = vsel %vm2238, %v2173, 0
        %v2241 = vsel %vm2238, %v2222, 0
        %v2243 = vsel %vm2238, %v2237, 0
        %2245 = vmatprep.subr.mxu0 0.0
        %2246 = vmatpush1.msra.mxu0 0.0
        %2247 = vmatprep.subr.mxu0 0.0
        %2248 = vmatpush1.msra.mxu0 0.0
        %2249 = vmatprep.subr.mxu0 0.0
        %2250 = vmatpush1.msra.mxu0 0.0
        %2251 = vmatprep.subr.mxu0 0.0
        %2252 = vmatpush1.msra.mxu0 0.0
        %2253 = vmatprep.subr.mxu0 0.0
        %2254 = vmatpush1.msra.mxu0 0.0
        %2255 = vmatprep.subr.mxu0 0.0
        %2256 = vmatpush1.msra.mxu0 0.0
        %2257 = vmatprep.subr.mxu0 0.0
        %2258 = vmatpush1.msra.mxu0 0.0
        %2259 = vmatprep.subr.mxu0 0.0
        %2260 = vmatpush1.msra.mxu0 0.0
        %2261 = vmatprep.subr.mxu0 0.0
        %2262 = vmatpush1.msra.mxu0 0.0
        %2263 = vmatprep.subr.mxu0 0.0
        %2264 = vmatpush1.msra.mxu0 0.0
        %2265 = vmatprep.subr.mxu0 0.0
        %2266 = vmatpush1.msra.mxu0 0.0
        %2267 = vmatprep.subr.mxu0 0.0
        %2268 = vmatpush1.msra.mxu0 0.0
        %2269 = vmatprep.subr.mxu0 0.0
        %2270 = vmatpush1.msra.mxu0 %v2117
        %2271 = vmatprep.subr.mxu0 0.0
        %2272 = vmatpush1.msra.mxu0 %v2116
        %2273 = vmatprep.subr.mxu0 0.0
        %2274 = vmatpush1.msra.mxu0 %v2115
        %2275 = vmatprep.subr.mxu0 0.0
        %2276 = vmatpush1.msra.mxu0 %v2114
        %2277 = vmatprep.subr.mxu0 0.0
        %2278 = vmatpush2.msra.mxu0 0.0
        %2279 = vmatprep.subr.mxu0 0.0
        %2280 = vmatpush2.msra.mxu0 0.0
        %2281 = vmatprep.subr.mxu0 0.0
        %2282 = vmatpush2.msra.mxu0 0.0
        %2283 = vmatprep.subr.mxu0 0.0
        %2284 = vmatpush2.msra.mxu0 0.0
        %2285 = vmatprep.subr.mxu0 0.0
        %2286 = vmatpush2.msra.mxu0 0.0
        %2287 = vmatprep.subr.mxu0 0.0
        %2288 = vmatpush2.msra.mxu0 0.0
        %2289 = vmatprep.subr.mxu0 0.0
        %2290 = vmatpush2.msra.mxu0 0.0
        %2291 = vmatprep.subr.mxu0 0.0
        %2292 = vmatpush2.msra.mxu0 0.0
        %2293 = vmatprep.subr.mxu0 0.0
        %2294 = vmatpush2.msra.mxu0 0.0
        %2295 = vmatprep.subr.mxu0 0.0
        %2296 = vmatpush2.msra.mxu0 0.0
        %2297 = vmatprep.subr.mxu0 0.0
        %2298 = vmatpush2.msra.mxu0 0.0
        %2299 = vmatprep.subr.mxu0 0.0
        %2300 = vmatpush2.msra.mxu0 0.0
        %2301 = vmatprep.subr.mxu0 0.0
        %2302 = vmatpush2.msra.mxu0 0.0
        %2303 = vmatprep.subr.mxu0 0.0
        %2304 = vmatpush2.msra.mxu0 0.0
        %2305 = vmatprep.subr.mxu0 0.0
        %2306 = vmatpush2.msra.mxu0 0.0
        %2307 = vmatprep.subr.mxu0 0.0
        %2308 = vmatpush2.msra.mxu0 0.0
        %2309 = vmatprep.mubr.f32.mxu0 0.0
        %2310 = vmatmul.mubr.f32.gmra.mxu0 %v2239
        %v2311 = vpop.f32.mrf.mxu0
        %v2312 = vadd.f32 %v2123, %v2311
        %v2313 = vpop.f32.mrf.mxu0
        %2314 = vmatprep.mubr.f32.mxu0 0.0
        %2315 = vmatmul.mubr.f32.gmra.mxu0 %v2241
        %v2316 = vpop.f32.mrf.mxu0
        %v2317 = vadd.f32 %v2123, %v2316
        %v2318 = vpop.f32.mrf.mxu0
        %2319 = vmatprep.mubr.f32.mxu0 0.0
        %2320 = vmatmul.mubr.f32.gmra.mxu0 %v2243
        %v2321 = vpop.f32.mrf.mxu0
        %v2322 = vadd.f32 %v2123, %v2321
        %v2323 = vpop.f32.mrf.mxu0
        %2324 = vdwg.mxu0
        %v2325 = vld [vmem:[%s916] sm:$0xff]
        %v2326 = vld [vmem:[%s916 + $0x8] sm:$0xff]
        %v2327 = vld [vmem:[%s916 + $0x10] sm:$0xff]
        %v2328 = vld [vmem:[%s916 + $0x18] sm:$0xff]
        %v2329 = vld [vmem:[%s919] sm:$0x1]
        %v2331 = vlaneseq
        %v2332 = vshrl.u32 %v2331, 7
        %v2333 = vsub.s32 0, %v2332
        %v2334 = vrot.slane %v2329, %v2333
        %2336 = vmatprep.subr.mxu0 0.0
        %2337 = vmatpush1.msra.mxu0 0.0
        %2338 = vmatprep.subr.mxu0 0.0
        %2339 = vmatpush1.msra.mxu0 0.0
        %2340 = vmatprep.subr.mxu0 0.0
        %2341 = vmatpush1.msra.mxu0 0.0
        %2342 = vmatprep.subr.mxu0 0.0
        %2343 = vmatpush1.msra.mxu0 0.0
        %2344 = vmatprep.subr.mxu0 0.0
        %2345 = vmatpush1.msra.mxu0 0.0
        %2346 = vmatprep.subr.mxu0 0.0
        %2347 = vmatpush1.msra.mxu0 0.0
        %2348 = vmatprep.subr.mxu0 0.0
        %2349 = vmatpush1.msra.mxu0 0.0
        %2350 = vmatprep.subr.mxu0 0.0
        %2351 = vmatpush1.msra.mxu0 0.0
        %2352 = vmatprep.subr.mxu0 0.0
        %2353 = vmatpush1.msra.mxu0 0.0
        %2354 = vmatprep.subr.mxu0 0.0
        %2355 = vmatpush1.msra.mxu0 0.0
        %2356 = vmatprep.subr.mxu0 0.0
        %2357 = vmatpush1.msra.mxu0 0.0
        %2358 = vmatprep.subr.mxu0 0.0
        %2359 = vmatpush1.msra.mxu0 0.0
        %2360 = vmatprep.subr.mxu0 0.0
        %2361 = vmatpush1.msra.mxu0 %v2328
        %2362 = vmatprep.subr.mxu0 0.0
        %2363 = vmatpush1.msra.mxu0 %v2327
        %2364 = vmatprep.subr.mxu0 0.0
        %2365 = vmatpush1.msra.mxu0 %v2326
        %2366 = vmatprep.subr.mxu0 0.0
        %2367 = vmatpush1.msra.mxu0 %v2325
        %2368 = vmatprep.subr.mxu0 0.0
        %2369 = vmatpush2.msra.mxu0 0.0
        %2370 = vmatprep.subr.mxu0 0.0
        %2371 = vmatpush2.msra.mxu0 0.0
        %2372 = vmatprep.subr.mxu0 0.0
        %2373 = vmatpush2.msra.mxu0 0.0
        %2374 = vmatprep.subr.mxu0 0.0
        %2375 = vmatpush2.msra.mxu0 0.0
        %2376 = vmatprep.subr.mxu0 0.0
        %2377 = vmatpush2.msra.mxu0 0.0
        %2378 = vmatprep.subr.mxu0 0.0
        %2379 = vmatpush2.msra.mxu0 0.0
        %2380 = vmatprep.subr.mxu0 0.0
        %2381 = vmatpush2.msra.mxu0 0.0
        %2382 = vmatprep.subr.mxu0 0.0
        %2383 = vmatpush2.msra.mxu0 0.0
        %2384 = vmatprep.subr.mxu0 0.0
        %2385 = vmatpush2.msra.mxu0 0.0
        %2386 = vmatprep.subr.mxu0 0.0
        %2387 = vmatpush2.msra.mxu0 0.0
        %2388 = vmatprep.subr.mxu0 0.0
        %2389 = vmatpush2.msra.mxu0 0.0
        %2390 = vmatprep.subr.mxu0 0.0
        %2391 = vmatpush2.msra.mxu0 0.0
        %2392 = vmatprep.subr.mxu0 0.0
        %2393 = vmatpush2.msra.mxu0 0.0
        %2394 = vmatprep.subr.mxu0 0.0
        %2395 = vmatpush2.msra.mxu0 0.0
        %2396 = vmatprep.subr.mxu0 0.0
        %2397 = vmatpush2.msra.mxu0 0.0
        %2398 = vmatprep.subr.mxu0 0.0
        %2399 = vmatpush2.msra.mxu0 0.0
        %2400 = vmatprep.mubr.f32.mxu0 0.0
        %2401 = vmatmul.mubr.f32.gmra.mxu0 %v2239
        %v2402 = vpop.f32.mrf.mxu0
        %v2403 = vadd.f32 %v2334, %v2402
        %v2404 = vpop.f32.mrf.mxu0
        %2405 = vmatprep.mubr.f32.mxu0 0.0
        %2406 = vmatmul.mubr.f32.gmra.mxu0 %v2241
        %v2407 = vpop.f32.mrf.mxu0
        %v2408 = vadd.f32 %v2334, %v2407
        %v2409 = vpop.f32.mrf.mxu0
        %2410 = vmatprep.mubr.f32.mxu0 0.0
        %2411 = vmatmul.mubr.f32.gmra.mxu0 %v2243
        %v2412 = vpop.f32.mrf.mxu0
        %v2413 = vadd.f32 %v2334, %v2412
        %v2414 = vpop.f32.mrf.mxu0
        %2415 = vdwg.mxu0
        %v2416 = vld [vmem:[%s924] sm:$0xff]
        %v2417 = vld [vmem:[%s924 + $0x8] sm:$0xff]
        %v2418 = vld [vmem:[%s924 + $0x10] sm:$0xff]
        %v2419 = vld [vmem:[%s924 + $0x18] sm:$0xff]
        %v2420 = vld [vmem:[%s927] sm:$0x1]
        %v2422 = vlaneseq
        %v2423 = vshrl.u32 %v2422, 7
        %v2424 = vsub.s32 0, %v2423
        %v2425 = vrot.slane %v2420, %v2424
        %2427 = vmatprep.subr.mxu0 0.0
        %2428 = vmatpush1.msra.mxu0 0.0
        %2429 = vmatprep.subr.mxu0 0.0
        %2430 = vmatpush1.msra.mxu0 0.0
        %2431 = vmatprep.subr.mxu0 0.0
        %2432 = vmatpush1.msra.mxu0 0.0
        %2433 = vmatprep.subr.mxu0 0.0
        %2434 = vmatpush1.msra.mxu0 0.0
        %2435 = vmatprep.subr.mxu0 0.0
        %2436 = vmatpush1.msra.mxu0 0.0
        %2437 = vmatprep.subr.mxu0 0.0
        %2438 = vmatpush1.msra.mxu0 0.0
        %2439 = vmatprep.subr.mxu0 0.0
        %2440 = vmatpush1.msra.mxu0 0.0
        %2441 = vmatprep.subr.mxu0 0.0
        %2442 = vmatpush1.msra.mxu0 0.0
        %2443 = vmatprep.subr.mxu0 0.0
        %2444 = vmatpush1.msra.mxu0 0.0
        %2445 = vmatprep.subr.mxu0 0.0
        %2446 = vmatpush1.msra.mxu0 0.0
        %2447 = vmatprep.subr.mxu0 0.0
        %2448 = vmatpush1.msra.mxu0 0.0
        %2449 = vmatprep.subr.mxu0 0.0
        %2450 = vmatpush1.msra.mxu0 0.0
        %2451 = vmatprep.subr.mxu0 0.0
        %2452 = vmatpush1.msra.mxu0 %v2419
        %2453 = vmatprep.subr.mxu0 0.0
        %2454 = vmatpush1.msra.mxu0 %v2418
        %2455 = vmatprep.subr.mxu0 0.0
        %2456 = vmatpush1.msra.mxu0 %v2417
        %2457 = vmatprep.subr.mxu0 0.0
        %2458 = vmatpush1.msra.mxu0 %v2416
        %2459 = vmatprep.subr.mxu0 0.0
        %2460 = vmatpush2.msra.mxu0 0.0
        %2461 = vmatprep.subr.mxu0 0.0
        %2462 = vmatpush2.msra.mxu0 0.0
        %2463 = vmatprep.subr.mxu0 0.0
        %2464 = vmatpush2.msra.mxu0 0.0
        %2465 = vmatprep.subr.mxu0 0.0
        %2466 = vmatpush2.msra.mxu0 0.0
        %2467 = vmatprep.subr.mxu0 0.0
        %2468 = vmatpush2.msra.mxu0 0.0
        %2469 = vmatprep.subr.mxu0 0.0
        %2470 = vmatpush2.msra.mxu0 0.0
        %2471 = vmatprep.subr.mxu0 0.0
        %2472 = vmatpush2.msra.mxu0 0.0
        %2473 = vmatprep.subr.mxu0 0.0
        %2474 = vmatpush2.msra.mxu0 0.0
        %2475 = vmatprep.subr.mxu0 0.0
        %2476 = vmatpush2.msra.mxu0 0.0
        %2477 = vmatprep.subr.mxu0 0.0
        %2478 = vmatpush2.msra.mxu0 0.0
        %2479 = vmatprep.subr.mxu0 0.0
        %2480 = vmatpush2.msra.mxu0 0.0
        %2481 = vmatprep.subr.mxu0 0.0
        %2482 = vmatpush2.msra.mxu0 0.0
        %2483 = vmatprep.subr.mxu0 0.0
        %2484 = vmatpush2.msra.mxu0 0.0
        %2485 = vmatprep.subr.mxu0 0.0
        %2486 = vmatpush2.msra.mxu0 0.0
        %2487 = vmatprep.subr.mxu0 0.0
        %2488 = vmatpush2.msra.mxu0 0.0
        %2489 = vmatprep.subr.mxu0 0.0
        %2490 = vmatpush2.msra.mxu0 0.0
        %2491 = vmatprep.mubr.f32.mxu0 0.0
        %2492 = vmatmul.mubr.f32.gmra.mxu0 %v2239
        %v2493 = vpop.f32.mrf.mxu0
        %v2494 = vadd.f32 %v2425, %v2493
        %v2495 = vpop.f32.mrf.mxu0
        %2496 = vmatprep.mubr.f32.mxu0 0.0
        %2497 = vmatmul.mubr.f32.gmra.mxu0 %v2241
        %v2498 = vpop.f32.mrf.mxu0
        %v2499 = vadd.f32 %v2425, %v2498
        %v2500 = vpop.f32.mrf.mxu0
        %2501 = vmatprep.mubr.f32.mxu0 0.0
        %2502 = vmatmul.mubr.f32.gmra.mxu0 %v2243
        %v2503 = vpop.f32.mrf.mxu0
        %v2504 = vadd.f32 %v2425, %v2503
        %v2505 = vpop.f32.mrf.mxu0
        %2506 = vdwg.mxu0
        %v2507 = vld [vmem:[%s1] sm:$0xff]
        %v2508 = vld [vmem:[%s1 + $0x8] sm:$0x1]
        %v2509 = vld [vmem:[%s2] sm:$0xff]
        %v2510 = vld [vmem:[%s2 + $0x8] sm:$0x1]
        %2514 = vrot.lane.b32.xlu0 %v2312, 120
        %v2515 = vpop.permute.xlu0 %2514
        %2516 = vrot.lane.b32.xlu0 %v2317, 120
        %v2517 = vpop.permute.xlu0 %2516
        %2518 = vrot.lane.b32.xlu0 %v2322, 120
        %v2519 = vpop.permute.xlu0 %2518
        %2523 = vrot.lane.b32.xlu0 %v2312, 112
        %v2524 = vpop.permute.xlu0 %2523
        %2525 = vrot.lane.b32.xlu0 %v2317, 112
        %v2526 = vpop.permute.xlu0 %2525
        %2527 = vrot.lane.b32.xlu0 %v2322, 112
        %v2528 = vpop.permute.xlu0 %2527
        %2532 = vrot.lane.b32.xlu0 %v2312, 104
        %v2533 = vpop.permute.xlu0 %2532
        %2534 = vrot.lane.b32.xlu0 %v2317, 104
        %v2535 = vpop.permute.xlu0 %2534
        %2536 = vrot.lane.b32.xlu0 %v2322, 104
        %v2537 = vpop.permute.xlu0 %2536
        %v2541 = vcombine.low %v2312, %v2524
        %v2542 = vcombine.high %v2312, %v2524
        %v2544 = vunpack.c.l.s4 1983009808
        %v2545 = vunpack.c.0.s8 %v2544
        %v2546 = vlaneseq
        %v2547 = vshrl.u32 %v2546, 7
        %v2548 = vsub.s32 %v2545, %v2547
        %v2549 = vrot.slane %v2541, %v2548
        %v2551 = vunpack.c.l.s4 1983009808
        %v2552 = vunpack.c.0.s8 %v2551
        %v2553 = vlaneseq
        %v2554 = vshrl.u32 %v2553, 7
        %v2555 = vsub.s32 %v2552, %v2554
        %v2556 = vrot.slane %v2542, %v2555
        %v2557 = vcombine.low %v2515, %v2533
        %v2558 = vcombine.high %v2515, %v2533
        %v2560 = vunpack.c.l.s4 1983009808
        %v2561 = vunpack.c.0.s8 %v2560
        %v2562 = vlaneseq
        %v2563 = vshrl.u32 %v2562, 7
        %v2564 = vsub.s32 %v2561, %v2563
        %v2565 = vrot.slane %v2557, %v2564
        %v2567 = vunpack.c.l.s4 1983009808
        %v2568 = vunpack.c.0.s8 %v2567
        %v2569 = vlaneseq
        %v2570 = vshrl.u32 %v2569, 7
        %v2571 = vsub.s32 %v2568, %v2570
        %v2572 = vrot.slane %v2558, %v2571
        %v2573 = vcombine.low %v2549, %v2565
        %v2574 = vcombine.high %v2549, %v2565
        %v2576 = vunpack.c.l.s4 1934713408
        %v2577 = vunpack.c.0.s8 %v2576
        %v2578 = vlaneseq
        %v2579 = vshrl.u32 %v2578, 7
        %v2580 = vsub.s32 %v2577, %v2579
        %v2581 = vrot.slane %v2573, %v2580
        %v2583 = vunpack.c.l.s4 1934713408
        %v2584 = vunpack.c.0.s8 %v2583
        %v2585 = vlaneseq
        %v2586 = vshrl.u32 %v2585, 7
        %v2587 = vsub.s32 %v2584, %v2586
        %v2588 = vrot.slane %v2574, %v2587
        %v2589 = vcombine.low %v2556, %v2572
        %v2590 = vcombine.high %v2556, %v2572
        %v2592 = vunpack.c.l.s4 1934713408
        %v2593 = vunpack.c.0.s8 %v2592
        %v2594 = vlaneseq
        %v2595 = vshrl.u32 %v2594, 7
        %v2596 = vsub.s32 %v2593, %v2595
        %v2597 = vrot.slane %v2589, %v2596
        %v2599 = vunpack.c.l.s4 1934713408
        %v2600 = vunpack.c.0.s8 %v2599
        %v2601 = vlaneseq
        %v2602 = vshrl.u32 %v2601, 7
        %v2603 = vsub.s32 %v2600, %v2602
        %v2604 = vrot.slane %v2590, %v2603
        %v2605 = vcombine.high %v2581, 0.0
        %v2606 = vcombine.high %v2588, 0.0
        %v2607 = vcombine.high %v2597, 0.0
        %v2608 = vcombine.high %v2604, 0.0
        %v2609 = vcombine.low %v2317, %v2526
        %v2610 = vcombine.high %v2317, %v2526
        %v2612 = vunpack.c.l.s4 1983009808
        %v2613 = vunpack.c.0.s8 %v2612
        %v2614 = vlaneseq
        %v2615 = vshrl.u32 %v2614, 7
        %v2616 = vsub.s32 %v2613, %v2615
        %v2617 = vrot.slane %v2609, %v2616
        %v2619 = vunpack.c.l.s4 1983009808
        %v2620 = vunpack.c.0.s8 %v2619
        %v2621 = vlaneseq
        %v2622 = vshrl.u32 %v2621, 7
        %v2623 = vsub.s32 %v2620, %v2622
        %v2624 = vrot.slane %v2610, %v2623
        %v2625 = vcombine.low %v2517, %v2535
        %v2626 = vcombine.high %v2517, %v2535
        %v2628 = vunpack.c.l.s4 1983009808
        %v2629 = vunpack.c.0.s8 %v2628
        %v2630 = vlaneseq
        %v2631 = vshrl.u32 %v2630, 7
        %v2632 = vsub.s32 %v2629, %v2631
        %v2633 = vrot.slane %v2625, %v2632
        %v2635 = vunpack.c.l.s4 1983009808
        %v2636 = vunpack.c.0.s8 %v2635
        %v2637 = vlaneseq
        %v2638 = vshrl.u32 %v2637, 7
        %v2639 = vsub.s32 %v2636, %v2638
        %v2640 = vrot.slane %v2626, %v2639
        %v2641 = vcombine.low %v2617, %v2633
        %v2642 = vcombine.high %v2617, %v2633
        %v2644 = vunpack.c.l.s4 1934713408
        %v2645 = vunpack.c.0.s8 %v2644
        %v2646 = vlaneseq
        %v2647 = vshrl.u32 %v2646, 7
        %v2648 = vsub.s32 %v2645, %v2647
        %v2649 = vrot.slane %v2641, %v2648
        %v2651 = vunpack.c.l.s4 1934713408
        %v2652 = vunpack.c.0.s8 %v2651
        %v2653 = vlaneseq
        %v2654 = vshrl.u32 %v2653, 7
        %v2655 = vsub.s32 %v2652, %v2654
        %v2656 = vrot.slane %v2642, %v2655
        %v2657 = vcombine.low %v2624, %v2640
        %v2658 = vcombine.high %v2624, %v2640
        %v2660 = vunpack.c.l.s4 1934713408
        %v2661 = vunpack.c.0.s8 %v2660
        %v2662 = vlaneseq
        %v2663 = vshrl.u32 %v2662, 7
        %v2664 = vsub.s32 %v2661, %v2663
        %v2665 = vrot.slane %v2657, %v2664
        %v2667 = vunpack.c.l.s4 1934713408
        %v2668 = vunpack.c.0.s8 %v2667
        %v2669 = vlaneseq
        %v2670 = vshrl.u32 %v2669, 7
        %v2671 = vsub.s32 %v2668, %v2670
        %v2672 = vrot.slane %v2658, %v2671
        %v2673 = vcombine.high %v2649, 0.0
        %v2674 = vcombine.high %v2656, 0.0
        %v2675 = vcombine.high %v2665, 0.0
        %v2676 = vcombine.high %v2672, 0.0
        %v2677 = vcombine.low %v2322, %v2528
        %v2679 = vunpack.c.l.s4 1983009808
        %v2680 = vunpack.c.0.s8 %v2679
        %v2681 = vlaneseq
        %v2682 = vshrl.u32 %v2681, 7
        %v2683 = vsub.s32 %v2680, %v2682
        %v2684 = vrot.slane %v2677, %v2683
        %v2685 = vcombine.low %v2519, %v2537
        %v2687 = vunpack.c.l.s4 1983009808
        %v2688 = vunpack.c.0.s8 %v2687
        %v2689 = vlaneseq
        %v2690 = vshrl.u32 %v2689, 7
        %v2691 = vsub.s32 %v2688, %v2690
        %v2692 = vrot.slane %v2685, %v2691
        %v2693 = vcombine.low %v2684, %v2692
        %v2695 = vunpack.c.l.s4 1934713408
        %v2696 = vunpack.c.0.s8 %v2695
        %v2697 = vlaneseq
        %v2698 = vshrl.u32 %v2697, 7
        %v2699 = vsub.s32 %v2696, %v2698
        %v2700 = vrot.slane %v2693, %v2699
        %v2701 = vcombine.low %v2581, %v2588
        %v2703 = vunpack.c.l.s4 1983009808
        %v2704 = vunpack.c.0.s8 %v2703
        %v2705 = vlaneseq
        %v2706 = vshrl.u32 %v2705, 7
        %v2707 = vsub.s32 %v2704, %v2706
        %v2708 = vrot.slane %v2701, %v2707
        %v2709 = vcombine.low %v2605, %v2606
        %v2711 = vunpack.c.l.s4 1983009808
        %v2712 = vunpack.c.0.s8 %v2711
        %v2713 = vlaneseq
        %v2714 = vshrl.u32 %v2713, 7
        %v2715 = vsub.s32 %v2712, %v2714
        %v2716 = vrot.slane %v2709, %v2715
        %v2717 = vcombine.low %v2597, %v2604
        %v2719 = vunpack.c.l.s4 1983009808
        %v2720 = vunpack.c.0.s8 %v2719
        %v2721 = vlaneseq
        %v2722 = vshrl.u32 %v2721, 7
        %v2723 = vsub.s32 %v2720, %v2722
        %v2724 = vrot.slane %v2717, %v2723
        %v2725 = vcombine.low %v2607, %v2608
        %v2727 = vunpack.c.l.s4 1983009808
        %v2728 = vunpack.c.0.s8 %v2727
        %v2729 = vlaneseq
        %v2730 = vshrl.u32 %v2729, 7
        %v2731 = vsub.s32 %v2728, %v2730
        %v2732 = vrot.slane %v2725, %v2731
        %v2733 = vcombine.low %v2708, %v2716
        %v2734 = vcombine.high %v2708, %v2716
        %v2736 = vunpack.c.l.s4 1934713408
        %v2737 = vunpack.c.0.s8 %v2736
        %v2738 = vlaneseq
        %v2739 = vshrl.u32 %v2738, 7
        %v2740 = vsub.s32 %v2737, %v2739
        %v2741 = vrot.slane %v2733, %v2740
        %v2743 = vunpack.c.l.s4 1934713408
        %v2744 = vunpack.c.0.s8 %v2743
        %v2745 = vlaneseq
        %v2746 = vshrl.u32 %v2745, 7
        %v2747 = vsub.s32 %v2744, %v2746
        %v2748 = vrot.slane %v2734, %v2747
        %v2749 = vcombine.low %v2724, %v2732
        %v2750 = vcombine.high %v2724, %v2732
        %v2752 = vunpack.c.l.s4 1934713408
        %v2753 = vunpack.c.0.s8 %v2752
        %v2754 = vlaneseq
        %v2755 = vshrl.u32 %v2754, 7
        %v2756 = vsub.s32 %v2753, %v2755
        %v2757 = vrot.slane %v2749, %v2756
        %v2759 = vunpack.c.l.s4 1934713408
        %v2760 = vunpack.c.0.s8 %v2759
        %v2761 = vlaneseq
        %v2762 = vshrl.u32 %v2761, 7
        %v2763 = vsub.s32 %v2760, %v2762
        %v2764 = vrot.slane %v2750, %v2763
        %v2765 = vcombine.low %v2741, %v2757
        %v2766 = vcombine.high %v2741, %v2757
        %v2767 = vcombine.low %v2748, %v2764
        %v2768 = vcombine.high %v2748, %v2764
        %v2770 = vunpack.c.l.s4 1983009808
        %v2771 = vunpack.c.0.s8 %v2770
        %v2772 = vlaneseq
        %v2773 = vshrl.u32 %v2772, 7
        %v2774 = vsub.s32 %v2771, %v2773
        %v2775 = vrot.slane %v2649, %v2774
        %v2776 = vcombine.high %v2775, 0.0
        %v2778 = vunpack.c.l.s4 1934713408
        %v2779 = vunpack.c.0.s8 %v2778
        %v2780 = vlaneseq
        %v2781 = vshrl.u32 %v2780, 7
        %v2782 = vsub.s32 %v2779, %v2781
        %v2783 = vrot.slane %v2775, %v2782
        %v2785 = vunpack.c.l.s4 1934713408
        %v2786 = vunpack.c.0.s8 %v2785
        %v2787 = vlaneseq
        %v2788 = vshrl.u32 %v2787, 7
        %v2789 = vsub.s32 %v2786, %v2788
        %v2790 = vrot.slane %v2776, %v2789
        %v2791 = vcombine.high %v2783, 0.0
        %v2792 = vcombine.high %v2790, 0.0
        %v2793 = vcombine.low %v2673, %v2674
        %v2795 = vunpack.c.l.s4 1983009808
        %v2796 = vunpack.c.0.s8 %v2795
        %v2797 = vlaneseq
        %v2798 = vshrl.u32 %v2797, 7
        %v2799 = vsub.s32 %v2796, %v2798
        %v2800 = vrot.slane %v2793, %v2799
        %v2801 = vcombine.low %v2656, %v2665
        %v2803 = vunpack.c.l.s4 1983009808
        %v2804 = vunpack.c.0.s8 %v2803
        %v2805 = vlaneseq
        %v2806 = vshrl.u32 %v2805, 7
        %v2807 = vsub.s32 %v2804, %v2806
        %v2808 = vrot.slane %v2801, %v2807
        %v2809 = vcombine.low %v2675, %v2676
        %v2811 = vunpack.c.l.s4 1983009808
        %v2812 = vunpack.c.0.s8 %v2811
        %v2813 = vlaneseq
        %v2814 = vshrl.u32 %v2813, 7
        %v2815 = vsub.s32 %v2812, %v2814
        %v2816 = vrot.slane %v2809, %v2815
        %v2817 = vcombine.low %v2672, %v2700
        %v2819 = vunpack.c.l.s4 1983009808
        %v2820 = vunpack.c.0.s8 %v2819
        %v2821 = vlaneseq
        %v2822 = vshrl.u32 %v2821, 7
        %v2823 = vsub.s32 %v2820, %v2822
        %v2824 = vrot.slane %v2817, %v2823
        %v2825 = vcombine.low %v2800, %v2808
        %v2826 = vcombine.high %v2800, %v2808
        %v2828 = vunpack.c.l.s4 1934713408
        %v2829 = vunpack.c.0.s8 %v2828
        %v2830 = vlaneseq
        %v2831 = vshrl.u32 %v2830, 7
        %v2832 = vsub.s32 %v2829, %v2831
        %v2833 = vrot.slane %v2825, %v2832
        %v2835 = vunpack.c.l.s4 1934713408
        %v2836 = vunpack.c.0.s8 %v2835
        %v2837 = vlaneseq
        %v2838 = vshrl.u32 %v2837, 7
        %v2839 = vsub.s32 %v2836, %v2838
        %v2840 = vrot.slane %v2826, %v2839
        %v2841 = vcombine.low %v2816, %v2824
        %v2842 = vcombine.high %v2816, %v2824
        %v2844 = vunpack.c.l.s4 1934713408
        %v2845 = vunpack.c.0.s8 %v2844
        %v2846 = vlaneseq
        %v2847 = vshrl.u32 %v2846, 7
        %v2848 = vsub.s32 %v2845, %v2847
        %v2849 = vrot.slane %v2841, %v2848
        %v2851 = vunpack.c.l.s4 1934713408
        %v2852 = vunpack.c.0.s8 %v2851
        %v2853 = vlaneseq
        %v2854 = vshrl.u32 %v2853, 7
        %v2855 = vsub.s32 %v2852, %v2854
        %v2856 = vrot.slane %v2842, %v2855
        %v2857 = vcombine.low %v2833, %v2849
        %v2858 = vcombine.high %v2833, %v2849
        %v2859 = vcombine.low %v2840, %v2856
        %v2860 = vcombine.high %v2840, %v2856
        %v2861 = vcombine.high %v2700, 0.0
        %v2863 = vunpack.c.l.s4 1983009808
        %v2864 = vunpack.c.0.s8 %v2863
        %v2865 = vlaneseq
        %v2866 = vshrl.u32 %v2865, 7
        %v2867 = vsub.s32 %v2864, %v2866
        %v2868 = vrot.slane %v2861, %v2867
        %v2869 = vcombine.high %v2868, 0.0
        %v2871 = vunpack.c.l.s4 1934713408
        %v2872 = vunpack.c.0.s8 %v2871
        %v2873 = vlaneseq
        %v2874 = vshrl.u32 %v2873, 7
        %v2875 = vsub.s32 %v2872, %v2874
        %v2876 = vrot.slane %v2868, %v2875
        %v2878 = vunpack.c.l.s4 1934713408
        %v2879 = vunpack.c.0.s8 %v2878
        %v2880 = vlaneseq
        %v2881 = vshrl.u32 %v2880, 7
        %v2882 = vsub.s32 %v2879, %v2881
        %v2883 = vrot.slane %v2869, %v2882
        %v2884 = vcombine.high %v2876, 0.0
        %v2885 = vcombine.high %v2883, 0.0
        %2902 = vrot.lane.b32.xlu0 %v2765, 124
        %v2903 = vpop.permute.xlu0 %2902
        %2904 = vrot.lane.b32.xlu0 %v2783, 124
        %v2905 = vpop.permute.xlu0 %2904
        %2906 = vrot.lane.b32.xlu0 %v2766, 124
        %v2907 = vpop.permute.xlu0 %2906
        %2908 = vrot.lane.b32.xlu0 %v2791, 124
        %v2909 = vpop.permute.xlu0 %2908
        %2910 = vrot.lane.b32.xlu0 %v2767, 124
        %v2911 = vpop.permute.xlu0 %2910
        %2912 = vrot.lane.b32.xlu0 %v2790, 124
        %v2913 = vpop.permute.xlu0 %2912
        %2914 = vrot.lane.b32.xlu0 %v2768, 124
        %v2915 = vpop.permute.xlu0 %2914
        %2916 = vrot.lane.b32.xlu0 %v2792, 124
        %v2917 = vpop.permute.xlu0 %2916
        %2918 = vrot.lane.b32.xlu0 %v2857, 124
        %v2919 = vpop.permute.xlu0 %2918
        %2920 = vrot.lane.b32.xlu0 %v2876, 124
        %v2921 = vpop.permute.xlu0 %2920
        %2922 = vrot.lane.b32.xlu0 %v2858, 124
        %v2923 = vpop.permute.xlu0 %2922
        %2924 = vrot.lane.b32.xlu0 %v2884, 124
        %v2925 = vpop.permute.xlu0 %2924
        %2926 = vrot.lane.b32.xlu0 %v2859, 124
        %v2927 = vpop.permute.xlu0 %2926
        %2928 = vrot.lane.b32.xlu0 %v2883, 124
        %v2929 = vpop.permute.xlu0 %2928
        %2930 = vrot.lane.b32.xlu0 %v2860, 124
        %v2931 = vpop.permute.xlu0 %2930
        %2932 = vrot.lane.b32.xlu0 %v2885, 124
        %v2933 = vpop.permute.xlu0 %2932
        %2950 = vrot.lane.b32.xlu0 %v2765, 4
        %v2951 = vpop.permute.xlu0 %2950
        %2952 = vrot.lane.b32.xlu0 %v2783, 4
        %v2953 = vpop.permute.xlu0 %2952
        %2954 = vrot.lane.b32.xlu0 %v2766, 4
        %v2955 = vpop.permute.xlu0 %2954
        %2956 = vrot.lane.b32.xlu0 %v2791, 4
        %v2957 = vpop.permute.xlu0 %2956
        %2958 = vrot.lane.b32.xlu0 %v2767, 4
        %v2959 = vpop.permute.xlu0 %2958
        %2960 = vrot.lane.b32.xlu0 %v2790, 4
        %v2961 = vpop.permute.xlu0 %2960
        %2962 = vrot.lane.b32.xlu0 %v2768, 4
        %v2963 = vpop.permute.xlu0 %2962
        %2964 = vrot.lane.b32.xlu0 %v2792, 4
        %v2965 = vpop.permute.xlu0 %2964
        %2966 = vrot.lane.b32.xlu0 %v2857, 4
        %v2967 = vpop.permute.xlu0 %2966
        %2968 = vrot.lane.b32.xlu0 %v2876, 4
        %v2969 = vpop.permute.xlu0 %2968
        %2970 = vrot.lane.b32.xlu0 %v2858, 4
        %v2971 = vpop.permute.xlu0 %2970
        %2972 = vrot.lane.b32.xlu0 %v2884, 4
        %v2973 = vpop.permute.xlu0 %2972
        %2974 = vrot.lane.b32.xlu0 %v2859, 4
        %v2975 = vpop.permute.xlu0 %2974
        %2976 = vrot.lane.b32.xlu0 %v2883, 4
        %v2977 = vpop.permute.xlu0 %2976
        %2978 = vrot.lane.b32.xlu0 %v2860, 4
        %v2979 = vpop.permute.xlu0 %2978
        %2980 = vrot.lane.b32.xlu0 %v2885, 4
        %v2981 = vpop.permute.xlu0 %2980
        %vm2998 = vcmask 31744
        %v2999 = vsel %vm2998, %v2903, %v2951
        %v3000 = vsel %vm2998, %v2905, %v2953
        %v3001 = vsel %vm2998, %v2907, %v2955
        %v3002 = vsel %vm2998, %v2909, %v2957
        %v3003 = vsel %vm2998, %v2911, %v2959
        %v3004 = vsel %vm2998, %v2913, %v2961
        %v3005 = vsel %vm2998, %v2915, %v2963
        %v3006 = vsel %vm2998, %v2917, %v2965
        %v3007 = vsel %vm2998, %v2919, %v2967
        %v3008 = vsel %vm2998, %v2921, %v2969
        %v3009 = vsel %vm2998, %v2923, %v2971
        %v3010 = vsel %vm2998, %v2925, %v2973
        %v3011 = vsel %vm2998, %v2927, %v2975
        %v3012 = vsel %vm2998, %v2929, %v2977
        %v3013 = vsel %vm2998, %v2931, %v2979
        %v3014 = vsel %vm2998, %v2933, %v2981
        %v3015 = vmul.f32 %v2765, %v2509
        %v3016 = vmul.f32 %v2783, %v2510
        %v3017 = vmul.f32 %v2766, %v2509
        %v3018 = vmul.f32 %v2791, %v2510
        %v3019 = vmul.f32 %v2767, %v2509
        %v3020 = vmul.f32 %v2790, %v2510
        %v3021 = vmul.f32 %v2768, %v2509
        %v3022 = vmul.f32 %v2792, %v2510
        %v3023 = vmul.f32 %v2857, %v2509
        %v3024 = vmul.f32 %v2876, %v2510
        %v3025 = vmul.f32 %v2858, %v2509
        %v3026 = vmul.f32 %v2884, %v2510
        %v3027 = vmul.f32 %v2859, %v2509
        %v3028 = vmul.f32 %v2883, %v2510
        %v3029 = vmul.f32 %v2860, %v2509
        %v3030 = vmul.f32 %v2885, %v2510
        %v3031 = vmul.f32 %v2999, %v2507
        %v3032 = vmul.f32 %v3000, %v2508
        %v3033 = vmul.f32 %v3001, %v2507
        %v3034 = vmul.f32 %v3002, %v2508
        %v3035 = vmul.f32 %v3003, %v2507
        %v3036 = vmul.f32 %v3004, %v2508
        %v3037 = vmul.f32 %v3005, %v2507
        %v3038 = vmul.f32 %v3006, %v2508
        %v3039 = vmul.f32 %v3007, %v2507
        %v3040 = vmul.f32 %v3008, %v2508
        %v3041 = vmul.f32 %v3009, %v2507
        %v3042 = vmul.f32 %v3010, %v2508
        %v3043 = vmul.f32 %v3011, %v2507
        %v3044 = vmul.f32 %v3012, %v2508
        %v3045 = vmul.f32 %v3013, %v2507
        %v3046 = vmul.f32 %v3014, %v2508
        %v3047 = vadd.f32 %v3015, %v3031
        %v3048 = vadd.f32 %v3016, %v3032
        %v3049 = vadd.f32 %v3017, %v3033
        %v3050 = vadd.f32 %v3018, %v3034
        %v3051 = vadd.f32 %v3019, %v3035
        %v3052 = vadd.f32 %v3020, %v3036
        %v3053 = vadd.f32 %v3021, %v3037
        %v3054 = vadd.f32 %v3022, %v3038
        %v3055 = vadd.f32 %v3023, %v3039
        %v3056 = vadd.f32 %v3024, %v3040
        %v3057 = vadd.f32 %v3025, %v3041
        %v3058 = vadd.f32 %v3026, %v3042
        %v3059 = vadd.f32 %v3027, %v3043
        %v3060 = vadd.f32 %v3028, %v3044
        %v3061 = vadd.f32 %v3029, %v3045
        %v3062 = vadd.f32 %v3030, %v3046
        %3066 = vrot.lane.b32.xlu0 %v2403, 120
        %v3067 = vpop.permute.xlu0 %3066
        %3068 = vrot.lane.b32.xlu0 %v2408, 120
        %v3069 = vpop.permute.xlu0 %3068
        %3070 = vrot.lane.b32.xlu0 %v2413, 120
        %v3071 = vpop.permute.xlu0 %3070
        %3075 = vrot.lane.b32.xlu0 %v2403, 112
        %v3076 = vpop.permute.xlu0 %3075
        %3077 = vrot.lane.b32.xlu0 %v2408, 112
        %v3078 = vpop.permute.xlu0 %3077
        %3079 = vrot.lane.b32.xlu0 %v2413, 112
        %v3080 = vpop.permute.xlu0 %3079
        %3084 = vrot.lane.b32.xlu0 %v2403, 104
        %v3085 = vpop.permute.xlu0 %3084
        %3086 = vrot.lane.b32.xlu0 %v2408, 104
        %v3087 = vpop.permute.xlu0 %3086
        %3088 = vrot.lane.b32.xlu0 %v2413, 104
        %v3089 = vpop.permute.xlu0 %3088
        %v3093 = vcombine.low %v2403, %v3076
        %v3094 = vcombine.high %v2403, %v3076
        %v3096 = vunpack.c.l.s4 1983009808
        %v3097 = vunpack.c.0.s8 %v3096
        %v3098 = vlaneseq
        %v3099 = vshrl.u32 %v3098, 7
        %v3100 = vsub.s32 %v3097, %v3099
        %v3101 = vrot.slane %v3093, %v3100
        %v3103 = vunpack.c.l.s4 1983009808
        %v3104 = vunpack.c.0.s8 %v3103
        %v3105 = vlaneseq
        %v3106 = vshrl.u32 %v3105, 7
        %v3107 = vsub.s32 %v3104, %v3106
        %v3108 = vrot.slane %v3094, %v3107
        %v3109 = vcombine.low %v3067, %v3085
        %v3110 = vcombine.high %v3067, %v3085
        %v3112 = vunpack.c.l.s4 1983009808
        %v3113 = vunpack.c.0.s8 %v3112
        %v3114 = vlaneseq
        %v3115 = vshrl.u32 %v3114, 7
        %v3116 = vsub.s32 %v3113, %v3115
        %v3117 = vrot.slane %v3109, %v3116
        %v3119 = vunpack.c.l.s4 1983009808
        %v3120 = vunpack.c.0.s8 %v3119
        %v3121 = vlaneseq
        %v3122 = vshrl.u32 %v3121, 7
        %v3123 = vsub.s32 %v3120, %v3122
        %v3124 = vrot.slane %v3110, %v3123
        %v3125 = vcombine.low %v3101, %v3117
        %v3126 = vcombine.high %v3101, %v3117
        %v3128 = vunpack.c.l.s4 1934713408
        %v3129 = vunpack.c.0.s8 %v3128
        %v3130 = vlaneseq
        %v3131 = vshrl.u32 %v3130, 7
        %v3132 = vsub.s32 %v3129, %v3131
        %v3133 = vrot.slane %v3125, %v3132
        %v3135 = vunpack.c.l.s4 1934713408
        %v3136 = vunpack.c.0.s8 %v3135
        %v3137 = vlaneseq
        %v3138 = vshrl.u32 %v3137, 7
        %v3139 = vsub.s32 %v3136, %v3138
        %v3140 = vrot.slane %v3126, %v3139
        %v3141 = vcombine.low %v3108, %v3124
        %v3142 = vcombine.high %v3108, %v3124
        %v3144 = vunpack.c.l.s4 1934713408
        %v3145 = vunpack.c.0.s8 %v3144
        %v3146 = vlaneseq
        %v3147 = vshrl.u32 %v3146, 7
        %v3148 = vsub.s32 %v3145, %v3147
        %v3149 = vrot.slane %v3141, %v3148
        %v3151 = vunpack.c.l.s4 1934713408
        %v3152 = vunpack.c.0.s8 %v3151
        %v3153 = vlaneseq
        %v3154 = vshrl.u32 %v3153, 7
        %v3155 = vsub.s32 %v3152, %v3154
        %v3156 = vrot.slane %v3142, %v3155
        %v3157 = vcombine.high %v3133, 0.0
        %v3158 = vcombine.high %v3140, 0.0
        %v3159 = vcombine.high %v3149, 0.0
        %v3160 = vcombine.high %v3156, 0.0
        %v3161 = vcombine.low %v2408, %v3078
        %v3162 = vcombine.high %v2408, %v3078
        %v3164 = vunpack.c.l.s4 1983009808
        %v3165 = vunpack.c.0.s8 %v3164
        %v3166 = vlaneseq
        %v3167 = vshrl.u32 %v3166, 7
        %v3168 = vsub.s32 %v3165, %v3167
        %v3169 = vrot.slane %v3161, %v3168
        %v3171 = vunpack.c.l.s4 1983009808
        %v3172 = vunpack.c.0.s8 %v3171
        %v3173 = vlaneseq
        %v3174 = vshrl.u32 %v3173, 7
        %v3175 = vsub.s32 %v3172, %v3174
        %v3176 = vrot.slane %v3162, %v3175
        %v3177 = vcombine.low %v3069, %v3087
        %v3178 = vcombine.high %v3069, %v3087
        %v3180 = vunpack.c.l.s4 1983009808
        %v3181 = vunpack.c.0.s8 %v3180
        %v3182 = vlaneseq
        %v3183 = vshrl.u32 %v3182, 7
        %v3184 = vsub.s32 %v3181, %v3183
        %v3185 = vrot.slane %v3177, %v3184
        %v3187 = vunpack.c.l.s4 1983009808
        %v3188 = vunpack.c.0.s8 %v3187
        %v3189 = vlaneseq
        %v3190 = vshrl.u32 %v3189, 7
        %v3191 = vsub.s32 %v3188, %v3190
        %v3192 = vrot.slane %v3178, %v3191
        %v3193 = vcombine.low %v3169, %v3185
        %v3194 = vcombine.high %v3169, %v3185
        %v3196 = vunpack.c.l.s4 1934713408
        %v3197 = vunpack.c.0.s8 %v3196
        %v3198 = vlaneseq
        %v3199 = vshrl.u32 %v3198, 7
        %v3200 = vsub.s32 %v3197, %v3199
        %v3201 = vrot.slane %v3193, %v3200
        %v3203 = vunpack.c.l.s4 1934713408
        %v3204 = vunpack.c.0.s8 %v3203
        %v3205 = vlaneseq
        %v3206 = vshrl.u32 %v3205, 7
        %v3207 = vsub.s32 %v3204, %v3206
        %v3208 = vrot.slane %v3194, %v3207
        %v3209 = vcombine.low %v3176, %v3192
        %v3210 = vcombine.high %v3176, %v3192
        %v3212 = vunpack.c.l.s4 1934713408
        %v3213 = vunpack.c.0.s8 %v3212
        %v3214 = vlaneseq
        %v3215 = vshrl.u32 %v3214, 7
        %v3216 = vsub.s32 %v3213, %v3215
        %v3217 = vrot.slane %v3209, %v3216
        %v3219 = vunpack.c.l.s4 1934713408
        %v3220 = vunpack.c.0.s8 %v3219
        %v3221 = vlaneseq
        %v3222 = vshrl.u32 %v3221, 7
        %v3223 = vsub.s32 %v3220, %v3222
        %v3224 = vrot.slane %v3210, %v3223
        %v3225 = vcombine.high %v3201, 0.0
        %v3226 = vcombine.high %v3208, 0.0
        %v3227 = vcombine.high %v3217, 0.0
        %v3228 = vcombine.high %v3224, 0.0
        %v3229 = vcombine.low %v2413, %v3080
        %v3231 = vunpack.c.l.s4 1983009808
        %v3232 = vunpack.c.0.s8 %v3231
        %v3233 = vlaneseq
        %v3234 = vshrl.u32 %v3233, 7
        %v3235 = vsub.s32 %v3232, %v3234
        %v3236 = vrot.slane %v3229, %v3235
        %v3237 = vcombine.low %v3071, %v3089
        %v3239 = vunpack.c.l.s4 1983009808
        %v3240 = vunpack.c.0.s8 %v3239
        %v3241 = vlaneseq
        %v3242 = vshrl.u32 %v3241, 7
        %v3243 = vsub.s32 %v3240, %v3242
        %v3244 = vrot.slane %v3237, %v3243
        %v3245 = vcombine.low %v3236, %v3244
        %v3247 = vunpack.c.l.s4 1934713408
        %v3248 = vunpack.c.0.s8 %v3247
        %v3249 = vlaneseq
        %v3250 = vshrl.u32 %v3249, 7
        %v3251 = vsub.s32 %v3248, %v3250
        %v3252 = vrot.slane %v3245, %v3251
        %v3253 = vcombine.low %v3133, %v3140
        %v3255 = vunpack.c.l.s4 1983009808
        %v3256 = vunpack.c.0.s8 %v3255
        %v3257 = vlaneseq
        %v3258 = vshrl.u32 %v3257, 7
        %v3259 = vsub.s32 %v3256, %v3258
        %v3260 = vrot.slane %v3253, %v3259
        %v3261 = vcombine.low %v3157, %v3158
        %v3263 = vunpack.c.l.s4 1983009808
        %v3264 = vunpack.c.0.s8 %v3263
        %v3265 = vlaneseq
        %v3266 = vshrl.u32 %v3265, 7
        %v3267 = vsub.s32 %v3264, %v3266
        %v3268 = vrot.slane %v3261, %v3267
        %v3269 = vcombine.low %v3149, %v3156
        %v3271 = vunpack.c.l.s4 1983009808
        %v3272 = vunpack.c.0.s8 %v3271
        %v3273 = vlaneseq
        %v3274 = vshrl.u32 %v3273, 7
        %v3275 = vsub.s32 %v3272, %v3274
        %v3276 = vrot.slane %v3269, %v3275
        %v3277 = vcombine.low %v3159, %v3160
        %v3279 = vunpack.c.l.s4 1983009808
        %v3280 = vunpack.c.0.s8 %v3279
        %v3281 = vlaneseq
        %v3282 = vshrl.u32 %v3281, 7
        %v3283 = vsub.s32 %v3280, %v3282
        %v3284 = vrot.slane %v3277, %v3283
        %v3285 = vcombine.low %v3260, %v3268
        %v3286 = vcombine.high %v3260, %v3268
        %v3288 = vunpack.c.l.s4 1934713408
        %v3289 = vunpack.c.0.s8 %v3288
        %v3290 = vlaneseq
        %v3291 = vshrl.u32 %v3290, 7
        %v3292 = vsub.s32 %v3289, %v3291
        %v3293 = vrot.slane %v3285, %v3292
        %v3295 = vunpack.c.l.s4 1934713408
        %v3296 = vunpack.c.0.s8 %v3295
        %v3297 = vlaneseq
        %v3298 = vshrl.u32 %v3297, 7
        %v3299 = vsub.s32 %v3296, %v3298
        %v3300 = vrot.slane %v3286, %v3299
        %v3301 = vcombine.low %v3276, %v3284
        %v3302 = vcombine.high %v3276, %v3284
        %v3304 = vunpack.c.l.s4 1934713408
        %v3305 = vunpack.c.0.s8 %v3304
        %v3306 = vlaneseq
        %v3307 = vshrl.u32 %v3306, 7
        %v3308 = vsub.s32 %v3305, %v3307
        %v3309 = vrot.slane %v3301, %v3308
        %v3311 = vunpack.c.l.s4 1934713408
        %v3312 = vunpack.c.0.s8 %v3311
        %v3313 = vlaneseq
        %v3314 = vshrl.u32 %v3313, 7
        %v3315 = vsub.s32 %v3312, %v3314
        %v3316 = vrot.slane %v3302, %v3315
        %v3317 = vcombine.low %v3293, %v3309
        %v3318 = vcombine.high %v3293, %v3309
        %v3319 = vcombine.low %v3300, %v3316
        %v3320 = vcombine.high %v3300, %v3316
        %v3322 = vunpack.c.l.s4 1983009808
        %v3323 = vunpack.c.0.s8 %v3322
        %v3324 = vlaneseq
        %v3325 = vshrl.u32 %v3324, 7
        %v3326 = vsub.s32 %v3323, %v3325
        %v3327 = vrot.slane %v3201, %v3326
        %v3328 = vcombine.high %v3327, 0.0
        %v3330 = vunpack.c.l.s4 1934713408
        %v3331 = vunpack.c.0.s8 %v3330
        %v3332 = vlaneseq
        %v3333 = vshrl.u32 %v3332, 7
        %v3334 = vsub.s32 %v3331, %v3333
        %v3335 = vrot.slane %v3327, %v3334
        %v3337 = vunpack.c.l.s4 1934713408
        %v3338 = vunpack.c.0.s8 %v3337
        %v3339 = vlaneseq
        %v3340 = vshrl.u32 %v3339, 7
        %v3341 = vsub.s32 %v3338, %v3340
        %v3342 = vrot.slane %v3328, %v3341
        %v3343 = vcombine.high %v3335, 0.0
        %v3344 = vcombine.high %v3342, 0.0
        %v3345 = vcombine.low %v3225, %v3226
        %v3347 = vunpack.c.l.s4 1983009808
        %v3348 = vunpack.c.0.s8 %v3347
        %v3349 = vlaneseq
        %v3350 = vshrl.u32 %v3349, 7
        %v3351 = vsub.s32 %v3348, %v3350
        %v3352 = vrot.slane %v3345, %v3351
        %v3353 = vcombine.low %v3208, %v3217
        %v3355 = vunpack.c.l.s4 1983009808
        %v3356 = vunpack.c.0.s8 %v3355
        %v3357 = vlaneseq
        %v3358 = vshrl.u32 %v3357, 7
        %v3359 = vsub.s32 %v3356, %v3358
        %v3360 = vrot.slane %v3353, %v3359
        %v3361 = vcombine.low %v3227, %v3228
        %v3363 = vunpack.c.l.s4 1983009808
        %v3364 = vunpack.c.0.s8 %v3363
        %v3365 = vlaneseq
        %v3366 = vshrl.u32 %v3365, 7
        %v3367 = vsub.s32 %v3364, %v3366
        %v3368 = vrot.slane %v3361, %v3367
        %v3369 = vcombine.low %v3224, %v3252
        %v3371 = vunpack.c.l.s4 1983009808
        %v3372 = vunpack.c.0.s8 %v3371
        %v3373 = vlaneseq
        %v3374 = vshrl.u32 %v3373, 7
        %v3375 = vsub.s32 %v3372, %v3374
        %v3376 = vrot.slane %v3369, %v3375
        %v3377 = vcombine.low %v3352, %v3360
        %v3378 = vcombine.high %v3352, %v3360
        %v3380 = vunpack.c.l.s4 1934713408
        %v3381 = vunpack.c.0.s8 %v3380
        %v3382 = vlaneseq
        %v3383 = vshrl.u32 %v3382, 7
        %v3384 = vsub.s32 %v3381, %v3383
        %v3385 = vrot.slane %v3377, %v3384
        %v3387 = vunpack.c.l.s4 1934713408
        %v3388 = vunpack.c.0.s8 %v3387
        %v3389 = vlaneseq
        %v3390 = vshrl.u32 %v3389, 7
        %v3391 = vsub.s32 %v3388, %v3390
        %v3392 = vrot.slane %v3378, %v3391
        %v3393 = vcombine.low %v3368, %v3376
        %v3394 = vcombine.high %v3368, %v3376
        %v3396 = vunpack.c.l.s4 1934713408
        %v3397 = vunpack.c.0.s8 %v3396
        %v3398 = vlaneseq
        %v3399 = vshrl.u32 %v3398, 7
        %v3400 = vsub.s32 %v3397, %v3399
        %v3401 = vrot.slane %v3393, %v3400
        %v3403 = vunpack.c.l.s4 1934713408
        %v3404 = vunpack.c.0.s8 %v3403
        %v3405 = vlaneseq
        %v3406 = vshrl.u32 %v3405, 7
        %v3407 = vsub.s32 %v3404, %v3406
        %v3408 = vrot.slane %v3394, %v3407
        %v3409 = vcombine.low %v3385, %v3401
        %v3410 = vcombine.high %v3385, %v3401
        %v3411 = vcombine.low %v3392, %v3408
        %v3412 = vcombine.high %v3392, %v3408
        %v3413 = vcombine.high %v3252, 0.0
        %v3415 = vunpack.c.l.s4 1983009808
        %v3416 = vunpack.c.0.s8 %v3415
        %v3417 = vlaneseq
        %v3418 = vshrl.u32 %v3417, 7
        %v3419 = vsub.s32 %v3416, %v3418
        %v3420 = vrot.slane %v3413, %v3419
        %v3421 = vcombine.high %v3420, 0.0
        %v3423 = vunpack.c.l.s4 1934713408
        %v3424 = vunpack.c.0.s8 %v3423
        %v3425 = vlaneseq
        %v3426 = vshrl.u32 %v3425, 7
        %v3427 = vsub.s32 %v3424, %v3426
        %v3428 = vrot.slane %v3420, %v3427
        %v3430 = vunpack.c.l.s4 1934713408
        %v3431 = vunpack.c.0.s8 %v3430
        %v3432 = vlaneseq
        %v3433 = vshrl.u32 %v3432, 7
        %v3434 = vsub.s32 %v3431, %v3433
        %v3435 = vrot.slane %v3421, %v3434
        %v3436 = vcombine.high %v3428, 0.0
        %v3437 = vcombine.high %v3435, 0.0
        %3454 = vrot.lane.b32.xlu0 %v3317, 124
        %v3455 = vpop.permute.xlu0 %3454
        %3456 = vrot.lane.b32.xlu0 %v3335, 124
        %v3457 = vpop.permute.xlu0 %3456
        %3458 = vrot.lane.b32.xlu0 %v3318, 124
        %v3459 = vpop.permute.xlu0 %3458
        %3460 = vrot.lane.b32.xlu0 %v3343, 124
        %v3461 = vpop.permute.xlu0 %3460
        %3462 = vrot.lane.b32.xlu0 %v3319, 124
        %v3463 = vpop.permute.xlu0 %3462
        %3464 = vrot.lane.b32.xlu0 %v3342, 124
        %v3465 = vpop.permute.xlu0 %3464
        %3466 = vrot.lane.b32.xlu0 %v3320, 124
        %v3467 = vpop.permute.xlu0 %3466
        %3468 = vrot.lane.b32.xlu0 %v3344, 124
        %v3469 = vpop.permute.xlu0 %3468
        %3470 = vrot.lane.b32.xlu0 %v3409, 124
        %v3471 = vpop.permute.xlu0 %3470
        %3472 = vrot.lane.b32.xlu0 %v3428, 124
        %v3473 = vpop.permute.xlu0 %3472
        %3474 = vrot.lane.b32.xlu0 %v3410, 124
        %v3475 = vpop.permute.xlu0 %3474
        %3476 = vrot.lane.b32.xlu0 %v3436, 124
        %v3477 = vpop.permute.xlu0 %3476
        %3478 = vrot.lane.b32.xlu0 %v3411, 124
        %v3479 = vpop.permute.xlu0 %3478
        %3480 = vrot.lane.b32.xlu0 %v3435, 124
        %v3481 = vpop.permute.xlu0 %3480
        %3482 = vrot.lane.b32.xlu0 %v3412, 124
        %v3483 = vpop.permute.xlu0 %3482
        %3484 = vrot.lane.b32.xlu0 %v3437, 124
        %v3485 = vpop.permute.xlu0 %3484
        %3502 = vrot.lane.b32.xlu0 %v3317, 4
        %v3503 = vpop.permute.xlu0 %3502
        %3504 = vrot.lane.b32.xlu0 %v3335, 4
        %v3505 = vpop.permute.xlu0 %3504
        %3506 = vrot.lane.b32.xlu0 %v3318, 4
        %v3507 = vpop.permute.xlu0 %3506
        %3508 = vrot.lane.b32.xlu0 %v3343, 4
        %v3509 = vpop.permute.xlu0 %3508
        %3510 = vrot.lane.b32.xlu0 %v3319, 4
        %v3511 = vpop.permute.xlu0 %3510
        %3512 = vrot.lane.b32.xlu0 %v3342, 4
        %v3513 = vpop.permute.xlu0 %3512
        %3514 = vrot.lane.b32.xlu0 %v3320, 4
        %v3515 = vpop.permute.xlu0 %3514
        %3516 = vrot.lane.b32.xlu0 %v3344, 4
        %v3517 = vpop.permute.xlu0 %3516
        %3518 = vrot.lane.b32.xlu0 %v3409, 4
        %v3519 = vpop.permute.xlu0 %3518
        %3520 = vrot.lane.b32.xlu0 %v3428, 4
        %v3521 = vpop.permute.xlu0 %3520
        %3522 = vrot.lane.b32.xlu0 %v3410, 4
        %v3523 = vpop.permute.xlu0 %3522
        %3524 = vrot.lane.b32.xlu0 %v3436, 4
        %v3525 = vpop.permute.xlu0 %3524
        %3526 = vrot.lane.b32.xlu0 %v3411, 4
        %v3527 = vpop.permute.xlu0 %3526
        %3528 = vrot.lane.b32.xlu0 %v3435, 4
        %v3529 = vpop.permute.xlu0 %3528
        %3530 = vrot.lane.b32.xlu0 %v3412, 4
        %v3531 = vpop.permute.xlu0 %3530
        %3532 = vrot.lane.b32.xlu0 %v3437, 4
        %v3533 = vpop.permute.xlu0 %3532
        %v3550 = vsel %vm2998, %v3455, %v3503
        %v3551 = vsel %vm2998, %v3457, %v3505
        %v3552 = vsel %vm2998, %v3459, %v3507
        %v3553 = vsel %vm2998, %v3461, %v3509
        %v3554 = vsel %vm2998, %v3463, %v3511
        %v3555 = vsel %vm2998, %v3465, %v3513
        %v3556 = vsel %vm2998, %v3467, %v3515
        %v3557 = vsel %vm2998, %v3469, %v3517
        %v3558 = vsel %vm2998, %v3471, %v3519
        %v3559 = vsel %vm2998, %v3473, %v3521
        %v3560 = vsel %vm2998, %v3475, %v3523
        %v3561 = vsel %vm2998, %v3477, %v3525
        %v3562 = vsel %vm2998, %v3479, %v3527
        %v3563 = vsel %vm2998, %v3481, %v3529
        %v3564 = vsel %vm2998, %v3483, %v3531
        %v3565 = vsel %vm2998, %v3485, %v3533
        %v3566 = vmul.f32 %v3317, %v2509
        %v3567 = vmul.f32 %v3335, %v2510
        %v3568 = vmul.f32 %v3318, %v2509
        %v3569 = vmul.f32 %v3343, %v2510
        %v3570 = vmul.f32 %v3319, %v2509
        %v3571 = vmul.f32 %v3342, %v2510
        %v3572 = vmul.f32 %v3320, %v2509
        %v3573 = vmul.f32 %v3344, %v2510
        %v3574 = vmul.f32 %v3409, %v2509
        %v3575 = vmul.f32 %v3428, %v2510
        %v3576 = vmul.f32 %v3410, %v2509
        %v3577 = vmul.f32 %v3436, %v2510
        %v3578 = vmul.f32 %v3411, %v2509
        %v3579 = vmul.f32 %v3435, %v2510
        %v3580 = vmul.f32 %v3412, %v2509
        %v3581 = vmul.f32 %v3437, %v2510
        %v3582 = vmul.f32 %v3550, %v2507
        %v3583 = vmul.f32 %v3551, %v2508
        %v3584 = vmul.f32 %v3552, %v2507
        %v3585 = vmul.f32 %v3553, %v2508
        %v3586 = vmul.f32 %v3554, %v2507
        %v3587 = vmul.f32 %v3555, %v2508
        %v3588 = vmul.f32 %v3556, %v2507
        %v3589 = vmul.f32 %v3557, %v2508
        %v3590 = vmul.f32 %v3558, %v2507
        %v3591 = vmul.f32 %v3559, %v2508
        %v3592 = vmul.f32 %v3560, %v2507
        %v3593 = vmul.f32 %v3561, %v2508
        %v3594 = vmul.f32 %v3562, %v2507
        %v3595 = vmul.f32 %v3563, %v2508
        %v3596 = vmul.f32 %v3564, %v2507
        %v3597 = vmul.f32 %v3565, %v2508
        %v3598 = vadd.f32 %v3566, %v3582
        %v3599 = vadd.f32 %v3567, %v3583
        %v3600 = vadd.f32 %v3568, %v3584
        %v3601 = vadd.f32 %v3569, %v3585
        %v3602 = vadd.f32 %v3570, %v3586
        %v3603 = vadd.f32 %v3571, %v3587
        %v3604 = vadd.f32 %v3572, %v3588
        %v3605 = vadd.f32 %v3573, %v3589
        %v3606 = vadd.f32 %v3574, %v3590
        %v3607 = vadd.f32 %v3575, %v3591
        %v3608 = vadd.f32 %v3576, %v3592
        %v3609 = vadd.f32 %v3577, %v3593
        %v3610 = vadd.f32 %v3578, %v3594
        %v3611 = vadd.f32 %v3579, %v3595
        %v3612 = vadd.f32 %v3580, %v3596
        %v3613 = vadd.f32 %v3581, %v3597
        %3617 = vrot.lane.b32.xlu0 %v2494, 120
        %v3618 = vpop.permute.xlu0 %3617
        %3619 = vrot.lane.b32.xlu0 %v2499, 120
        %v3620 = vpop.permute.xlu0 %3619
        %3621 = vrot.lane.b32.xlu0 %v2504, 120
        %v3622 = vpop.permute.xlu0 %3621
        %3626 = vrot.lane.b32.xlu0 %v2494, 112
        %v3627 = vpop.permute.xlu0 %3626
        %3628 = vrot.lane.b32.xlu0 %v2499, 112
        %v3629 = vpop.permute.xlu0 %3628
        %3630 = vrot.lane.b32.xlu0 %v2504, 112
        %v3631 = vpop.permute.xlu0 %3630
        %3635 = vrot.lane.b32.xlu0 %v2494, 104
        %v3636 = vpop.permute.xlu0 %3635
        %3637 = vrot.lane.b32.xlu0 %v2499, 104
        %v3638 = vpop.permute.xlu0 %3637
        %3639 = vrot.lane.b32.xlu0 %v2504, 104
        %v3640 = vpop.permute.xlu0 %3639
        %v3644 = vcombine.low %v2494, %v3627
        %v3645 = vcombine.high %v2494, %v3627
        %v3647 = vunpack.c.l.s4 1983009808
        %v3648 = vunpack.c.0.s8 %v3647
        %v3649 = vlaneseq
        %v3650 = vshrl.u32 %v3649, 7
        %v3651 = vsub.s32 %v3648, %v3650
        %v3652 = vrot.slane %v3644, %v3651
        %v3654 = vunpack.c.l.s4 1983009808
        %v3655 = vunpack.c.0.s8 %v3654
        %v3656 = vlaneseq
        %v3657 = vshrl.u32 %v3656, 7
        %v3658 = vsub.s32 %v3655, %v3657
        %v3659 = vrot.slane %v3645, %v3658
        %v3660 = vcombine.low %v3618, %v3636
        %v3661 = vcombine.high %v3618, %v3636
        %v3663 = vunpack.c.l.s4 1983009808
        %v3664 = vunpack.c.0.s8 %v3663
        %v3665 = vlaneseq
        %v3666 = vshrl.u32 %v3665, 7
        %v3667 = vsub.s32 %v3664, %v3666
        %v3668 = vrot.slane %v3660, %v3667
        %v3670 = vunpack.c.l.s4 1983009808
        %v3671 = vunpack.c.0.s8 %v3670
        %v3672 = vlaneseq
        %v3673 = vshrl.u32 %v3672, 7
        %v3674 = vsub.s32 %v3671, %v3673
        %v3675 = vrot.slane %v3661, %v3674
        %v3676 = vcombine.low %v3652, %v3668
        %v3677 = vcombine.high %v3652, %v3668
        %v3679 = vunpack.c.l.s4 1934713408
        %v3680 = vunpack.c.0.s8 %v3679
        %v3681 = vlaneseq
        %v3682 = vshrl.u32 %v3681, 7
        %v3683 = vsub.s32 %v3680, %v3682
        %v3684 = vrot.slane %v3676, %v3683
        %v3686 = vunpack.c.l.s4 1934713408
        %v3687 = vunpack.c.0.s8 %v3686
        %v3688 = vlaneseq
        %v3689 = vshrl.u32 %v3688, 7
        %v3690 = vsub.s32 %v3687, %v3689
        %v3691 = vrot.slane %v3677, %v3690
        %v3692 = vcombine.low %v3659, %v3675
        %v3693 = vcombine.high %v3659, %v3675
        %v3695 = vunpack.c.l.s4 1934713408
        %v3696 = vunpack.c.0.s8 %v3695
        %v3697 = vlaneseq
        %v3698 = vshrl.u32 %v3697, 7
        %v3699 = vsub.s32 %v3696, %v3698
        %v3700 = vrot.slane %v3692, %v3699
        %v3702 = vunpack.c.l.s4 1934713408
        %v3703 = vunpack.c.0.s8 %v3702
        %v3704 = vlaneseq
        %v3705 = vshrl.u32 %v3704, 7
        %v3706 = vsub.s32 %v3703, %v3705
        %v3707 = vrot.slane %v3693, %v3706
        %v3708 = vcombine.high %v3684, 0.0
        %v3709 = vcombine.high %v3691, 0.0
        %v3710 = vcombine.high %v3700, 0.0
        %v3711 = vcombine.high %v3707, 0.0
        %v3712 = vcombine.low %v2499, %v3629
        %v3713 = vcombine.high %v2499, %v3629
        %v3715 = vunpack.c.l.s4 1983009808
        %v3716 = vunpack.c.0.s8 %v3715
        %v3717 = vlaneseq
        %v3718 = vshrl.u32 %v3717, 7
        %v3719 = vsub.s32 %v3716, %v3718
        %v3720 = vrot.slane %v3712, %v3719
        %v3722 = vunpack.c.l.s4 1983009808
        %v3723 = vunpack.c.0.s8 %v3722
        %v3724 = vlaneseq
        %v3725 = vshrl.u32 %v3724, 7
        %v3726 = vsub.s32 %v3723, %v3725
        %v3727 = vrot.slane %v3713, %v3726
        %v3728 = vcombine.low %v3620, %v3638
        %v3729 = vcombine.high %v3620, %v3638
        %v3731 = vunpack.c.l.s4 1983009808
        %v3732 = vunpack.c.0.s8 %v3731
        %v3733 = vlaneseq
        %v3734 = vshrl.u32 %v3733, 7
        %v3735 = vsub.s32 %v3732, %v3734
        %v3736 = vrot.slane %v3728, %v3735
        %v3738 = vunpack.c.l.s4 1983009808
        %v3739 = vunpack.c.0.s8 %v3738
        %v3740 = vlaneseq
        %v3741 = vshrl.u32 %v3740, 7
        %v3742 = vsub.s32 %v3739, %v3741
        %v3743 = vrot.slane %v3729, %v3742
        %v3744 = vcombine.low %v3720, %v3736
        %v3745 = vcombine.high %v3720, %v3736
        %v3747 = vunpack.c.l.s4 1934713408
        %v3748 = vunpack.c.0.s8 %v3747
        %v3749 = vlaneseq
        %v3750 = vshrl.u32 %v3749, 7
        %v3751 = vsub.s32 %v3748, %v3750
        %v3752 = vrot.slane %v3744, %v3751
        %v3754 = vunpack.c.l.s4 1934713408
        %v3755 = vunpack.c.0.s8 %v3754
        %v3756 = vlaneseq
        %v3757 = vshrl.u32 %v3756, 7
        %v3758 = vsub.s32 %v3755, %v3757
        %v3759 = vrot.slane %v3745, %v3758
        %v3760 = vcombine.low %v3727, %v3743
        %v3761 = vcombine.high %v3727, %v3743
        %v3763 = vunpack.c.l.s4 1934713408
        %v3764 = vunpack.c.0.s8 %v3763
        %v3765 = vlaneseq
        %v3766 = vshrl.u32 %v3765, 7
        %v3767 = vsub.s32 %v3764, %v3766
        %v3768 = vrot.slane %v3760, %v3767
        %v3770 = vunpack.c.l.s4 1934713408
        %v3771 = vunpack.c.0.s8 %v3770
        %v3772 = vlaneseq
        %v3773 = vshrl.u32 %v3772, 7
        %v3774 = vsub.s32 %v3771, %v3773
        %v3775 = vrot.slane %v3761, %v3774
        %v3776 = vcombine.high %v3752, 0.0
        %v3777 = vcombine.high %v3759, 0.0
        %v3778 = vcombine.high %v3768, 0.0
        %v3779 = vcombine.high %v3775, 0.0
        %v3780 = vcombine.low %v2504, %v3631
        %v3782 = vunpack.c.l.s4 1983009808
        %v3783 = vunpack.c.0.s8 %v3782
        %v3784 = vlaneseq
        %v3785 = vshrl.u32 %v3784, 7
        %v3786 = vsub.s32 %v3783, %v3785
        %v3787 = vrot.slane %v3780, %v3786
        %v3788 = vcombine.low %v3622, %v3640
        %v3790 = vunpack.c.l.s4 1983009808
        %v3791 = vunpack.c.0.s8 %v3790
        %v3792 = vlaneseq
        %v3793 = vshrl.u32 %v3792, 7
        %v3794 = vsub.s32 %v3791, %v3793
        %v3795 = vrot.slane %v3788, %v3794
        %v3796 = vcombine.low %v3787, %v3795
        %v3798 = vunpack.c.l.s4 1934713408
        %v3799 = vunpack.c.0.s8 %v3798
        %v3800 = vlaneseq
        %v3801 = vshrl.u32 %v3800, 7
        %v3802 = vsub.s32 %v3799, %v3801
        %v3803 = vrot.slane %v3796, %v3802
        %v3804 = vcombine.low %v3684, %v3691
        %v3806 = vunpack.c.l.s4 1983009808
        %v3807 = vunpack.c.0.s8 %v3806
        %v3808 = vlaneseq
        %v3809 = vshrl.u32 %v3808, 7
        %v3810 = vsub.s32 %v3807, %v3809
        %v3811 = vrot.slane %v3804, %v3810
        %v3812 = vcombine.low %v3708, %v3709
        %v3814 = vunpack.c.l.s4 1983009808
        %v3815 = vunpack.c.0.s8 %v3814
        %v3816 = vlaneseq
        %v3817 = vshrl.u32 %v3816, 7
        %v3818 = vsub.s32 %v3815, %v3817
        %v3819 = vrot.slane %v3812, %v3818
        %v3820 = vcombine.low %v3700, %v3707
        %v3822 = vunpack.c.l.s4 1983009808
        %v3823 = vunpack.c.0.s8 %v3822
        %v3824 = vlaneseq
        %v3825 = vshrl.u32 %v3824, 7
        %v3826 = vsub.s32 %v3823, %v3825
        %v3827 = vrot.slane %v3820, %v3826
        %v3828 = vcombine.low %v3710, %v3711
        %v3830 = vunpack.c.l.s4 1983009808
        %v3831 = vunpack.c.0.s8 %v3830
        %v3832 = vlaneseq
        %v3833 = vshrl.u32 %v3832, 7
        %v3834 = vsub.s32 %v3831, %v3833
        %v3835 = vrot.slane %v3828, %v3834
        %v3836 = vcombine.low %v3811, %v3819
        %v3837 = vcombine.high %v3811, %v3819
        %v3839 = vunpack.c.l.s4 1934713408
        %v3840 = vunpack.c.0.s8 %v3839
        %v3841 = vlaneseq
        %v3842 = vshrl.u32 %v3841, 7
        %v3843 = vsub.s32 %v3840, %v3842
        %v3844 = vrot.slane %v3836, %v3843
        %v3846 = vunpack.c.l.s4 1934713408
        %v3847 = vunpack.c.0.s8 %v3846
        %v3848 = vlaneseq
        %v3849 = vshrl.u32 %v3848, 7
        %v3850 = vsub.s32 %v3847, %v3849
        %v3851 = vrot.slane %v3837, %v3850
        %v3852 = vcombine.low %v3827, %v3835
        %v3853 = vcombine.high %v3827, %v3835
        %v3855 = vunpack.c.l.s4 1934713408
        %v3856 = vunpack.c.0.s8 %v3855
        %v3857 = vlaneseq
        %v3858 = vshrl.u32 %v3857, 7
        %v3859 = vsub.s32 %v3856, %v3858
        %v3860 = vrot.slane %v3852, %v3859
        %v3862 = vunpack.c.l.s4 1934713408
        %v3863 = vunpack.c.0.s8 %v3862
        %v3864 = vlaneseq
        %v3865 = vshrl.u32 %v3864, 7
        %v3866 = vsub.s32 %v3863, %v3865
        %v3867 = vrot.slane %v3853, %v3866
        %v3868 = vcombine.low %v3844, %v3860
        %v3869 = vcombine.high %v3844, %v3860
        %v3870 = vcombine.low %v3851, %v3867
        %v3871 = vcombine.high %v3851, %v3867
        %v3873 = vunpack.c.l.s4 1983009808
        %v3874 = vunpack.c.0.s8 %v3873
        %v3875 = vlaneseq
        %v3876 = vshrl.u32 %v3875, 7
        %v3877 = vsub.s32 %v3874, %v3876
        %v3878 = vrot.slane %v3752, %v3877
        %v3879 = vcombine.high %v3878, 0.0
        %v3881 = vunpack.c.l.s4 1934713408
        %v3882 = vunpack.c.0.s8 %v3881
        %v3883 = vlaneseq
        %v3884 = vshrl.u32 %v3883, 7
        %v3885 = vsub.s32 %v3882, %v3884
        %v3886 = vrot.slane %v3878, %v3885
        %v3888 = vunpack.c.l.s4 1934713408
        %v3889 = vunpack.c.0.s8 %v3888
        %v3890 = vlaneseq
        %v3891 = vshrl.u32 %v3890, 7
        %v3892 = vsub.s32 %v3889, %v3891
        %v3893 = vrot.slane %v3879, %v3892
        %v3894 = vcombine.high %v3886, 0.0
        %v3895 = vcombine.high %v3893, 0.0
        %v3896 = vcombine.low %v3776, %v3777
        %v3898 = vunpack.c.l.s4 1983009808
        %v3899 = vunpack.c.0.s8 %v3898
        %v3900 = vlaneseq
        %v3901 = vshrl.u32 %v3900, 7
        %v3902 = vsub.s32 %v3899, %v3901
        %v3903 = vrot.slane %v3896, %v3902
        %v3904 = vcombine.low %v3759, %v3768
        %v3906 = vunpack.c.l.s4 1983009808
        %v3907 = vunpack.c.0.s8 %v3906
        %v3908 = vlaneseq
        %v3909 = vshrl.u32 %v3908, 7
        %v3910 = vsub.s32 %v3907, %v3909
        %v3911 = vrot.slane %v3904, %v3910
        %v3912 = vcombine.low %v3778, %v3779
        %v3914 = vunpack.c.l.s4 1983009808
        %v3915 = vunpack.c.0.s8 %v3914
        %v3916 = vlaneseq
        %v3917 = vshrl.u32 %v3916, 7
        %v3918 = vsub.s32 %v3915, %v3917
        %v3919 = vrot.slane %v3912, %v3918
        %v3920 = vcombine.low %v3775, %v3803
        %v3922 = vunpack.c.l.s4 1983009808
        %v3923 = vunpack.c.0.s8 %v3922
        %v3924 = vlaneseq
        %v3925 = vshrl.u32 %v3924, 7
        %v3926 = vsub.s32 %v3923, %v3925
        %v3927 = vrot.slane %v3920, %v3926
        %v3928 = vcombine.low %v3903, %v3911
        %v3929 = vcombine.high %v3903, %v3911
        %v3931 = vunpack.c.l.s4 1934713408
        %v3932 = vunpack.c.0.s8 %v3931
        %v3933 = vlaneseq
        %v3934 = vshrl.u32 %v3933, 7
        %v3935 = vsub.s32 %v3932, %v3934
        %v3936 = vrot.slane %v3928, %v3935
        %v3938 = vunpack.c.l.s4 1934713408
        %v3939 = vunpack.c.0.s8 %v3938
        %v3940 = vlaneseq
        %v3941 = vshrl.u32 %v3940, 7
        %v3942 = vsub.s32 %v3939, %v3941
        %v3943 = vrot.slane %v3929, %v3942
        %v3944 = vcombine.low %v3919, %v3927
        %v3945 = vcombine.high %v3919, %v3927
        %v3947 = vunpack.c.l.s4 1934713408
        %v3948 = vunpack.c.0.s8 %v3947
        %v3949 = vlaneseq
        %v3950 = vshrl.u32 %v3949, 7
        %v3951 = vsub.s32 %v3948, %v3950
        %v3952 = vrot.slane %v3944, %v3951
        %v3954 = vunpack.c.l.s4 1934713408
        %v3955 = vunpack.c.0.s8 %v3954
        %v3956 = vlaneseq
        %v3957 = vshrl.u32 %v3956, 7
        %v3958 = vsub.s32 %v3955, %v3957
        %v3959 = vrot.slane %v3945, %v3958
        %v3960 = vcombine.low %v3936, %v3952
        %v3961 = vcombine.high %v3936, %v3952
        %v3962 = vcombine.low %v3943, %v3959
        %v3963 = vcombine.high %v3943, %v3959
        %v3964 = vcombine.high %v3803, 0.0
        %v3966 = vunpack.c.l.s4 1983009808
        %v3967 = vunpack.c.0.s8 %v3966
        %v3968 = vlaneseq
        %v3969 = vshrl.u32 %v3968, 7
        %v3970 = vsub.s32 %v3967, %v3969
        %v3971 = vrot.slane %v3964, %v3970
        %v3972 = vcombine.high %v3971, 0.0
        %v3974 = vunpack.c.l.s4 1934713408
        %v3975 = vunpack.c.0.s8 %v3974
        %v3976 = vlaneseq
        %v3977 = vshrl.u32 %v3976, 7
        %v3978 = vsub.s32 %v3975, %v3977
        %v3979 = vrot.slane %v3971, %v3978
        %v3981 = vunpack.c.l.s4 1934713408
        %v3982 = vunpack.c.0.s8 %v3981
        %v3983 = vlaneseq
        %v3984 = vshrl.u32 %v3983, 7
        %v3985 = vsub.s32 %v3982, %v3984
        %v3986 = vrot.slane %v3972, %v3985
        %v3987 = vcombine.high %v3979, 0.0
        %v3988 = vcombine.high %v3986, 0.0
        %vm3989 = vcmask 64512
        %v3991 = vsel %vm3989, %v3047, 0
        %v3994 = vsel %vm3989, %v3048, 0
        %v3997 = vsel %vm3989, %v3598, 0
        %v4000 = vsel %vm3989, %v3599, 0
        %4002 = vmatprep.subr.mxu0 0.0
        %4003 = vmatpush1.xpose.msra.mxu0 0.0
        %4004 = vmatprep.subr.mxu0 0.0
        %4005 = vmatpush1.xpose.msra.mxu0 0.0
        %4006 = vmatprep.subr.mxu0 0.0
        %4007 = vmatpush1.xpose.msra.mxu0 0.0
        %4008 = vmatprep.subr.mxu0 0.0
        %4009 = vmatpush1.xpose.msra.mxu0 0.0
        %4010 = vmatprep.subr.mxu0 0.0
        %4011 = vmatpush1.xpose.msra.mxu0 0.0
        %4012 = vmatprep.subr.mxu0 0.0
        %4013 = vmatpush1.xpose.msra.mxu0 0.0
        %4014 = vmatprep.subr.mxu0 0.0
        %4015 = vmatpush1.xpose.msra.mxu0 0.0
        %4016 = vmatprep.subr.mxu0 0.0
        %4017 = vmatpush1.xpose.msra.mxu0 0.0
        %4018 = vmatprep.subr.mxu0 0.0
        %4019 = vmatpush1.xpose.msra.mxu0 0.0
        %4020 = vmatprep.subr.mxu0 0.0
        %4021 = vmatpush1.xpose.msra.mxu0 0.0
        %4022 = vmatprep.subr.mxu0 0.0
        %4023 = vmatpush1.xpose.msra.mxu0 0.0
        %4024 = vmatprep.subr.mxu0 0.0
        %4025 = vmatpush1.xpose.msra.mxu0 0.0
        %4026 = vmatprep.subr.mxu0 0.0
        %4027 = vmatpush1.xpose.msra.mxu0 0.0
        %4028 = vmatprep.subr.mxu0 0.0
        %4029 = vmatpush1.xpose.msra.mxu0 0.0
        %4030 = vmatprep.subr.mxu0 0.0
        %4031 = vmatpush1.xpose.msra.mxu0 %v4000
        %4032 = vmatprep.subr.mxu0 0.0
        %4033 = vmatpush1.xpose.msra.mxu0 %v3997
        %4034 = vmatprep.subr.mxu0 0.0
        %4035 = vmatpush2.xpose.msra.mxu0 0.0
        %4036 = vmatprep.subr.mxu0 0.0
        %4037 = vmatpush2.xpose.msra.mxu0 0.0
        %4038 = vmatprep.subr.mxu0 0.0
        %4039 = vmatpush2.xpose.msra.mxu0 0.0
        %4040 = vmatprep.subr.mxu0 0.0
        %4041 = vmatpush2.xpose.msra.mxu0 0.0
        %4042 = vmatprep.subr.mxu0 0.0
        %4043 = vmatpush2.xpose.msra.mxu0 0.0
        %4044 = vmatprep.subr.mxu0 0.0
        %4045 = vmatpush2.xpose.msra.mxu0 0.0
        %4046 = vmatprep.subr.mxu0 0.0
        %4047 = vmatpush2.xpose.msra.mxu0 0.0
        %4048 = vmatprep.subr.mxu0 0.0
        %4049 = vmatpush2.xpose.msra.mxu0 0.0
        %4050 = vmatprep.subr.mxu0 0.0
        %4051 = vmatpush2.xpose.msra.mxu0 0.0
        %4052 = vmatprep.subr.mxu0 0.0
        %4053 = vmatpush2.xpose.msra.mxu0 0.0
        %4054 = vmatprep.subr.mxu0 0.0
        %4055 = vmatpush2.xpose.msra.mxu0 0.0
        %4056 = vmatprep.subr.mxu0 0.0
        %4057 = vmatpush2.xpose.msra.mxu0 0.0
        %4058 = vmatprep.subr.mxu0 0.0
        %4059 = vmatpush2.xpose.msra.mxu0 0.0
        %4060 = vmatprep.subr.mxu0 0.0
        %4061 = vmatpush2.xpose.msra.mxu0 0.0
        %4062 = vmatprep.subr.mxu0 0.0
        %4063 = vmatpush2.xpose.msra.mxu0 0.0
        %4064 = vmatprep.subr.mxu0 0.0
        %4065 = vmatpush2.xpose.msra.mxu0 0.0
        %4066 = vmatprep.mubr.f32.mxu0 0.0
        %4067 = vmatmul.mubr.f32.gmra.mxu0 %v3991
        %v4068 = vpop.f32.mrf.mxu0
        %v4069 = vadd.f32 0.0, %v4068
        %v4070 = vpop.f32.mrf.mxu0
        %4071 = vmatprep.mubr.f32.mxu0 0.0
        %4072 = vmatmul.mubr.f32.gmra.mxu0 %v3994
        %v4073 = vpop.f32.mrf.mxu0
        %v4074 = vadd.f32 0.0, %v4073
        %v4075 = vpop.f32.mrf.mxu0
        %4076 = vdwg.mxu0
        %v4078 = vsel %vm3989, %v3049, 0
        %v4081 = vsel %vm3989, %v3050, 0
        %v4084 = vsel %vm3989, %v3600, 0
        %v4087 = vsel %vm3989, %v3601, 0
        %4089 = vmatprep.subr.mxu0 0.0
        %4090 = vmatpush1.xpose.msra.mxu0 0.0
        %4091 = vmatprep.subr.mxu0 0.0
        %4092 = vmatpush1.xpose.msra.mxu0 0.0
        %4093 = vmatprep.subr.mxu0 0.0
        %4094 = vmatpush1.xpose.msra.mxu0 0.0
        %4095 = vmatprep.subr.mxu0 0.0
        %4096 = vmatpush1.xpose.msra.mxu0 0.0
        %4097 = vmatprep.subr.mxu0 0.0
        %4098 = vmatpush1.xpose.msra.mxu0 0.0
        %4099 = vmatprep.subr.mxu0 0.0
        %4100 = vmatpush1.xpose.msra.mxu0 0.0
        %4101 = vmatprep.subr.mxu0 0.0
        %4102 = vmatpush1.xpose.msra.mxu0 0.0
        %4103 = vmatprep.subr.mxu0 0.0
        %4104 = vmatpush1.xpose.msra.mxu0 0.0
        %4105 = vmatprep.subr.mxu0 0.0
        %4106 = vmatpush1.xpose.msra.mxu0 0.0
        %4107 = vmatprep.subr.mxu0 0.0
        %4108 = vmatpush1.xpose.msra.mxu0 0.0
        %4109 = vmatprep.subr.mxu0 0.0
        %4110 = vmatpush1.xpose.msra.mxu0 0.0
        %4111 = vmatprep.subr.mxu0 0.0
        %4112 = vmatpush1.xpose.msra.mxu0 0.0
        %4113 = vmatprep.subr.mxu0 0.0
        %4114 = vmatpush1.xpose.msra.mxu0 0.0
        %4115 = vmatprep.subr.mxu0 0.0
        %4116 = vmatpush1.xpose.msra.mxu0 0.0
        %4117 = vmatprep.subr.mxu0 0.0
        %4118 = vmatpush1.xpose.msra.mxu0 %v4087
        %4119 = vmatprep.subr.mxu0 0.0
        %4120 = vmatpush1.xpose.msra.mxu0 %v4084
        %4121 = vmatprep.subr.mxu0 0.0
        %4122 = vmatpush2.xpose.msra.mxu0 0.0
        %4123 = vmatprep.subr.mxu0 0.0
        %4124 = vmatpush2.xpose.msra.mxu0 0.0
        %4125 = vmatprep.subr.mxu0 0.0
        %4126 = vmatpush2.xpose.msra.mxu0 0.0
        %4127 = vmatprep.subr.mxu0 0.0
        %4128 = vmatpush2.xpose.msra.mxu0 0.0
        %4129 = vmatprep.subr.mxu0 0.0
        %4130 = vmatpush2.xpose.msra.mxu0 0.0
        %4131 = vmatprep.subr.mxu0 0.0
        %4132 = vmatpush2.xpose.msra.mxu0 0.0
        %4133 = vmatprep.subr.mxu0 0.0
        %4134 = vmatpush2.xpose.msra.mxu0 0.0
        %4135 = vmatprep.subr.mxu0 0.0
        %4136 = vmatpush2.xpose.msra.mxu0 0.0
        %4137 = vmatprep.subr.mxu0 0.0
        %4138 = vmatpush2.xpose.msra.mxu0 0.0
        %4139 = vmatprep.subr.mxu0 0.0
        %4140 = vmatpush2.xpose.msra.mxu0 0.0
        %4141 = vmatprep.subr.mxu0 0.0
        %4142 = vmatpush2.xpose.msra.mxu0 0.0
        %4143 = vmatprep.subr.mxu0 0.0
        %4144 = vmatpush2.xpose.msra.mxu0 0.0
        %4145 = vmatprep.subr.mxu0 0.0
        %4146 = vmatpush2.xpose.msra.mxu0 0.0
        %4147 = vmatprep.subr.mxu0 0.0
        %4148 = vmatpush2.xpose.msra.mxu0 0.0
        %4149 = vmatprep.subr.mxu0 0.0
        %4150 = vmatpush2.xpose.msra.mxu0 0.0
        %4151 = vmatprep.subr.mxu0 0.0
        %4152 = vmatpush2.xpose.msra.mxu0 0.0
        %4153 = vmatprep.mubr.f32.mxu0 0.0
        %4154 = vmatmul.mubr.f32.gmra.mxu0 %v4078
        %v4155 = vpop.f32.mrf.mxu0
        %v4156 = vadd.f32 0.0, %v4155
        %v4157 = vpop.f32.mrf.mxu0
        %4158 = vmatprep.mubr.f32.mxu0 0.0
        %4159 = vmatmul.mubr.f32.gmra.mxu0 %v4081
        %v4160 = vpop.f32.mrf.mxu0
        %v4161 = vadd.f32 0.0, %v4160
        %v4162 = vpop.f32.mrf.mxu0
        %4163 = vdwg.mxu0
        %v4165 = vsel %vm3989, %v3051, 0
        %v4168 = vsel %vm3989, %v3052, 0
        %v4171 = vsel %vm3989, %v3602, 0
        %v4174 = vsel %vm3989, %v3603, 0
        %4176 = vmatprep.subr.mxu0 0.0
        %4177 = vmatpush1.xpose.msra.mxu0 0.0
        %4178 = vmatprep.subr.mxu0 0.0
        %4179 = vmatpush1.xpose.msra.mxu0 0.0
        %4180 = vmatprep.subr.mxu0 0.0
        %4181 = vmatpush1.xpose.msra.mxu0 0.0
        %4182 = vmatprep.subr.mxu0 0.0
        %4183 = vmatpush1.xpose.msra.mxu0 0.0
        %4184 = vmatprep.subr.mxu0 0.0
        %4185 = vmatpush1.xpose.msra.mxu0 0.0
        %4186 = vmatprep.subr.mxu0 0.0
        %4187 = vmatpush1.xpose.msra.mxu0 0.0
        %4188 = vmatprep.subr.mxu0 0.0
        %4189 = vmatpush1.xpose.msra.mxu0 0.0
        %4190 = vmatprep.subr.mxu0 0.0
        %4191 = vmatpush1.xpose.msra.mxu0 0.0
        %4192 = vmatprep.subr.mxu0 0.0
        %4193 = vmatpush1.xpose.msra.mxu0 0.0
        %4194 = vmatprep.subr.mxu0 0.0
        %4195 = vmatpush1.xpose.msra.mxu0 0.0
        %4196 = vmatprep.subr.mxu0 0.0
        %4197 = vmatpush1.xpose.msra.mxu0 0.0
        %4198 = vmatprep.subr.mxu0 0.0
        %4199 = vmatpush1.xpose.msra.mxu0 0.0
        %4200 = vmatprep.subr.mxu0 0.0
        %4201 = vmatpush1.xpose.msra.mxu0 0.0
        %4202 = vmatprep.subr.mxu0 0.0
        %4203 = vmatpush1.xpose.msra.mxu0 0.0
        %4204 = vmatprep.subr.mxu0 0.0
        %4205 = vmatpush1.xpose.msra.mxu0 %v4174
        %4206 = vmatprep.subr.mxu0 0.0
        %4207 = vmatpush1.xpose.msra.mxu0 %v4171
        %4208 = vmatprep.subr.mxu0 0.0
        %4209 = vmatpush2.xpose.msra.mxu0 0.0
        %4210 = vmatprep.subr.mxu0 0.0
        %4211 = vmatpush2.xpose.msra.mxu0 0.0
        %4212 = vmatprep.subr.mxu0 0.0
        %4213 = vmatpush2.xpose.msra.mxu0 0.0
        %4214 = vmatprep.subr.mxu0 0.0
        %4215 = vmatpush2.xpose.msra.mxu0 0.0
        %4216 = vmatprep.subr.mxu0 0.0
        %4217 = vmatpush2.xpose.msra.mxu0 0.0
        %4218 = vmatprep.subr.mxu0 0.0
        %4219 = vmatpush2.xpose.msra.mxu0 0.0
        %4220 = vmatprep.subr.mxu0 0.0
        %4221 = vmatpush2.xpose.msra.mxu0 0.0
        %4222 = vmatprep.subr.mxu0 0.0
        %4223 = vmatpush2.xpose.msra.mxu0 0.0
        %4224 = vmatprep.subr.mxu0 0.0
        %4225 = vmatpush2.xpose.msra.mxu0 0.0
        %4226 = vmatprep.subr.mxu0 0.0
        %4227 = vmatpush2.xpose.msra.mxu0 0.0
        %4228 = vmatprep.subr.mxu0 0.0
        %4229 = vmatpush2.xpose.msra.mxu0 0.0
        %4230 = vmatprep.subr.mxu0 0.0
        %4231 = vmatpush2.xpose.msra.mxu0 0.0
        %4232 = vmatprep.subr.mxu0 0.0
        %4233 = vmatpush2.xpose.msra.mxu0 0.0
        %4234 = vmatprep.subr.mxu0 0.0
        %4235 = vmatpush2.xpose.msra.mxu0 0.0
        %4236 = vmatprep.subr.mxu0 0.0
        %4237 = vmatpush2.xpose.msra.mxu0 0.0
        %4238 = vmatprep.subr.mxu0 0.0
        %4239 = vmatpush2.xpose.msra.mxu0 0.0
        %4240 = vmatprep.mubr.f32.mxu0 0.0
        %4241 = vmatmul.mubr.f32.gmra.mxu0 %v4165
        %v4242 = vpop.f32.mrf.mxu0
        %v4243 = vadd.f32 0.0, %v4242
        %v4244 = vpop.f32.mrf.mxu0
        %4245 = vmatprep.mubr.f32.mxu0 0.0
        %4246 = vmatmul.mubr.f32.gmra.mxu0 %v4168
        %v4247 = vpop.f32.mrf.mxu0
        %v4248 = vadd.f32 0.0, %v4247
        %v4249 = vpop.f32.mrf.mxu0
        %4250 = vdwg.mxu0
        %v4252 = vsel %vm3989, %v3053, 0
        %v4255 = vsel %vm3989, %v3054, 0
        %v4258 = vsel %vm3989, %v3604, 0
        %v4261 = vsel %vm3989, %v3605, 0
        %4263 = vmatprep.subr.mxu0 0.0
        %4264 = vmatpush1.xpose.msra.mxu0 0.0
        %4265 = vmatprep.subr.mxu0 0.0
        %4266 = vmatpush1.xpose.msra.mxu0 0.0
        %4267 = vmatprep.subr.mxu0 0.0
        %4268 = vmatpush1.xpose.msra.mxu0 0.0
        %4269 = vmatprep.subr.mxu0 0.0
        %4270 = vmatpush1.xpose.msra.mxu0 0.0
        %4271 = vmatprep.subr.mxu0 0.0
        %4272 = vmatpush1.xpose.msra.mxu0 0.0
        %4273 = vmatprep.subr.mxu0 0.0
        %4274 = vmatpush1.xpose.msra.mxu0 0.0
        %4275 = vmatprep.subr.mxu0 0.0
        %4276 = vmatpush1.xpose.msra.mxu0 0.0
        %4277 = vmatprep.subr.mxu0 0.0
        %4278 = vmatpush1.xpose.msra.mxu0 0.0
        %4279 = vmatprep.subr.mxu0 0.0
        %4280 = vmatpush1.xpose.msra.mxu0 0.0
        %4281 = vmatprep.subr.mxu0 0.0
        %4282 = vmatpush1.xpose.msra.mxu0 0.0
        %4283 = vmatprep.subr.mxu0 0.0
        %4284 = vmatpush1.xpose.msra.mxu0 0.0
        %4285 = vmatprep.subr.mxu0 0.0
        %4286 = vmatpush1.xpose.msra.mxu0 0.0
        %4287 = vmatprep.subr.mxu0 0.0
        %4288 = vmatpush1.xpose.msra.mxu0 0.0
        %4289 = vmatprep.subr.mxu0 0.0
        %4290 = vmatpush1.xpose.msra.mxu0 0.0
        %4291 = vmatprep.subr.mxu0 0.0
        %4292 = vmatpush1.xpose.msra.mxu0 %v4261
        %4293 = vmatprep.subr.mxu0 0.0
        %4294 = vmatpush1.xpose.msra.mxu0 %v4258
        %4295 = vmatprep.subr.mxu0 0.0
        %4296 = vmatpush2.xpose.msra.mxu0 0.0
        %4297 = vmatprep.subr.mxu0 0.0
        %4298 = vmatpush2.xpose.msra.mxu0 0.0
        %4299 = vmatprep.subr.mxu0 0.0
        %4300 = vmatpush2.xpose.msra.mxu0 0.0
        %4301 = vmatprep.subr.mxu0 0.0
        %4302 = vmatpush2.xpose.msra.mxu0 0.0
        %4303 = vmatprep.subr.mxu0 0.0
        %4304 = vmatpush2.xpose.msra.mxu0 0.0
        %4305 = vmatprep.subr.mxu0 0.0
        %4306 = vmatpush2.xpose.msra.mxu0 0.0
        %4307 = vmatprep.subr.mxu0 0.0
        %4308 = vmatpush2.xpose.msra.mxu0 0.0
        %4309 = vmatprep.subr.mxu0 0.0
        %4310 = vmatpush2.xpose.msra.mxu0 0.0
        %4311 = vmatprep.subr.mxu0 0.0
        %4312 = vmatpush2.xpose.msra.mxu0 0.0
        %4313 = vmatprep.subr.mxu0 0.0
        %4314 = vmatpush2.xpose.msra.mxu0 0.0
        %4315 = vmatprep.subr.mxu0 0.0
        %4316 = vmatpush2.xpose.msra.mxu0 0.0
        %4317 = vmatprep.subr.mxu0 0.0
        %4318 = vmatpush2.xpose.msra.mxu0 0.0
        %4319 = vmatprep.subr.mxu0 0.0
        %4320 = vmatpush2.xpose.msra.mxu0 0.0
        %4321 = vmatprep.subr.mxu0 0.0
        %4322 = vmatpush2.xpose.msra.mxu0 0.0
        %4323 = vmatprep.subr.mxu0 0.0
        %4324 = vmatpush2.xpose.msra.mxu0 0.0
        %4325 = vmatprep.subr.mxu0 0.0
        %4326 = vmatpush2.xpose.msra.mxu0 0.0
        %4327 = vmatprep.mubr.f32.mxu0 0.0
        %4328 = vmatmul.mubr.f32.gmra.mxu0 %v4252
        %v4329 = vpop.f32.mrf.mxu0
        %v4330 = vadd.f32 0.0, %v4329
        %v4331 = vpop.f32.mrf.mxu0
        %4332 = vmatprep.mubr.f32.mxu0 0.0
        %4333 = vmatmul.mubr.f32.gmra.mxu0 %v4255
        %v4334 = vpop.f32.mrf.mxu0
        %v4335 = vadd.f32 0.0, %v4334
        %v4336 = vpop.f32.mrf.mxu0
        %4337 = vdwg.mxu0
        %v4339 = vsel %vm3989, %v3055, 0
        %v4342 = vsel %vm3989, %v3056, 0
        %v4345 = vsel %vm3989, %v3606, 0
        %v4348 = vsel %vm3989, %v3607, 0
        %4350 = vmatprep.subr.mxu0 0.0
        %4351 = vmatpush1.xpose.msra.mxu0 0.0
        %4352 = vmatprep.subr.mxu0 0.0
        %4353 = vmatpush1.xpose.msra.mxu0 0.0
        %4354 = vmatprep.subr.mxu0 0.0
        %4355 = vmatpush1.xpose.msra.mxu0 0.0
        %4356 = vmatprep.subr.mxu0 0.0
        %4357 = vmatpush1.xpose.msra.mxu0 0.0
        %4358 = vmatprep.subr.mxu0 0.0
        %4359 = vmatpush1.xpose.msra.mxu0 0.0
        %4360 = vmatprep.subr.mxu0 0.0
        %4361 = vmatpush1.xpose.msra.mxu0 0.0
        %4362 = vmatprep.subr.mxu0 0.0
        %4363 = vmatpush1.xpose.msra.mxu0 0.0
        %4364 = vmatprep.subr.mxu0 0.0
        %4365 = vmatpush1.xpose.msra.mxu0 0.0
        %4366 = vmatprep.subr.mxu0 0.0
        %4367 = vmatpush1.xpose.msra.mxu0 0.0
        %4368 = vmatprep.subr.mxu0 0.0
        %4369 = vmatpush1.xpose.msra.mxu0 0.0
        %4370 = vmatprep.subr.mxu0 0.0
        %4371 = vmatpush1.xpose.msra.mxu0 0.0
        %4372 = vmatprep.subr.mxu0 0.0
        %4373 = vmatpush1.xpose.msra.mxu0 0.0
        %4374 = vmatprep.subr.mxu0 0.0
        %4375 = vmatpush1.xpose.msra.mxu0 0.0
        %4376 = vmatprep.subr.mxu0 0.0
        %4377 = vmatpush1.xpose.msra.mxu0 0.0
        %4378 = vmatprep.subr.mxu0 0.0
        %4379 = vmatpush1.xpose.msra.mxu0 %v4348
        %4380 = vmatprep.subr.mxu0 0.0
        %4381 = vmatpush1.xpose.msra.mxu0 %v4345
        %4382 = vmatprep.subr.mxu0 0.0
        %4383 = vmatpush2.xpose.msra.mxu0 0.0
        %4384 = vmatprep.subr.mxu0 0.0
        %4385 = vmatpush2.xpose.msra.mxu0 0.0
        %4386 = vmatprep.subr.mxu0 0.0
        %4387 = vmatpush2.xpose.msra.mxu0 0.0
        %4388 = vmatprep.subr.mxu0 0.0
        %4389 = vmatpush2.xpose.msra.mxu0 0.0
        %4390 = vmatprep.subr.mxu0 0.0
        %4391 = vmatpush2.xpose.msra.mxu0 0.0
        %4392 = vmatprep.subr.mxu0 0.0
        %4393 = vmatpush2.xpose.msra.mxu0 0.0
        %4394 = vmatprep.subr.mxu0 0.0
        %4395 = vmatpush2.xpose.msra.mxu0 0.0
        %4396 = vmatprep.subr.mxu0 0.0
        %4397 = vmatpush2.xpose.msra.mxu0 0.0
        %4398 = vmatprep.subr.mxu0 0.0
        %4399 = vmatpush2.xpose.msra.mxu0 0.0
        %4400 = vmatprep.subr.mxu0 0.0
        %4401 = vmatpush2.xpose.msra.mxu0 0.0
        %4402 = vmatprep.subr.mxu0 0.0
        %4403 = vmatpush2.xpose.msra.mxu0 0.0
        %4404 = vmatprep.subr.mxu0 0.0
        %4405 = vmatpush2.xpose.msra.mxu0 0.0
        %4406 = vmatprep.subr.mxu0 0.0
        %4407 = vmatpush2.xpose.msra.mxu0 0.0
        %4408 = vmatprep.subr.mxu0 0.0
        %4409 = vmatpush2.xpose.msra.mxu0 0.0
        %4410 = vmatprep.subr.mxu0 0.0
        %4411 = vmatpush2.xpose.msra.mxu0 0.0
        %4412 = vmatprep.subr.mxu0 0.0
        %4413 = vmatpush2.xpose.msra.mxu0 0.0
        %4414 = vmatprep.mubr.f32.mxu0 0.0
        %4415 = vmatmul.mubr.f32.gmra.mxu0 %v4339
        %v4416 = vpop.f32.mrf.mxu0
        %v4417 = vadd.f32 0.0, %v4416
        %v4418 = vpop.f32.mrf.mxu0
        %4419 = vmatprep.mubr.f32.mxu0 0.0
        %4420 = vmatmul.mubr.f32.gmra.mxu0 %v4342
        %v4421 = vpop.f32.mrf.mxu0
        %v4422 = vadd.f32 0.0, %v4421
        %v4423 = vpop.f32.mrf.mxu0
        %4424 = vdwg.mxu0
        %v4426 = vsel %vm3989, %v3057, 0
        %v4429 = vsel %vm3989, %v3058, 0
        %v4432 = vsel %vm3989, %v3608, 0
        %v4435 = vsel %vm3989, %v3609, 0
        %4437 = vmatprep.subr.mxu0 0.0
        %4438 = vmatpush1.xpose.msra.mxu0 0.0
        %4439 = vmatprep.subr.mxu0 0.0
        %4440 = vmatpush1.xpose.msra.mxu0 0.0
        %4441 = vmatprep.subr.mxu0 0.0
        %4442 = vmatpush1.xpose.msra.mxu0 0.0
        %4443 = vmatprep.subr.mxu0 0.0
        %4444 = vmatpush1.xpose.msra.mxu0 0.0
        %4445 = vmatprep.subr.mxu0 0.0
        %4446 = vmatpush1.xpose.msra.mxu0 0.0
        %4447 = vmatprep.subr.mxu0 0.0
        %4448 = vmatpush1.xpose.msra.mxu0 0.0
        %4449 = vmatprep.subr.mxu0 0.0
        %4450 = vmatpush1.xpose.msra.mxu0 0.0
        %4451 = vmatprep.subr.mxu0 0.0
        %4452 = vmatpush1.xpose.msra.mxu0 0.0
        %4453 = vmatprep.subr.mxu0 0.0
        %4454 = vmatpush1.xpose.msra.mxu0 0.0
        %4455 = vmatprep.subr.mxu0 0.0
        %4456 = vmatpush1.xpose.msra.mxu0 0.0
        %4457 = vmatprep.subr.mxu0 0.0
        %4458 = vmatpush1.xpose.msra.mxu0 0.0
        %4459 = vmatprep.subr.mxu0 0.0
        %4460 = vmatpush1.xpose.msra.mxu0 0.0
        %4461 = vmatprep.subr.mxu0 0.0
        %4462 = vmatpush1.xpose.msra.mxu0 0.0
        %4463 = vmatprep.subr.mxu0 0.0
        %4464 = vmatpush1.xpose.msra.mxu0 0.0
        %4465 = vmatprep.subr.mxu0 0.0
        %4466 = vmatpush1.xpose.msra.mxu0 %v4435
        %4467 = vmatprep.subr.mxu0 0.0
        %4468 = vmatpush1.xpose.msra.mxu0 %v4432
        %4469 = vmatprep.subr.mxu0 0.0
        %4470 = vmatpush2.xpose.msra.mxu0 0.0
        %4471 = vmatprep.subr.mxu0 0.0
        %4472 = vmatpush2.xpose.msra.mxu0 0.0
        %4473 = vmatprep.subr.mxu0 0.0
        %4474 = vmatpush2.xpose.msra.mxu0 0.0
        %4475 = vmatprep.subr.mxu0 0.0
        %4476 = vmatpush2.xpose.msra.mxu0 0.0
        %4477 = vmatprep.subr.mxu0 0.0
        %4478 = vmatpush2.xpose.msra.mxu0 0.0
        %4479 = vmatprep.subr.mxu0 0.0
        %4480 = vmatpush2.xpose.msra.mxu0 0.0
        %4481 = vmatprep.subr.mxu0 0.0
        %4482 = vmatpush2.xpose.msra.mxu0 0.0
        %4483 = vmatprep.subr.mxu0 0.0
        %4484 = vmatpush2.xpose.msra.mxu0 0.0
        %4485 = vmatprep.subr.mxu0 0.0
        %4486 = vmatpush2.xpose.msra.mxu0 0.0
        %4487 = vmatprep.subr.mxu0 0.0
        %4488 = vmatpush2.xpose.msra.mxu0 0.0
        %4489 = vmatprep.subr.mxu0 0.0
        %4490 = vmatpush2.xpose.msra.mxu0 0.0
        %4491 = vmatprep.subr.mxu0 0.0
        %4492 = vmatpush2.xpose.msra.mxu0 0.0
        %4493 = vmatprep.subr.mxu0 0.0
        %4494 = vmatpush2.xpose.msra.mxu0 0.0
        %4495 = vmatprep.subr.mxu0 0.0
        %4496 = vmatpush2.xpose.msra.mxu0 0.0
        %4497 = vmatprep.subr.mxu0 0.0
        %4498 = vmatpush2.xpose.msra.mxu0 0.0
        %4499 = vmatprep.subr.mxu0 0.0
        %4500 = vmatpush2.xpose.msra.mxu0 0.0
        %4501 = vmatprep.mubr.f32.mxu0 0.0
        %4502 = vmatmul.mubr.f32.gmra.mxu0 %v4426
        %v4503 = vpop.f32.mrf.mxu0
        %v4504 = vadd.f32 0.0, %v4503
        %v4505 = vpop.f32.mrf.mxu0
        %4506 = vmatprep.mubr.f32.mxu0 0.0
        %4507 = vmatmul.mubr.f32.gmra.mxu0 %v4429
        %v4508 = vpop.f32.mrf.mxu0
        %v4509 = vadd.f32 0.0, %v4508
        %v4510 = vpop.f32.mrf.mxu0
        %4511 = vdwg.mxu0
        %v4513 = vsel %vm3989, %v3059, 0
        %v4516 = vsel %vm3989, %v3060, 0
        %v4519 = vsel %vm3989, %v3610, 0
        %v4522 = vsel %vm3989, %v3611, 0
        %4524 = vmatprep.subr.mxu0 0.0
        %4525 = vmatpush1.xpose.msra.mxu0 0.0
        %4526 = vmatprep.subr.mxu0 0.0
        %4527 = vmatpush1.xpose.msra.mxu0 0.0
        %4528 = vmatprep.subr.mxu0 0.0
        %4529 = vmatpush1.xpose.msra.mxu0 0.0
        %4530 = vmatprep.subr.mxu0 0.0
        %4531 = vmatpush1.xpose.msra.mxu0 0.0
        %4532 = vmatprep.subr.mxu0 0.0
        %4533 = vmatpush1.xpose.msra.mxu0 0.0
        %4534 = vmatprep.subr.mxu0 0.0
        %4535 = vmatpush1.xpose.msra.mxu0 0.0
        %4536 = vmatprep.subr.mxu0 0.0
        %4537 = vmatpush1.xpose.msra.mxu0 0.0
        %4538 = vmatprep.subr.mxu0 0.0
        %4539 = vmatpush1.xpose.msra.mxu0 0.0
        %4540 = vmatprep.subr.mxu0 0.0
        %4541 = vmatpush1.xpose.msra.mxu0 0.0
        %4542 = vmatprep.subr.mxu0 0.0
        %4543 = vmatpush1.xpose.msra.mxu0 0.0
        %4544 = vmatprep.subr.mxu0 0.0
        %4545 = vmatpush1.xpose.msra.mxu0 0.0
        %4546 = vmatprep.subr.mxu0 0.0
        %4547 = vmatpush1.xpose.msra.mxu0 0.0
        %4548 = vmatprep.subr.mxu0 0.0
        %4549 = vmatpush1.xpose.msra.mxu0 0.0
        %4550 = vmatprep.subr.mxu0 0.0
        %4551 = vmatpush1.xpose.msra.mxu0 0.0
        %4552 = vmatprep.subr.mxu0 0.0
        %4553 = vmatpush1.xpose.msra.mxu0 %v4522
        %4554 = vmatprep.subr.mxu0 0.0
        %4555 = vmatpush1.xpose.msra.mxu0 %v4519
        %4556 = vmatprep.subr.mxu0 0.0
        %4557 = vmatpush2.xpose.msra.mxu0 0.0
        %4558 = vmatprep.subr.mxu0 0.0
        %4559 = vmatpush2.xpose.msra.mxu0 0.0
        %4560 = vmatprep.subr.mxu0 0.0
        %4561 = vmatpush2.xpose.msra.mxu0 0.0
        %4562 = vmatprep.subr.mxu0 0.0
        %4563 = vmatpush2.xpose.msra.mxu0 0.0
        %4564 = vmatprep.subr.mxu0 0.0
        %4565 = vmatpush2.xpose.msra.mxu0 0.0
        %4566 = vmatprep.subr.mxu0 0.0
        %4567 = vmatpush2.xpose.msra.mxu0 0.0
        %4568 = vmatprep.subr.mxu0 0.0
        %4569 = vmatpush2.xpose.msra.mxu0 0.0
        %4570 = vmatprep.subr.mxu0 0.0
        %4571 = vmatpush2.xpose.msra.mxu0 0.0
        %4572 = vmatprep.subr.mxu0 0.0
        %4573 = vmatpush2.xpose.msra.mxu0 0.0
        %4574 = vmatprep.subr.mxu0 0.0
        %4575 = vmatpush2.xpose.msra.mxu0 0.0
        %4576 = vmatprep.subr.mxu0 0.0
        %4577 = vmatpush2.xpose.msra.mxu0 0.0
        %4578 = vmatprep.subr.mxu0 0.0
        %4579 = vmatpush2.xpose.msra.mxu0 0.0
        %4580 = vmatprep.subr.mxu0 0.0
        %4581 = vmatpush2.xpose.msra.mxu0 0.0
        %4582 = vmatprep.subr.mxu0 0.0
        %4583 = vmatpush2.xpose.msra.mxu0 0.0
        %4584 = vmatprep.subr.mxu0 0.0
        %4585 = vmatpush2.xpose.msra.mxu0 0.0
        %4586 = vmatprep.subr.mxu0 0.0
        %4587 = vmatpush2.xpose.msra.mxu0 0.0
        %4588 = vmatprep.mubr.f32.mxu0 0.0
        %4589 = vmatmul.mubr.f32.gmra.mxu0 %v4513
        %v4590 = vpop.f32.mrf.mxu0
        %v4591 = vadd.f32 0.0, %v4590
        %v4592 = vpop.f32.mrf.mxu0
        %4593 = vmatprep.mubr.f32.mxu0 0.0
        %4594 = vmatmul.mubr.f32.gmra.mxu0 %v4516
        %v4595 = vpop.f32.mrf.mxu0
        %v4596 = vadd.f32 0.0, %v4595
        %v4597 = vpop.f32.mrf.mxu0
        %4598 = vdwg.mxu0
        %v4600 = vsel %vm3989, %v3061, 0
        %v4603 = vsel %vm3989, %v3062, 0
        %v4606 = vsel %vm3989, %v3612, 0
        %v4609 = vsel %vm3989, %v3613, 0
        %4611 = vmatprep.subr.mxu0 0.0
        %4612 = vmatpush1.xpose.msra.mxu0 0.0
        %4613 = vmatprep.subr.mxu0 0.0
        %4614 = vmatpush1.xpose.msra.mxu0 0.0
        %4615 = vmatprep.subr.mxu0 0.0
        %4616 = vmatpush1.xpose.msra.mxu0 0.0
        %4617 = vmatprep.subr.mxu0 0.0
        %4618 = vmatpush1.xpose.msra.mxu0 0.0
        %4619 = vmatprep.subr.mxu0 0.0
        %4620 = vmatpush1.xpose.msra.mxu0 0.0
        %4621 = vmatprep.subr.mxu0 0.0
        %4622 = vmatpush1.xpose.msra.mxu0 0.0
        %4623 = vmatprep.subr.mxu0 0.0
        %4624 = vmatpush1.xpose.msra.mxu0 0.0
        %4625 = vmatprep.subr.mxu0 0.0
        %4626 = vmatpush1.xpose.msra.mxu0 0.0
        %4627 = vmatprep.subr.mxu0 0.0
        %4628 = vmatpush1.xpose.msra.mxu0 0.0
        %4629 = vmatprep.subr.mxu0 0.0
        %4630 = vmatpush1.xpose.msra.mxu0 0.0
        %4631 = vmatprep.subr.mxu0 0.0
        %4632 = vmatpush1.xpose.msra.mxu0 0.0
        %4633 = vmatprep.subr.mxu0 0.0
        %4634 = vmatpush1.xpose.msra.mxu0 0.0
        %4635 = vmatprep.subr.mxu0 0.0
        %4636 = vmatpush1.xpose.msra.mxu0 0.0
        %4637 = vmatprep.subr.mxu0 0.0
        %4638 = vmatpush1.xpose.msra.mxu0 0.0
        %4639 = vmatprep.subr.mxu0 0.0
        %4640 = vmatpush1.xpose.msra.mxu0 %v4609
        %4641 = vmatprep.subr.mxu0 0.0
        %4642 = vmatpush1.xpose.msra.mxu0 %v4606
        %4643 = vmatprep.subr.mxu0 0.0
        %4644 = vmatpush2.xpose.msra.mxu0 0.0
        %4645 = vmatprep.subr.mxu0 0.0
        %4646 = vmatpush2.xpose.msra.mxu0 0.0
        %4647 = vmatprep.subr.mxu0 0.0
        %4648 = vmatpush2.xpose.msra.mxu0 0.0
        %4649 = vmatprep.subr.mxu0 0.0
        %4650 = vmatpush2.xpose.msra.mxu0 0.0
        %4651 = vmatprep.subr.mxu0 0.0
        %4652 = vmatpush2.xpose.msra.mxu0 0.0
        %4653 = vmatprep.subr.mxu0 0.0
        %4654 = vmatpush2.xpose.msra.mxu0 0.0
        %4655 = vmatprep.subr.mxu0 0.0
        %4656 = vmatpush2.xpose.msra.mxu0 0.0
        %4657 = vmatprep.subr.mxu0 0.0
        %4658 = vmatpush2.xpose.msra.mxu0 0.0
        %4659 = vmatprep.subr.mxu0 0.0
        %4660 = vmatpush2.xpose.msra.mxu0 0.0
        %4661 = vmatprep.subr.mxu0 0.0
        %4662 = vmatpush2.xpose.msra.mxu0 0.0
        %4663 = vmatprep.subr.mxu0 0.0
        %4664 = vmatpush2.xpose.msra.mxu0 0.0
        %4665 = vmatprep.subr.mxu0 0.0
        %4666 = vmatpush2.xpose.msra.mxu0 0.0
        %4667 = vmatprep.subr.mxu0 0.0
        %4668 = vmatpush2.xpose.msra.mxu0 0.0
        %4669 = vmatprep.subr.mxu0 0.0
        %4670 = vmatpush2.xpose.msra.mxu0 0.0
        %4671 = vmatprep.subr.mxu0 0.0
        %4672 = vmatpush2.xpose.msra.mxu0 0.0
        %4673 = vmatprep.subr.mxu0 0.0
        %4674 = vmatpush2.xpose.msra.mxu0 0.0
        %4675 = vmatprep.mubr.f32.mxu0 0.0
        %4676 = vmatmul.mubr.f32.gmra.mxu0 %v4600
        %v4677 = vpop.f32.mrf.mxu0
        %v4678 = vadd.f32 0.0, %v4677
        %v4679 = vpop.f32.mrf.mxu0
        %4680 = vmatprep.mubr.f32.mxu0 0.0
        %4681 = vmatmul.mubr.f32.gmra.mxu0 %v4603
        %v4682 = vpop.f32.mrf.mxu0
        %v4683 = vadd.f32 0.0, %v4682
        %v4684 = vpop.f32.mrf.mxu0
        %4685 = vdwg.mxu0
        %vm4686 = vcmask 72704
        %v4687 = vsel %vm4686, %v4069, -inf
        %4688 = vmax.xlane.f32.xlu0 %v4687
        %v4689 = vpop.xlane.xlu0 %4688
        %vm4690 = vcmask 65536
        %v4691 = vsel %vm4690, %v4074, -inf
        %4692 = vmax.xlane.f32.xlu0 %v4691
        %v4693 = vpop.xlane.xlu0 %4692
        %v4694 = vsel %vm4686, %v4156, -inf
        %4695 = vmax.xlane.f32.xlu0 %v4694
        %v4696 = vpop.xlane.xlu0 %4695
        %v4697 = vsel %vm4690, %v4161, -inf
        %4698 = vmax.xlane.f32.xlu0 %v4697
        %v4699 = vpop.xlane.xlu0 %4698
        %v4700 = vsel %vm4686, %v4243, -inf
        %4701 = vmax.xlane.f32.xlu0 %v4700
        %v4702 = vpop.xlane.xlu0 %4701
        %v4703 = vsel %vm4690, %v4248, -inf
        %4704 = vmax.xlane.f32.xlu0 %v4703
        %v4705 = vpop.xlane.xlu0 %4704
        %v4706 = vsel %vm4686, %v4330, -inf
        %4707 = vmax.xlane.f32.xlu0 %v4706
        %v4708 = vpop.xlane.xlu0 %4707
        %v4709 = vsel %vm4690, %v4335, -inf
        %4710 = vmax.xlane.f32.xlu0 %v4709
        %v4711 = vpop.xlane.xlu0 %4710
        %v4712 = vsel %vm4686, %v4417, -inf
        %4713 = vmax.xlane.f32.xlu0 %v4712
        %v4714 = vpop.xlane.xlu0 %4713
        %v4715 = vsel %vm4690, %v4422, -inf
        %4716 = vmax.xlane.f32.xlu0 %v4715
        %v4717 = vpop.xlane.xlu0 %4716
        %v4718 = vsel %vm4686, %v4504, -inf
        %4719 = vmax.xlane.f32.xlu0 %v4718
        %v4720 = vpop.xlane.xlu0 %4719
        %v4721 = vsel %vm4690, %v4509, -inf
        %4722 = vmax.xlane.f32.xlu0 %v4721
        %v4723 = vpop.xlane.xlu0 %4722
        %v4724 = vsel %vm4686, %v4591, -inf
        %4725 = vmax.xlane.f32.xlu0 %v4724
        %v4726 = vpop.xlane.xlu0 %4725
        %v4727 = vsel %vm4690, %v4596, -inf
        %4728 = vmax.xlane.f32.xlu0 %v4727
        %v4729 = vpop.xlane.xlu0 %4728
        %v4730 = vsel %vm4686, %v4678, -inf
        %4731 = vmax.xlane.f32.xlu0 %v4730
        %v4732 = vpop.xlane.xlu0 %4731
        %v4733 = vsel %vm4690, %v4683, -inf
        %4734 = vmax.xlane.f32.xlu0 %v4733
        %v4735 = vpop.xlane.xlu0 %4734
        %v4736 = vsub.f32 %v4069, %v4689
        %v4737 = vsub.f32 %v4074, %v4693
        %v4738 = vsub.f32 %v4156, %v4696
        %v4739 = vsub.f32 %v4161, %v4699
        %v4740 = vsub.f32 %v4243, %v4702
        %v4741 = vsub.f32 %v4248, %v4705
        %v4742 = vsub.f32 %v4330, %v4708
        %v4743 = vsub.f32 %v4335, %v4711
        %v4744 = vsub.f32 %v4417, %v4714
        %v4745 = vsub.f32 %v4422, %v4717
        %v4746 = vsub.f32 %v4504, %v4720
        %v4747 = vsub.f32 %v4509, %v4723
        %v4748 = vsub.f32 %v4591, %v4726
        %v4749 = vsub.f32 %v4596, %v4729
        %v4750 = vsub.f32 %v4678, %v4732
        %v4751 = vsub.f32 %v4683, %v4735
        %v4752 = vmul.f32 %v4736, 1.442695
        %v4753 = vpow.pop %v4752
        %v4754 = vmul.f32 %v4737, 1.442695
        %v4755 = vpow.pop %v4754
        %v4756 = vmul.f32 %v4738, 1.442695
        %v4757 = vpow.pop %v4756
        %v4758 = vmul.f32 %v4739, 1.442695
        %v4759 = vpow.pop %v4758
        %v4760 = vmul.f32 %v4740, 1.442695
        %v4761 = vpow.pop %v4760
        %v4762 = vmul.f32 %v4741, 1.442695
        %v4763 = vpow.pop %v4762
        %v4764 = vmul.f32 %v4742, 1.442695
        %v4765 = vpow.pop %v4764
        %v4766 = vmul.f32 %v4743, 1.442695
        %v4767 = vpow.pop %v4766
        %v4768 = vmul.f32 %v4744, 1.442695
        %v4769 = vpow.pop %v4768
        %v4770 = vmul.f32 %v4745, 1.442695
        %v4771 = vpow.pop %v4770
        %v4772 = vmul.f32 %v4746, 1.442695
        %v4773 = vpow.pop %v4772
        %v4774 = vmul.f32 %v4747, 1.442695
        %v4775 = vpow.pop %v4774
        %v4776 = vmul.f32 %v4748, 1.442695
        %v4777 = vpow.pop %v4776
        %v4778 = vmul.f32 %v4749, 1.442695
        %v4779 = vpow.pop %v4778
        %v4780 = vmul.f32 %v4750, 1.442695
        %v4781 = vpow.pop %v4780
        %v4782 = vmul.f32 %v4751, 1.442695
        %v4783 = vpow.pop %v4782
        %v4784 = vsel %vm4686, %v4753, 0.0
        %4785 = vadd.xlane.f32.xlu0 %v4784
        %v4786 = vpop.xlane.xlu0 %4785
        %v4787 = vsel %vm4690, %v4755, 0.0
        %4788 = vadd.xlane.f32.xlu0 %v4787
        %v4789 = vpop.xlane.xlu0 %4788
        %v4790 = vsel %vm4686, %v4757, 0.0
        %4791 = vadd.xlane.f32.xlu0 %v4790
        %v4792 = vpop.xlane.xlu0 %4791
        %v4793 = vsel %vm4690, %v4759, 0.0
        %4794 = vadd.xlane.f32.xlu0 %v4793
        %v4795 = vpop.xlane.xlu0 %4794
        %v4796 = vsel %vm4686, %v4761, 0.0
        %4797 = vadd.xlane.f32.xlu0 %v4796
        %v4798 = vpop.xlane.xlu0 %4797
        %v4799 = vsel %vm4690, %v4763, 0.0
        %4800 = vadd.xlane.f32.xlu0 %v4799
        %v4801 = vpop.xlane.xlu0 %4800
        %v4802 = vsel %vm4686, %v4765, 0.0
        %4803 = vadd.xlane.f32.xlu0 %v4802
        %v4804 = vpop.xlane.xlu0 %4803
        %v4805 = vsel %vm4690, %v4767, 0.0
        %4806 = vadd.xlane.f32.xlu0 %v4805
        %v4807 = vpop.xlane.xlu0 %4806
        %v4808 = vsel %vm4686, %v4769, 0.0
        %4809 = vadd.xlane.f32.xlu0 %v4808
        %v4810 = vpop.xlane.xlu0 %4809
        %v4811 = vsel %vm4690, %v4771, 0.0
        %4812 = vadd.xlane.f32.xlu0 %v4811
        %v4813 = vpop.xlane.xlu0 %4812
        %v4814 = vsel %vm4686, %v4773, 0.0
        %4815 = vadd.xlane.f32.xlu0 %v4814
        %v4816 = vpop.xlane.xlu0 %4815
        %v4817 = vsel %vm4690, %v4775, 0.0
        %4818 = vadd.xlane.f32.xlu0 %v4817
        %v4819 = vpop.xlane.xlu0 %4818
        %v4820 = vsel %vm4686, %v4777, 0.0
        %4821 = vadd.xlane.f32.xlu0 %v4820
        %v4822 = vpop.xlane.xlu0 %4821
        %v4823 = vsel %vm4690, %v4779, 0.0
        %4824 = vadd.xlane.f32.xlu0 %v4823
        %v4825 = vpop.xlane.xlu0 %4824
        %v4826 = vsel %vm4686, %v4781, 0.0
        %4827 = vadd.xlane.f32.xlu0 %v4826
        %v4828 = vpop.xlane.xlu0 %4827
        %v4829 = vsel %vm4690, %v4783, 0.0
        %4830 = vadd.xlane.f32.xlu0 %v4829
        %v4831 = vpop.xlane.xlu0 %4830
        %v4832 = vrcp.pop %v4786
        %v4833 = vmul.f32 %v4753, %v4832
        %v4834 = vrcp.pop %v4789
        %v4835 = vmul.f32 %v4755, %v4834
        %v4836 = vrcp.pop %v4792
        %v4837 = vmul.f32 %v4757, %v4836
        %v4838 = vrcp.pop %v4795
        %v4839 = vmul.f32 %v4759, %v4838
        %v4840 = vrcp.pop %v4798
        %v4841 = vmul.f32 %v4761, %v4840
        %v4842 = vrcp.pop %v4801
        %v4843 = vmul.f32 %v4763, %v4842
        %v4844 = vrcp.pop %v4804
        %v4845 = vmul.f32 %v4765, %v4844
        %v4846 = vrcp.pop %v4807
        %v4847 = vmul.f32 %v4767, %v4846
        %v4848 = vrcp.pop %v4810
        %v4849 = vmul.f32 %v4769, %v4848
        %v4850 = vrcp.pop %v4813
        %v4851 = vmul.f32 %v4771, %v4850
        %v4852 = vrcp.pop %v4816
        %v4853 = vmul.f32 %v4773, %v4852
        %v4854 = vrcp.pop %v4819
        %v4855 = vmul.f32 %v4775, %v4854
        %v4856 = vrcp.pop %v4822
        %v4857 = vmul.f32 %v4777, %v4856
        %v4858 = vrcp.pop %v4825
        %v4859 = vmul.f32 %v4779, %v4858
        %v4860 = vrcp.pop %v4828
        %v4861 = vmul.f32 %v4781, %v4860
        %v4862 = vrcp.pop %v4831
        %v4863 = vmul.f32 %v4783, %v4862
        %v4865 = vsel %vm4686, %v4833, 0
        %v4868 = vsel %vm4686, %v4835, 0
        %vm4870 = vcmask 1040384
        %v4872 = vsel %vm4870, %v3886, 0
        %4874 = vmatprep.subr.mxu0 0.0
        %4875 = vmatpush1.msra.mxu0 0.0
        %4876 = vmatprep.subr.mxu0 0.0
        %4877 = vmatpush1.msra.mxu0 0.0
        %4878 = vmatprep.subr.mxu0 0.0
        %4879 = vmatpush1.msra.mxu0 0.0
        %4880 = vmatprep.subr.mxu0 0.0
        %4881 = vmatpush1.msra.mxu0 0.0
        %4882 = vmatprep.subr.mxu0 0.0
        %4883 = vmatpush1.msra.mxu0 0.0
        %4884 = vmatprep.subr.mxu0 0.0
        %4885 = vmatpush1.msra.mxu0 0.0
        %4886 = vmatprep.subr.mxu0 0.0
        %4887 = vmatpush1.msra.mxu0 0.0
        %4888 = vmatprep.subr.mxu0 0.0
        %4889 = vmatpush1.msra.mxu0 0.0
        %4890 = vmatprep.subr.mxu0 0.0
        %4891 = vmatpush1.msra.mxu0 0.0
        %4892 = vmatprep.subr.mxu0 0.0
        %4893 = vmatpush1.msra.mxu0 0.0
        %4894 = vmatprep.subr.mxu0 0.0
        %4895 = vmatpush1.msra.mxu0 0.0
        %4896 = vmatprep.subr.mxu0 0.0
        %4897 = vmatpush1.msra.mxu0 0.0
        %4898 = vmatprep.subr.mxu0 0.0
        %4899 = vmatpush1.msra.mxu0 0.0
        %4900 = vmatprep.subr.mxu0 0.0
        %4901 = vmatpush1.msra.mxu0 0.0
        %4902 = vmatprep.subr.mxu0 0.0
        %4903 = vmatpush1.msra.mxu0 %v4872
        %4904 = vmatprep.subr.mxu0 0.0
        %4905 = vmatpush1.msra.mxu0 %v3868
        %4906 = vmatprep.subr.mxu0 0.0
        %4907 = vmatpush2.msra.mxu0 0.0
        %4908 = vmatprep.subr.mxu0 0.0
        %4909 = vmatpush2.msra.mxu0 0.0
        %4910 = vmatprep.subr.mxu0 0.0
        %4911 = vmatpush2.msra.mxu0 0.0
        %4912 = vmatprep.subr.mxu0 0.0
        %4913 = vmatpush2.msra.mxu0 0.0
        %4914 = vmatprep.subr.mxu0 0.0
        %4915 = vmatpush2.msra.mxu0 0.0
        %4916 = vmatprep.subr.mxu0 0.0
        %4917 = vmatpush2.msra.mxu0 0.0
        %4918 = vmatprep.subr.mxu0 0.0
        %4919 = vmatpush2.msra.mxu0 0.0
        %4920 = vmatprep.subr.mxu0 0.0
        %4921 = vmatpush2.msra.mxu0 0.0
        %4922 = vmatprep.subr.mxu0 0.0
        %4923 = vmatpush2.msra.mxu0 0.0
        %4924 = vmatprep.subr.mxu0 0.0
        %4925 = vmatpush2.msra.mxu0 0.0
        %4926 = vmatprep.subr.mxu0 0.0
        %4927 = vmatpush2.msra.mxu0 0.0
        %4928 = vmatprep.subr.mxu0 0.0
        %4929 = vmatpush2.msra.mxu0 0.0
        %4930 = vmatprep.subr.mxu0 0.0
        %4931 = vmatpush2.msra.mxu0 0.0
        %4932 = vmatprep.subr.mxu0 0.0
        %4933 = vmatpush2.msra.mxu0 0.0
        %4934 = vmatprep.subr.mxu0 0.0
        %4935 = vmatpush2.msra.mxu0 0.0
        %4936 = vmatprep.subr.mxu0 0.0
        %4937 = vmatpush2.msra.mxu0 0.0
        %4938 = vmatprep.mubr.f32.mxu0 0.0
        %4939 = vmatmul.mubr.f32.gmra.mxu0 %v4865
        %v4940 = vpop.f32.mrf.mxu0
        %v4941 = vadd.f32 0.0, %v4940
        %v4942 = vpop.f32.mrf.mxu0
        %4943 = vmatprep.mubr.f32.mxu0 0.0
        %4944 = vmatmul.mubr.f32.gmra.mxu0 %v4868
        %v4945 = vpop.f32.mrf.mxu0
        %v4946 = vadd.f32 0.0, %v4945
        %v4947 = vpop.f32.mrf.mxu0
        %4948 = vdwg.mxu0
        %v4950 = vsel %vm4686, %v4837, 0
        %v4953 = vsel %vm4686, %v4839, 0
        %v4956 = vsel %vm4870, %v3894, 0
        %4958 = vmatprep.subr.mxu0 0.0
        %4959 = vmatpush1.msra.mxu0 0.0
        %4960 = vmatprep.subr.mxu0 0.0
        %4961 = vmatpush1.msra.mxu0 0.0
        %4962 = vmatprep.subr.mxu0 0.0
        %4963 = vmatpush1.msra.mxu0 0.0
        %4964 = vmatprep.subr.mxu0 0.0
        %4965 = vmatpush1.msra.mxu0 0.0
        %4966 = vmatprep.subr.mxu0 0.0
        %4967 = vmatpush1.msra.mxu0 0.0
        %4968 = vmatprep.subr.mxu0 0.0
        %4969 = vmatpush1.msra.mxu0 0.0
        %4970 = vmatprep.subr.mxu0 0.0
        %4971 = vmatpush1.msra.mxu0 0.0
        %4972 = vmatprep.subr.mxu0 0.0
        %4973 = vmatpush1.msra.mxu0 0.0
        %4974 = vmatprep.subr.mxu0 0.0
        %4975 = vmatpush1.msra.mxu0 0.0
        %4976 = vmatprep.subr.mxu0 0.0
        %4977 = vmatpush1.msra.mxu0 0.0
        %4978 = vmatprep.subr.mxu0 0.0
        %4979 = vmatpush1.msra.mxu0 0.0
        %4980 = vmatprep.subr.mxu0 0.0
        %4981 = vmatpush1.msra.mxu0 0.0
        %4982 = vmatprep.subr.mxu0 0.0
        %4983 = vmatpush1.msra.mxu0 0.0
        %4984 = vmatprep.subr.mxu0 0.0
        %4985 = vmatpush1.msra.mxu0 0.0
        %4986 = vmatprep.subr.mxu0 0.0
        %4987 = vmatpush1.msra.mxu0 %v4956
        %4988 = vmatprep.subr.mxu0 0.0
        %4989 = vmatpush1.msra.mxu0 %v3869
        %4990 = vmatprep.subr.mxu0 0.0
        %4991 = vmatpush2.msra.mxu0 0.0
        %4992 = vmatprep.subr.mxu0 0.0
        %4993 = vmatpush2.msra.mxu0 0.0
        %4994 = vmatprep.subr.mxu0 0.0
        %4995 = vmatpush2.msra.mxu0 0.0
        %4996 = vmatprep.subr.mxu0 0.0
        %4997 = vmatpush2.msra.mxu0 0.0
        %4998 = vmatprep.subr.mxu0 0.0
        %4999 = vmatpush2.msra.mxu0 0.0
        %5000 = vmatprep.subr.mxu0 0.0
        %5001 = vmatpush2.msra.mxu0 0.0
        %5002 = vmatprep.subr.mxu0 0.0
        %5003 = vmatpush2.msra.mxu0 0.0
        %5004 = vmatprep.subr.mxu0 0.0
        %5005 = vmatpush2.msra.mxu0 0.0
        %5006 = vmatprep.subr.mxu0 0.0
        %5007 = vmatpush2.msra.mxu0 0.0
        %5008 = vmatprep.subr.mxu0 0.0
        %5009 = vmatpush2.msra.mxu0 0.0
        %5010 = vmatprep.subr.mxu0 0.0
        %5011 = vmatpush2.msra.mxu0 0.0
        %5012 = vmatprep.subr.mxu0 0.0
        %5013 = vmatpush2.msra.mxu0 0.0
        %5014 = vmatprep.subr.mxu0 0.0
        %5015 = vmatpush2.msra.mxu0 0.0
        %5016 = vmatprep.subr.mxu0 0.0
        %5017 = vmatpush2.msra.mxu0 0.0
        %5018 = vmatprep.subr.mxu0 0.0
        %5019 = vmatpush2.msra.mxu0 0.0
        %5020 = vmatprep.subr.mxu0 0.0
        %5021 = vmatpush2.msra.mxu0 0.0
        %5022 = vmatprep.mubr.f32.mxu0 0.0
        %5023 = vmatmul.mubr.f32.gmra.mxu0 %v4950
        %v5024 = vpop.f32.mrf.mxu0
        %v5025 = vadd.f32 0.0, %v5024
        %v5026 = vpop.f32.mrf.mxu0
        %5027 = vmatprep.mubr.f32.mxu0 0.0
        %5028 = vmatmul.mubr.f32.gmra.mxu0 %v4953
        %v5029 = vpop.f32.mrf.mxu0
        %v5030 = vadd.f32 0.0, %v5029
        %v5031 = vpop.f32.mrf.mxu0
        %5032 = vdwg.mxu0
        %v5034 = vsel %vm4686, %v4841, 0
        %v5037 = vsel %vm4686, %v4843, 0
        %v5040 = vsel %vm4870, %v3893, 0
        %5042 = vmatprep.subr.mxu0 0.0
        %5043 = vmatpush1.msra.mxu0 0.0
        %5044 = vmatprep.subr.mxu0 0.0
        %5045 = vmatpush1.msra.mxu0 0.0
        %5046 = vmatprep.subr.mxu0 0.0
        %5047 = vmatpush1.msra.mxu0 0.0
        %5048 = vmatprep.subr.mxu0 0.0
        %5049 = vmatpush1.msra.mxu0 0.0
        %5050 = vmatprep.subr.mxu0 0.0
        %5051 = vmatpush1.msra.mxu0 0.0
        %5052 = vmatprep.subr.mxu0 0.0
        %5053 = vmatpush1.msra.mxu0 0.0
        %5054 = vmatprep.subr.mxu0 0.0
        %5055 = vmatpush1.msra.mxu0 0.0
        %5056 = vmatprep.subr.mxu0 0.0
        %5057 = vmatpush1.msra.mxu0 0.0
        %5058 = vmatprep.subr.mxu0 0.0
        %5059 = vmatpush1.msra.mxu0 0.0
        %5060 = vmatprep.subr.mxu0 0.0
        %5061 = vmatpush1.msra.mxu0 0.0
        %5062 = vmatprep.subr.mxu0 0.0
        %5063 = vmatpush1.msra.mxu0 0.0
        %5064 = vmatprep.subr.mxu0 0.0
        %5065 = vmatpush1.msra.mxu0 0.0
        %5066 = vmatprep.subr.mxu0 0.0
        %5067 = vmatpush1.msra.mxu0 0.0
        %5068 = vmatprep.subr.mxu0 0.0
        %5069 = vmatpush1.msra.mxu0 0.0
        %5070 = vmatprep.subr.mxu0 0.0
        %5071 = vmatpush1.msra.mxu0 %v5040
        %5072 = vmatprep.subr.mxu0 0.0
        %5073 = vmatpush1.msra.mxu0 %v3870
        %5074 = vmatprep.subr.mxu0 0.0
        %5075 = vmatpush2.msra.mxu0 0.0
        %5076 = vmatprep.subr.mxu0 0.0
        %5077 = vmatpush2.msra.mxu0 0.0
        %5078 = vmatprep.subr.mxu0 0.0
        %5079 = vmatpush2.msra.mxu0 0.0
        %5080 = vmatprep.subr.mxu0 0.0
        %5081 = vmatpush2.msra.mxu0 0.0
        %5082 = vmatprep.subr.mxu0 0.0
        %5083 = vmatpush2.msra.mxu0 0.0
        %5084 = vmatprep.subr.mxu0 0.0
        %5085 = vmatpush2.msra.mxu0 0.0
        %5086 = vmatprep.subr.mxu0 0.0
        %5087 = vmatpush2.msra.mxu0 0.0
        %5088 = vmatprep.subr.mxu0 0.0
        %5089 = vmatpush2.msra.mxu0 0.0
        %5090 = vmatprep.subr.mxu0 0.0
        %5091 = vmatpush2.msra.mxu0 0.0
        %5092 = vmatprep.subr.mxu0 0.0
        %5093 = vmatpush2.msra.mxu0 0.0
        %5094 = vmatprep.subr.mxu0 0.0
        %5095 = vmatpush2.msra.mxu0 0.0
        %5096 = vmatprep.subr.mxu0 0.0
        %5097 = vmatpush2.msra.mxu0 0.0
        %5098 = vmatprep.subr.mxu0 0.0
        %5099 = vmatpush2.msra.mxu0 0.0
        %5100 = vmatprep.subr.mxu0 0.0
        %5101 = vmatpush2.msra.mxu0 0.0
        %5102 = vmatprep.subr.mxu0 0.0
        %5103 = vmatpush2.msra.mxu0 0.0
        %5104 = vmatprep.subr.mxu0 0.0
        %5105 = vmatpush2.msra.mxu0 0.0
        %5106 = vmatprep.mubr.f32.mxu0 0.0
        %5107 = vmatmul.mubr.f32.gmra.mxu0 %v5034
        %v5108 = vpop.f32.mrf.mxu0
        %v5109 = vadd.f32 0.0, %v5108
        %v5110 = vpop.f32.mrf.mxu0
        %5111 = vmatprep.mubr.f32.mxu0 0.0
        %5112 = vmatmul.mubr.f32.gmra.mxu0 %v5037
        %v5113 = vpop.f32.mrf.mxu0
        %v5114 = vadd.f32 0.0, %v5113
        %v5115 = vpop.f32.mrf.mxu0
        %5116 = vdwg.mxu0
        %v5118 = vsel %vm4686, %v4845, 0
        %v5121 = vsel %vm4686, %v4847, 0
        %v5124 = vsel %vm4870, %v3895, 0
        %5126 = vmatprep.subr.mxu0 0.0
        %5127 = vmatpush1.msra.mxu0 0.0
        %5128 = vmatprep.subr.mxu0 0.0
        %5129 = vmatpush1.msra.mxu0 0.0
        %5130 = vmatprep.subr.mxu0 0.0
        %5131 = vmatpush1.msra.mxu0 0.0
        %5132 = vmatprep.subr.mxu0 0.0
        %5133 = vmatpush1.msra.mxu0 0.0
        %5134 = vmatprep.subr.mxu0 0.0
        %5135 = vmatpush1.msra.mxu0 0.0
        %5136 = vmatprep.subr.mxu0 0.0
        %5137 = vmatpush1.msra.mxu0 0.0
        %5138 = vmatprep.subr.mxu0 0.0
        %5139 = vmatpush1.msra.mxu0 0.0
        %5140 = vmatprep.subr.mxu0 0.0
        %5141 = vmatpush1.msra.mxu0 0.0
        %5142 = vmatprep.subr.mxu0 0.0
        %5143 = vmatpush1.msra.mxu0 0.0
        %5144 = vmatprep.subr.mxu0 0.0
        %5145 = vmatpush1.msra.mxu0 0.0
        %5146 = vmatprep.subr.mxu0 0.0
        %5147 = vmatpush1.msra.mxu0 0.0
        %5148 = vmatprep.subr.mxu0 0.0
        %5149 = vmatpush1.msra.mxu0 0.0
        %5150 = vmatprep.subr.mxu0 0.0
        %5151 = vmatpush1.msra.mxu0 0.0
        %5152 = vmatprep.subr.mxu0 0.0
        %5153 = vmatpush1.msra.mxu0 0.0
        %5154 = vmatprep.subr.mxu0 0.0
        %5155 = vmatpush1.msra.mxu0 %v5124
        %5156 = vmatprep.subr.mxu0 0.0
        %5157 = vmatpush1.msra.mxu0 %v3871
        %5158 = vmatprep.subr.mxu0 0.0
        %5159 = vmatpush2.msra.mxu0 0.0
        %5160 = vmatprep.subr.mxu0 0.0
        %5161 = vmatpush2.msra.mxu0 0.0
        %5162 = vmatprep.subr.mxu0 0.0
        %5163 = vmatpush2.msra.mxu0 0.0
        %5164 = vmatprep.subr.mxu0 0.0
        %5165 = vmatpush2.msra.mxu0 0.0
        %5166 = vmatprep.subr.mxu0 0.0
        %5167 = vmatpush2.msra.mxu0 0.0
        %5168 = vmatprep.subr.mxu0 0.0
        %5169 = vmatpush2.msra.mxu0 0.0
        %5170 = vmatprep.subr.mxu0 0.0
        %5171 = vmatpush2.msra.mxu0 0.0
        %5172 = vmatprep.subr.mxu0 0.0
        %5173 = vmatpush2.msra.mxu0 0.0
        %5174 = vmatprep.subr.mxu0 0.0
        %5175 = vmatpush2.msra.mxu0 0.0
        %5176 = vmatprep.subr.mxu0 0.0
        %5177 = vmatpush2.msra.mxu0 0.0
        %5178 = vmatprep.subr.mxu0 0.0
        %5179 = vmatpush2.msra.mxu0 0.0
        %5180 = vmatprep.subr.mxu0 0.0
        %5181 = vmatpush2.msra.mxu0 0.0
        %5182 = vmatprep.subr.mxu0 0.0
        %5183 = vmatpush2.msra.mxu0 0.0
        %5184 = vmatprep.subr.mxu0 0.0
        %5185 = vmatpush2.msra.mxu0 0.0
        %5186 = vmatprep.subr.mxu0 0.0
        %5187 = vmatpush2.msra.mxu0 0.0
        %5188 = vmatprep.subr.mxu0 0.0
        %5189 = vmatpush2.msra.mxu0 0.0
        %5190 = vmatprep.mubr.f32.mxu0 0.0
        %5191 = vmatmul.mubr.f32.gmra.mxu0 %v5118
        %v5192 = vpop.f32.mrf.mxu0
        %v5193 = vadd.f32 0.0, %v5192
        %v5194 = vpop.f32.mrf.mxu0
        %5195 = vmatprep.mubr.f32.mxu0 0.0
        %5196 = vmatmul.mubr.f32.gmra.mxu0 %v5121
        %v5197 = vpop.f32.mrf.mxu0
        %v5198 = vadd.f32 0.0, %v5197
        %v5199 = vpop.f32.mrf.mxu0
        %5200 = vdwg.mxu0
        %v5202 = vsel %vm4686, %v4849, 0
        %v5205 = vsel %vm4686, %v4851, 0
        %v5208 = vsel %vm4870, %v3979, 0
        %5210 = vmatprep.subr.mxu0 0.0
        %5211 = vmatpush1.msra.mxu0 0.0
        %5212 = vmatprep.subr.mxu0 0.0
        %5213 = vmatpush1.msra.mxu0 0.0
        %5214 = vmatprep.subr.mxu0 0.0
        %5215 = vmatpush1.msra.mxu0 0.0
        %5216 = vmatprep.subr.mxu0 0.0
        %5217 = vmatpush1.msra.mxu0 0.0
        %5218 = vmatprep.subr.mxu0 0.0
        %5219 = vmatpush1.msra.mxu0 0.0
        %5220 = vmatprep.subr.mxu0 0.0
        %5221 = vmatpush1.msra.mxu0 0.0
        %5222 = vmatprep.subr.mxu0 0.0
        %5223 = vmatpush1.msra.mxu0 0.0
        %5224 = vmatprep.subr.mxu0 0.0
        %5225 = vmatpush1.msra.mxu0 0.0
        %5226 = vmatprep.subr.mxu0 0.0
        %5227 = vmatpush1.msra.mxu0 0.0
        %5228 = vmatprep.subr.mxu0 0.0
        %5229 = vmatpush1.msra.mxu0 0.0
        %5230 = vmatprep.subr.mxu0 0.0
        %5231 = vmatpush1.msra.mxu0 0.0
        %5232 = vmatprep.subr.mxu0 0.0
        %5233 = vmatpush1.msra.mxu0 0.0
        %5234 = vmatprep.subr.mxu0 0.0
        %5235 = vmatpush1.msra.mxu0 0.0
        %5236 = vmatprep.subr.mxu0 0.0
        %5237 = vmatpush1.msra.mxu0 0.0
        %5238 = vmatprep.subr.mxu0 0.0
        %5239 = vmatpush1.msra.mxu0 %v5208
        %5240 = vmatprep.subr.mxu0 0.0
        %5241 = vmatpush1.msra.mxu0 %v3960
        %5242 = vmatprep.subr.mxu0 0.0
        %5243 = vmatpush2.msra.mxu0 0.0
        %5244 = vmatprep.subr.mxu0 0.0
        %5245 = vmatpush2.msra.mxu0 0.0
        %5246 = vmatprep.subr.mxu0 0.0
        %5247 = vmatpush2.msra.mxu0 0.0
        %5248 = vmatprep.subr.mxu0 0.0
        %5249 = vmatpush2.msra.mxu0 0.0
        %5250 = vmatprep.subr.mxu0 0.0
        %5251 = vmatpush2.msra.mxu0 0.0
        %5252 = vmatprep.subr.mxu0 0.0
        %5253 = vmatpush2.msra.mxu0 0.0
        %5254 = vmatprep.subr.mxu0 0.0
        %5255 = vmatpush2.msra.mxu0 0.0
        %5256 = vmatprep.subr.mxu0 0.0
        %5257 = vmatpush2.msra.mxu0 0.0
        %5258 = vmatprep.subr.mxu0 0.0
        %5259 = vmatpush2.msra.mxu0 0.0
        %5260 = vmatprep.subr.mxu0 0.0
        %5261 = vmatpush2.msra.mxu0 0.0
        %5262 = vmatprep.subr.mxu0 0.0
        %5263 = vmatpush2.msra.mxu0 0.0
        %5264 = vmatprep.subr.mxu0 0.0
        %5265 = vmatpush2.msra.mxu0 0.0
        %5266 = vmatprep.subr.mxu0 0.0
        %5267 = vmatpush2.msra.mxu0 0.0
        %5268 = vmatprep.subr.mxu0 0.0
        %5269 = vmatpush2.msra.mxu0 0.0
        %5270 = vmatprep.subr.mxu0 0.0
        %5271 = vmatpush2.msra.mxu0 0.0
        %5272 = vmatprep.subr.mxu0 0.0
        %5273 = vmatpush2.msra.mxu0 0.0
        %5274 = vmatprep.mubr.f32.mxu0 0.0
        %5275 = vmatmul.mubr.f32.gmra.mxu0 %v5202
        %v5276 = vpop.f32.mrf.mxu0
        %v5277 = vadd.f32 0.0, %v5276
        %v5278 = vpop.f32.mrf.mxu0
        %5279 = vmatprep.mubr.f32.mxu0 0.0
        %5280 = vmatmul.mubr.f32.gmra.mxu0 %v5205
        %v5281 = vpop.f32.mrf.mxu0
        %v5282 = vadd.f32 0.0, %v5281
        %v5283 = vpop.f32.mrf.mxu0
        %5284 = vdwg.mxu0
        %v5286 = vsel %vm4686, %v4853, 0
        %v5289 = vsel %vm4686, %v4855, 0
        %v5292 = vsel %vm4870, %v3987, 0
        %5294 = vmatprep.subr.mxu0 0.0
        %5295 = vmatpush1.msra.mxu0 0.0
        %5296 = vmatprep.subr.mxu0 0.0
        %5297 = vmatpush1.msra.mxu0 0.0
        %5298 = vmatprep.subr.mxu0 0.0
        %5299 = vmatpush1.msra.mxu0 0.0
        %5300 = vmatprep.subr.mxu0 0.0
        %5301 = vmatpush1.msra.mxu0 0.0
        %5302 = vmatprep.subr.mxu0 0.0
        %5303 = vmatpush1.msra.mxu0 0.0
        %5304 = vmatprep.subr.mxu0 0.0
        %5305 = vmatpush1.msra.mxu0 0.0
        %5306 = vmatprep.subr.mxu0 0.0
        %5307 = vmatpush1.msra.mxu0 0.0
        %5308 = vmatprep.subr.mxu0 0.0
        %5309 = vmatpush1.msra.mxu0 0.0
        %5310 = vmatprep.subr.mxu0 0.0
        %5311 = vmatpush1.msra.mxu0 0.0
        %5312 = vmatprep.subr.mxu0 0.0
        %5313 = vmatpush1.msra.mxu0 0.0
        %5314 = vmatprep.subr.mxu0 0.0
        %5315 = vmatpush1.msra.mxu0 0.0
        %5316 = vmatprep.subr.mxu0 0.0
        %5317 = vmatpush1.msra.mxu0 0.0
        %5318 = vmatprep.subr.mxu0 0.0
        %5319 = vmatpush1.msra.mxu0 0.0
        %5320 = vmatprep.subr.mxu0 0.0
        %5321 = vmatpush1.msra.mxu0 0.0
        %5322 = vmatprep.subr.mxu0 0.0
        %5323 = vmatpush1.msra.mxu0 %v5292
        %5324 = vmatprep.subr.mxu0 0.0
        %5325 = vmatpush1.msra.mxu0 %v3961
        %5326 = vmatprep.subr.mxu0 0.0
        %5327 = vmatpush2.msra.mxu0 0.0
        %5328 = vmatprep.subr.mxu0 0.0
        %5329 = vmatpush2.msra.mxu0 0.0
        %5330 = vmatprep.subr.mxu0 0.0
        %5331 = vmatpush2.msra.mxu0 0.0
        %5332 = vmatprep.subr.mxu0 0.0
        %5333 = vmatpush2.msra.mxu0 0.0
        %5334 = vmatprep.subr.mxu0 0.0
        %5335 = vmatpush2.msra.mxu0 0.0
        %5336 = vmatprep.subr.mxu0 0.0
        %5337 = vmatpush2.msra.mxu0 0.0
        %5338 = vmatprep.subr.mxu0 0.0
        %5339 = vmatpush2.msra.mxu0 0.0
        %5340 = vmatprep.subr.mxu0 0.0
        %5341 = vmatpush2.msra.mxu0 0.0
        %5342 = vmatprep.subr.mxu0 0.0
        %5343 = vmatpush2.msra.mxu0 0.0
        %5344 = vmatprep.subr.mxu0 0.0
        %5345 = vmatpush2.msra.mxu0 0.0
        %5346 = vmatprep.subr.mxu0 0.0
        %5347 = vmatpush2.msra.mxu0 0.0
        %5348 = vmatprep.subr.mxu0 0.0
        %5349 = vmatpush2.msra.mxu0 0.0
        %5350 = vmatprep.subr.mxu0 0.0
        %5351 = vmatpush2.msra.mxu0 0.0
        %5352 = vmatprep.subr.mxu0 0.0
        %5353 = vmatpush2.msra.mxu0 0.0
        %5354 = vmatprep.subr.mxu0 0.0
        %5355 = vmatpush2.msra.mxu0 0.0
        %5356 = vmatprep.subr.mxu0 0.0
        %5357 = vmatpush2.msra.mxu0 0.0
        %5358 = vmatprep.mubr.f32.mxu0 0.0
        %5359 = vmatmul.mubr.f32.gmra.mxu0 %v5286
        %v5360 = vpop.f32.mrf.mxu0
        %v5361 = vadd.f32 0.0, %v5360
        %v5362 = vpop.f32.mrf.mxu0
        %5363 = vmatprep.mubr.f32.mxu0 0.0
        %5364 = vmatmul.mubr.f32.gmra.mxu0 %v5289
        %v5365 = vpop.f32.mrf.mxu0
        %v5366 = vadd.f32 0.0, %v5365
        %v5367 = vpop.f32.mrf.mxu0
        %5368 = vdwg.mxu0
        %v5370 = vsel %vm4686, %v4857, 0
        %v5373 = vsel %vm4686, %v4859, 0
        %v5376 = vsel %vm4870, %v3986, 0
        %5378 = vmatprep.subr.mxu0 0.0
        %5379 = vmatpush1.msra.mxu0 0.0
        %5380 = vmatprep.subr.mxu0 0.0
        %5381 = vmatpush1.msra.mxu0 0.0
        %5382 = vmatprep.subr.mxu0 0.0
        %5383 = vmatpush1.msra.mxu0 0.0
        %5384 = vmatprep.subr.mxu0 0.0
        %5385 = vmatpush1.msra.mxu0 0.0
        %5386 = vmatprep.subr.mxu0 0.0
        %5387 = vmatpush1.msra.mxu0 0.0
        %5388 = vmatprep.subr.mxu0 0.0
        %5389 = vmatpush1.msra.mxu0 0.0
        %5390 = vmatprep.subr.mxu0 0.0
        %5391 = vmatpush1.msra.mxu0 0.0
        %5392 = vmatprep.subr.mxu0 0.0
        %5393 = vmatpush1.msra.mxu0 0.0
        %5394 = vmatprep.subr.mxu0 0.0
        %5395 = vmatpush1.msra.mxu0 0.0
        %5396 = vmatprep.subr.mxu0 0.0
        %5397 = vmatpush1.msra.mxu0 0.0
        %5398 = vmatprep.subr.mxu0 0.0
        %5399 = vmatpush1.msra.mxu0 0.0
        %5400 = vmatprep.subr.mxu0 0.0
        %5401 = vmatpush1.msra.mxu0 0.0
        %5402 = vmatprep.subr.mxu0 0.0
        %5403 = vmatpush1.msra.mxu0 0.0
        %5404 = vmatprep.subr.mxu0 0.0
        %5405 = vmatpush1.msra.mxu0 0.0
        %5406 = vmatprep.subr.mxu0 0.0
        %5407 = vmatpush1.msra.mxu0 %v5376
        %5408 = vmatprep.subr.mxu0 0.0
        %5409 = vmatpush1.msra.mxu0 %v3962
        %5410 = vmatprep.subr.mxu0 0.0
        %5411 = vmatpush2.msra.mxu0 0.0
        %5412 = vmatprep.subr.mxu0 0.0
        %5413 = vmatpush2.msra.mxu0 0.0
        %5414 = vmatprep.subr.mxu0 0.0
        %5415 = vmatpush2.msra.mxu0 0.0
        %5416 = vmatprep.subr.mxu0 0.0
        %5417 = vmatpush2.msra.mxu0 0.0
        %5418 = vmatprep.subr.mxu0 0.0
        %5419 = vmatpush2.msra.mxu0 0.0
        %5420 = vmatprep.subr.mxu0 0.0
        %5421 = vmatpush2.msra.mxu0 0.0
        %5422 = vmatprep.subr.mxu0 0.0
        %5423 = vmatpush2.msra.mxu0 0.0
        %5424 = vmatprep.subr.mxu0 0.0
        %5425 = vmatpush2.msra.mxu0 0.0
        %5426 = vmatprep.subr.mxu0 0.0
        %5427 = vmatpush2.msra.mxu0 0.0
        %5428 = vmatprep.subr.mxu0 0.0
        %5429 = vmatpush2.msra.mxu0 0.0
        %5430 = vmatprep.subr.mxu0 0.0
        %5431 = vmatpush2.msra.mxu0 0.0
        %5432 = vmatprep.subr.mxu0 0.0
        %5433 = vmatpush2.msra.mxu0 0.0
        %5434 = vmatprep.subr.mxu0 0.0
        %5435 = vmatpush2.msra.mxu0 0.0
        %5436 = vmatprep.subr.mxu0 0.0
        %5437 = vmatpush2.msra.mxu0 0.0
        %5438 = vmatprep.subr.mxu0 0.0
        %5439 = vmatpush2.msra.mxu0 0.0
        %5440 = vmatprep.subr.mxu0 0.0
        %5441 = vmatpush2.msra.mxu0 0.0
        %5442 = vmatprep.mubr.f32.mxu0 0.0
        %5443 = vmatmul.mubr.f32.gmra.mxu0 %v5370
        %v5444 = vpop.f32.mrf.mxu0
        %v5445 = vadd.f32 0.0, %v5444
        %v5446 = vpop.f32.mrf.mxu0
        %5447 = vmatprep.mubr.f32.mxu0 0.0
        %5448 = vmatmul.mubr.f32.gmra.mxu0 %v5373
        %v5449 = vpop.f32.mrf.mxu0
        %v5450 = vadd.f32 0.0, %v5449
        %v5451 = vpop.f32.mrf.mxu0
        %5452 = vdwg.mxu0
        %v5454 = vsel %vm4686, %v4861, 0
        %v5457 = vsel %vm4686, %v4863, 0
        %v5460 = vsel %vm4870, %v3988, 0
        %5462 = vmatprep.subr.mxu0 0.0
        %5463 = vmatpush1.msra.mxu0 0.0
        %5464 = vmatprep.subr.mxu0 0.0
        %5465 = vmatpush1.msra.mxu0 0.0
        %5466 = vmatprep.subr.mxu0 0.0
        %5467 = vmatpush1.msra.mxu0 0.0
        %5468 = vmatprep.subr.mxu0 0.0
        %5469 = vmatpush1.msra.mxu0 0.0
        %5470 = vmatprep.subr.mxu0 0.0
        %5471 = vmatpush1.msra.mxu0 0.0
        %5472 = vmatprep.subr.mxu0 0.0
        %5473 = vmatpush1.msra.mxu0 0.0
        %5474 = vmatprep.subr.mxu0 0.0
        %5475 = vmatpush1.msra.mxu0 0.0
        %5476 = vmatprep.subr.mxu0 0.0
        %5477 = vmatpush1.msra.mxu0 0.0
        %5478 = vmatprep.subr.mxu0 0.0
        %5479 = vmatpush1.msra.mxu0 0.0
        %5480 = vmatprep.subr.mxu0 0.0
        %5481 = vmatpush1.msra.mxu0 0.0
        %5482 = vmatprep.subr.mxu0 0.0
        %5483 = vmatpush1.msra.mxu0 0.0
        %5484 = vmatprep.subr.mxu0 0.0
        %5485 = vmatpush1.msra.mxu0 0.0
        %5486 = vmatprep.subr.mxu0 0.0
        %5487 = vmatpush1.msra.mxu0 0.0
        %5488 = vmatprep.subr.mxu0 0.0
        %5489 = vmatpush1.msra.mxu0 0.0
        %5490 = vmatprep.subr.mxu0 0.0
        %5491 = vmatpush1.msra.mxu0 %v5460
        %5492 = vmatprep.subr.mxu0 0.0
        %5493 = vmatpush1.msra.mxu0 %v3963
        %5494 = vmatprep.subr.mxu0 0.0
        %5495 = vmatpush2.msra.mxu0 0.0
        %5496 = vmatprep.subr.mxu0 0.0
        %5497 = vmatpush2.msra.mxu0 0.0
        %5498 = vmatprep.subr.mxu0 0.0
        %5499 = vmatpush2.msra.mxu0 0.0
        %5500 = vmatprep.subr.mxu0 0.0
        %5501 = vmatpush2.msra.mxu0 0.0
        %5502 = vmatprep.subr.mxu0 0.0
        %5503 = vmatpush2.msra.mxu0 0.0
        %5504 = vmatprep.subr.mxu0 0.0
        %5505 = vmatpush2.msra.mxu0 0.0
        %5506 = vmatprep.subr.mxu0 0.0
        %5507 = vmatpush2.msra.mxu0 0.0
        %5508 = vmatprep.subr.mxu0 0.0
        %5509 = vmatpush2.msra.mxu0 0.0
        %5510 = vmatprep.subr.mxu0 0.0
        %5511 = vmatpush2.msra.mxu0 0.0
        %5512 = vmatprep.subr.mxu0 0.0
        %5513 = vmatpush2.msra.mxu0 0.0
        %5514 = vmatprep.subr.mxu0 0.0
        %5515 = vmatpush2.msra.mxu0 0.0
        %5516 = vmatprep.subr.mxu0 0.0
        %5517 = vmatpush2.msra.mxu0 0.0
        %5518 = vmatprep.subr.mxu0 0.0
        %5519 = vmatpush2.msra.mxu0 0.0
        %5520 = vmatprep.subr.mxu0 0.0
        %5521 = vmatpush2.msra.mxu0 0.0
        %5522 = vmatprep.subr.mxu0 0.0
        %5523 = vmatpush2.msra.mxu0 0.0
        %5524 = vmatprep.subr.mxu0 0.0
        %5525 = vmatpush2.msra.mxu0 0.0
        %5526 = vmatprep.mubr.f32.mxu0 0.0
        %5527 = vmatmul.mubr.f32.gmra.mxu0 %v5454
        %v5528 = vpop.f32.mrf.mxu0
        %v5529 = vadd.f32 0.0, %v5528
        %v5530 = vpop.f32.mrf.mxu0
        %5531 = vmatprep.mubr.f32.mxu0 0.0
        %5532 = vmatmul.mubr.f32.gmra.mxu0 %v5457
        %v5533 = vpop.f32.mrf.mxu0
        %v5534 = vadd.f32 0.0, %v5533
        %v5535 = vpop.f32.mrf.mxu0
        %5536 = vdwg.mxu0
        %v5537 = vcombine.low %v4941, %v5109
        %v5538 = vcombine.high %v4941, %v5109
        %v5540 = vunpack.c.l.s4 1983009808
        %v5541 = vunpack.c.0.s8 %v5540
        %v5542 = vlaneseq
        %v5543 = vshrl.u32 %v5542, 7
        %v5544 = vsub.s32 %v5541, %v5543
        %v5545 = vrot.slane %v5537, %v5544
        %v5547 = vunpack.c.l.s4 1983009808
        %v5548 = vunpack.c.0.s8 %v5547
        %v5549 = vlaneseq
        %v5550 = vshrl.u32 %v5549, 7
        %v5551 = vsub.s32 %v5548, %v5550
        %v5552 = vrot.slane %v5538, %v5551
        %v5553 = vcombine.low %v5025, %v5193
        %v5554 = vcombine.high %v5025, %v5193
        %v5556 = vunpack.c.l.s4 1983009808
        %v5557 = vunpack.c.0.s8 %v5556
        %v5558 = vlaneseq
        %v5559 = vshrl.u32 %v5558, 7
        %v5560 = vsub.s32 %v5557, %v5559
        %v5561 = vrot.slane %v5553, %v5560
        %v5563 = vunpack.c.l.s4 1983009808
        %v5564 = vunpack.c.0.s8 %v5563
        %v5565 = vlaneseq
        %v5566 = vshrl.u32 %v5565, 7
        %v5567 = vsub.s32 %v5564, %v5566
        %v5568 = vrot.slane %v5554, %v5567
        %v5569 = vcombine.low %v5545, %v5561
        %v5570 = vcombine.high %v5545, %v5561
        %v5572 = vunpack.c.l.s4 1934713408
        %v5573 = vunpack.c.0.s8 %v5572
        %v5574 = vlaneseq
        %v5575 = vshrl.u32 %v5574, 7
        %v5576 = vsub.s32 %v5573, %v5575
        %v5577 = vrot.slane %v5569, %v5576
        %v5579 = vunpack.c.l.s4 1934713408
        %v5580 = vunpack.c.0.s8 %v5579
        %v5581 = vlaneseq
        %v5582 = vshrl.u32 %v5581, 7
        %v5583 = vsub.s32 %v5580, %v5582
        %v5584 = vrot.slane %v5570, %v5583
        %v5585 = vcombine.low %v5552, %v5568
        %v5586 = vcombine.high %v5552, %v5568
        %v5588 = vunpack.c.l.s4 1934713408
        %v5589 = vunpack.c.0.s8 %v5588
        %v5590 = vlaneseq
        %v5591 = vshrl.u32 %v5590, 7
        %v5592 = vsub.s32 %v5589, %v5591
        %v5593 = vrot.slane %v5585, %v5592
        %v5595 = vunpack.c.l.s4 1934713408
        %v5596 = vunpack.c.0.s8 %v5595
        %v5597 = vlaneseq
        %v5598 = vshrl.u32 %v5597, 7
        %v5599 = vsub.s32 %v5596, %v5598
        %v5600 = vrot.slane %v5586, %v5599
        %v5601 = vcombine.high %v5577, 0.0
        %v5602 = vcombine.high %v5584, 0.0
        %v5603 = vcombine.high %v5593, 0.0
        %v5604 = vcombine.high %v5600, 0.0
        %v5605 = vcombine.low %v4946, %v5114
        %v5607 = vunpack.c.l.s4 1983009808
        %v5608 = vunpack.c.0.s8 %v5607
        %v5609 = vlaneseq
        %v5610 = vshrl.u32 %v5609, 7
        %v5611 = vsub.s32 %v5608, %v5610
        %v5612 = vrot.slane %v5605, %v5611
        %v5613 = vcombine.low %v5030, %v5198
        %v5615 = vunpack.c.l.s4 1983009808
        %v5616 = vunpack.c.0.s8 %v5615
        %v5617 = vlaneseq
        %v5618 = vshrl.u32 %v5617, 7
        %v5619 = vsub.s32 %v5616, %v5618
        %v5620 = vrot.slane %v5613, %v5619
        %v5621 = vcombine.low %v5612, %v5620
        %v5623 = vunpack.c.l.s4 1934713408
        %v5624 = vunpack.c.0.s8 %v5623
        %v5625 = vlaneseq
        %v5626 = vshrl.u32 %v5625, 7
        %v5627 = vsub.s32 %v5624, %v5626
        %v5628 = vrot.slane %v5621, %v5627
        %v5629 = vcombine.low %v5277, %v5445
        %v5630 = vcombine.high %v5277, %v5445
        %v5632 = vunpack.c.l.s4 1983009808
        %v5633 = vunpack.c.0.s8 %v5632
        %v5634 = vlaneseq
        %v5635 = vshrl.u32 %v5634, 7
        %v5636 = vsub.s32 %v5633, %v5635
        %v5637 = vrot.slane %v5629, %v5636
        %v5639 = vunpack.c.l.s4 1983009808
        %v5640 = vunpack.c.0.s8 %v5639
        %v5641 = vlaneseq
        %v5642 = vshrl.u32 %v5641, 7
        %v5643 = vsub.s32 %v5640, %v5642
        %v5644 = vrot.slane %v5630, %v5643
        %v5645 = vcombine.low %v5361, %v5529
        %v5646 = vcombine.high %v5361, %v5529
        %v5648 = vunpack.c.l.s4 1983009808
        %v5649 = vunpack.c.0.s8 %v5648
        %v5650 = vlaneseq
        %v5651 = vshrl.u32 %v5650, 7
        %v5652 = vsub.s32 %v5649, %v5651
        %v5653 = vrot.slane %v5645, %v5652
        %v5655 = vunpack.c.l.s4 1983009808
        %v5656 = vunpack.c.0.s8 %v5655
        %v5657 = vlaneseq
        %v5658 = vshrl.u32 %v5657, 7
        %v5659 = vsub.s32 %v5656, %v5658
        %v5660 = vrot.slane %v5646, %v5659
        %v5661 = vcombine.low %v5637, %v5653
        %v5662 = vcombine.high %v5637, %v5653
        %v5664 = vunpack.c.l.s4 1934713408
        %v5665 = vunpack.c.0.s8 %v5664
        %v5666 = vlaneseq
        %v5667 = vshrl.u32 %v5666, 7
        %v5668 = vsub.s32 %v5665, %v5667
        %v5669 = vrot.slane %v5661, %v5668
        %v5671 = vunpack.c.l.s4 1934713408
        %v5672 = vunpack.c.0.s8 %v5671
        %v5673 = vlaneseq
        %v5674 = vshrl.u32 %v5673, 7
        %v5675 = vsub.s32 %v5672, %v5674
        %v5676 = vrot.slane %v5662, %v5675
        %v5677 = vcombine.low %v5644, %v5660
        %v5678 = vcombine.high %v5644, %v5660
        %v5680 = vunpack.c.l.s4 1934713408
        %v5681 = vunpack.c.0.s8 %v5680
        %v5682 = vlaneseq
        %v5683 = vshrl.u32 %v5682, 7
        %v5684 = vsub.s32 %v5681, %v5683
        %v5685 = vrot.slane %v5677, %v5684
        %v5687 = vunpack.c.l.s4 1934713408
        %v5688 = vunpack.c.0.s8 %v5687
        %v5689 = vlaneseq
        %v5690 = vshrl.u32 %v5689, 7
        %v5691 = vsub.s32 %v5688, %v5690
        %v5692 = vrot.slane %v5678, %v5691
        %v5693 = vcombine.high %v5669, 0.0
        %v5694 = vcombine.high %v5676, 0.0
        %v5695 = vcombine.high %v5685, 0.0
        %v5696 = vcombine.low %v5282, %v5450
        %v5698 = vunpack.c.l.s4 1983009808
        %v5699 = vunpack.c.0.s8 %v5698
        %v5700 = vlaneseq
        %v5701 = vshrl.u32 %v5700, 7
        %v5702 = vsub.s32 %v5699, %v5701
        %v5703 = vrot.slane %v5696, %v5702
        %v5704 = vcombine.low %v5366, %v5534
        %v5706 = vunpack.c.l.s4 1983009808
        %v5707 = vunpack.c.0.s8 %v5706
        %v5708 = vlaneseq
        %v5709 = vshrl.u32 %v5708, 7
        %v5710 = vsub.s32 %v5707, %v5709
        %v5711 = vrot.slane %v5704, %v5710
        %v5712 = vcombine.low %v5703, %v5711
        %v5713 = vcombine.low %v5577, %v5584
        %v5715 = vunpack.c.l.s4 1983009808
        %v5716 = vunpack.c.0.s8 %v5715
        %v5717 = vlaneseq
        %v5718 = vshrl.u32 %v5717, 7
        %v5719 = vsub.s32 %v5716, %v5718
        %v5720 = vrot.slane %v5713, %v5719
        %v5721 = vcombine.low %v5601, %v5602
        %v5723 = vunpack.c.l.s4 1983009808
        %v5724 = vunpack.c.0.s8 %v5723
        %v5725 = vlaneseq
        %v5726 = vshrl.u32 %v5725, 7
        %v5727 = vsub.s32 %v5724, %v5726
        %v5728 = vrot.slane %v5721, %v5727
        %v5729 = vcombine.low %v5593, %v5600
        %v5731 = vunpack.c.l.s4 1983009808
        %v5732 = vunpack.c.0.s8 %v5731
        %v5733 = vlaneseq
        %v5734 = vshrl.u32 %v5733, 7
        %v5735 = vsub.s32 %v5732, %v5734
        %v5736 = vrot.slane %v5729, %v5735
        %v5737 = vcombine.low %v5603, %v5604
        %v5739 = vunpack.c.l.s4 1983009808
        %v5740 = vunpack.c.0.s8 %v5739
        %v5741 = vlaneseq
        %v5742 = vshrl.u32 %v5741, 7
        %v5743 = vsub.s32 %v5740, %v5742
        %v5744 = vrot.slane %v5737, %v5743
        %v5745 = vcombine.low %v5720, %v5728
        %v5746 = vcombine.high %v5720, %v5728
        %v5748 = vunpack.c.l.s4 1934713408
        %v5749 = vunpack.c.0.s8 %v5748
        %v5750 = vlaneseq
        %v5751 = vshrl.u32 %v5750, 7
        %v5752 = vsub.s32 %v5749, %v5751
        %v5753 = vrot.slane %v5745, %v5752
        %v5755 = vunpack.c.l.s4 1934713408
        %v5756 = vunpack.c.0.s8 %v5755
        %v5757 = vlaneseq
        %v5758 = vshrl.u32 %v5757, 7
        %v5759 = vsub.s32 %v5756, %v5758
        %v5760 = vrot.slane %v5746, %v5759
        %v5761 = vcombine.low %v5736, %v5744
        %v5762 = vcombine.high %v5736, %v5744
        %v5764 = vunpack.c.l.s4 1934713408
        %v5765 = vunpack.c.0.s8 %v5764
        %v5766 = vlaneseq
        %v5767 = vshrl.u32 %v5766, 7
        %v5768 = vsub.s32 %v5765, %v5767
        %v5769 = vrot.slane %v5761, %v5768
        %v5771 = vunpack.c.l.s4 1934713408
        %v5772 = vunpack.c.0.s8 %v5771
        %v5773 = vlaneseq
        %v5774 = vshrl.u32 %v5773, 7
        %v5775 = vsub.s32 %v5772, %v5774
        %v5776 = vrot.slane %v5762, %v5775
        %v5777 = vcombine.low %v5753, %v5769
        %v5778 = vcombine.high %v5753, %v5769
        %v5779 = vcombine.low %v5760, %v5776
        %v5780 = vcombine.high %v5760, %v5776
        %v5781 = vcombine.low %v5628, %v5693
        %v5783 = vunpack.c.l.s4 1983009808
        %v5784 = vunpack.c.0.s8 %v5783
        %v5785 = vlaneseq
        %v5786 = vshrl.u32 %v5785, 7
        %v5787 = vsub.s32 %v5784, %v5786
        %v5788 = vrot.slane %v5781, %v5787
        %v5789 = vcombine.low %v5669, %v5676
        %v5791 = vunpack.c.l.s4 1983009808
        %v5792 = vunpack.c.0.s8 %v5791
        %v5793 = vlaneseq
        %v5794 = vshrl.u32 %v5793, 7
        %v5795 = vsub.s32 %v5792, %v5794
        %v5796 = vrot.slane %v5789, %v5795
        %v5797 = vcombine.low %v5694, %v5695
        %v5799 = vunpack.c.l.s4 1983009808
        %v5800 = vunpack.c.0.s8 %v5799
        %v5801 = vlaneseq
        %v5802 = vshrl.u32 %v5801, 7
        %v5803 = vsub.s32 %v5800, %v5802
        %v5804 = vrot.slane %v5797, %v5803
        %v5805 = vcombine.low %v5685, %v5692
        %v5807 = vunpack.c.l.s4 1983009808
        %v5808 = vunpack.c.0.s8 %v5807
        %v5809 = vlaneseq
        %v5810 = vshrl.u32 %v5809, 7
        %v5811 = vsub.s32 %v5808, %v5810
        %v5812 = vrot.slane %v5805, %v5811
        %v5813 = vcombine.low %v5788, %v5796
        %v5814 = vcombine.high %v5788, %v5796
        %v5816 = vunpack.c.l.s4 1934713408
        %v5817 = vunpack.c.0.s8 %v5816
        %v5818 = vlaneseq
        %v5819 = vshrl.u32 %v5818, 7
        %v5820 = vsub.s32 %v5817, %v5819
        %v5821 = vrot.slane %v5813, %v5820
        %v5823 = vunpack.c.l.s4 1934713408
        %v5824 = vunpack.c.0.s8 %v5823
        %v5825 = vlaneseq
        %v5826 = vshrl.u32 %v5825, 7
        %v5827 = vsub.s32 %v5824, %v5826
        %v5828 = vrot.slane %v5814, %v5827
        %v5829 = vcombine.low %v5804, %v5812
        %v5830 = vcombine.high %v5804, %v5812
        %v5832 = vunpack.c.l.s4 1934713408
        %v5833 = vunpack.c.0.s8 %v5832
        %v5834 = vlaneseq
        %v5835 = vshrl.u32 %v5834, 7
        %v5836 = vsub.s32 %v5833, %v5835
        %v5837 = vrot.slane %v5829, %v5836
        %v5839 = vunpack.c.l.s4 1934713408
        %v5840 = vunpack.c.0.s8 %v5839
        %v5841 = vlaneseq
        %v5842 = vshrl.u32 %v5841, 7
        %v5843 = vsub.s32 %v5840, %v5842
        %v5844 = vrot.slane %v5830, %v5843
        %v5845 = vcombine.low %v5821, %v5837
        %v5846 = vcombine.high %v5821, %v5837
        %v5847 = vcombine.low %v5828, %v5844
        %v5848 = vcombine.high %v5828, %v5844
        %v5849 = vcombine.high %v5692, 0.0
        %v5851 = vunpack.c.l.s4 1983009808
        %v5852 = vunpack.c.0.s8 %v5851
        %v5853 = vlaneseq
        %v5854 = vshrl.u32 %v5853, 7
        %v5855 = vsub.s32 %v5852, %v5854
        %v5856 = vrot.slane %v5849, %v5855
        %v5858 = vunpack.c.l.s4 1934713408
        %v5859 = vunpack.c.0.s8 %v5858
        %v5860 = vlaneseq
        %v5861 = vshrl.u32 %v5860, 7
        %v5862 = vsub.s32 %v5859, %v5861
        %v5863 = vrot.slane %v5712, %v5862
        %v5865 = vunpack.c.l.s4 1983009808
        %v5866 = vunpack.c.0.s8 %v5865
        %v5867 = vlaneseq
        %v5868 = vshrl.u32 %v5867, 7
        %v5869 = vsub.s32 %v5866, %v5868
        %v5870 = vrot.slane %v5863, %v5869
        %v5871 = vcombine.low %v5856, %v5870
        %v5872 = vcombine.high %v5856, %v5870
        %v5874 = vunpack.c.l.s4 1934713408
        %v5875 = vunpack.c.0.s8 %v5874
        %v5876 = vlaneseq
        %v5877 = vshrl.u32 %v5876, 7
        %v5878 = vsub.s32 %v5875, %v5877
        %v5879 = vrot.slane %v5871, %v5878
        %v5881 = vunpack.c.l.s4 1934713408
        %v5882 = vunpack.c.0.s8 %v5881
        %v5883 = vlaneseq
        %v5884 = vshrl.u32 %v5883, 7
        %v5885 = vsub.s32 %v5882, %v5884
        %v5886 = vrot.slane %v5872, %v5885
        %v5887 = vcombine.high %v5879, 0.0
        %v5888 = vcombine.high %v5886, 0.0
        %5892 = vrot.lane.b32.xlu0 %v5778, 8
        %v5893 = vpop.permute.xlu0 %5892
        %5894 = vrot.lane.b32.xlu0 %v5846, 8
        %v5895 = vpop.permute.xlu0 %5894
        %5896 = vrot.lane.b32.xlu0 %v5887, 8
        %v5897 = vpop.permute.xlu0 %5896
        %5904 = vrot.lane.b32.xlu0 %v5779, 16
        %v5905 = vpop.permute.xlu0 %5904
        %5906 = vrot.lane.b32.xlu0 %v5847, 16
        %v5907 = vpop.permute.xlu0 %5906
        %5908 = vrot.lane.b32.xlu0 %v5886, 16
        %v5909 = vpop.permute.xlu0 %5908
        %5916 = vrot.lane.b32.xlu0 %v5780, 24
        %v5917 = vpop.permute.xlu0 %5916
        %5918 = vrot.lane.b32.xlu0 %v5848, 24
        %v5919 = vpop.permute.xlu0 %5918
        %5920 = vrot.lane.b32.xlu0 %v5888, 24
        %v5921 = vpop.permute.xlu0 %5920
        %v5925 = vsel %vm3989, %v5777, %v5893
        %v5926 = vsel %vm3989, %v5845, %v5895
        %v5927 = vsel %vm3989, %v5879, %v5897
        %vm5928 = vcmask 130048
        %v5929 = vsel %vm5928, %v5925, %v5905
        %v5930 = vsel %vm5928, %v5926, %v5907
        %v5931 = vsel %vm5928, %v5927, %v5909
        %vm5932 = vcmask 195584
        %v5933 = vsel %vm5932, %v5929, %v5917
        %v5934 = vsel %vm5932, %v5930, %v5919
        %v5935 = vsel %vm5932, %v5931, %v5921
        %v5936 = vld [vmem:[%s932] sm:$0xff]
        %v5937 = vld [vmem:[%s932 + $0x8] sm:$0xff]
        %v5938 = vld [vmem:[%s932 + $0x10] sm:$0xff]
        %v5939 = vld [vmem:[%s932 + $0x18] sm:$0xff]
        %v5940 = vld [vmem:[%s935] sm:$0x1]
        %v5942 = vlaneseq
        %v5943 = vshrl.u32 %v5942, 7
        %v5944 = vsub.s32 0, %v5943
        %v5945 = vrot.slane %v5940, %v5944
        %v5948 = vsel %vm2238, %v5933, 0
        %v5951 = vsel %vm2238, %v5934, 0
        %v5954 = vsel %vm2238, %v5935, 0
        %5956 = vmatprep.subr.mxu0 0.0
        %5957 = vmatpush1.msra.mxu0 0.0
        %5958 = vmatprep.subr.mxu0 0.0
        %5959 = vmatpush1.msra.mxu0 0.0
        %5960 = vmatprep.subr.mxu0 0.0
        %5961 = vmatpush1.msra.mxu0 0.0
        %5962 = vmatprep.subr.mxu0 0.0
        %5963 = vmatpush1.msra.mxu0 0.0
        %5964 = vmatprep.subr.mxu0 0.0
        %5965 = vmatpush1.msra.mxu0 0.0
        %5966 = vmatprep.subr.mxu0 0.0
        %5967 = vmatpush1.msra.mxu0 0.0
        %5968 = vmatprep.subr.mxu0 0.0
        %5969 = vmatpush1.msra.mxu0 0.0
        %5970 = vmatprep.subr.mxu0 0.0
        %5971 = vmatpush1.msra.mxu0 0.0
        %5972 = vmatprep.subr.mxu0 0.0
        %5973 = vmatpush1.msra.mxu0 0.0
        %5974 = vmatprep.subr.mxu0 0.0
        %5975 = vmatpush1.msra.mxu0 0.0
        %5976 = vmatprep.subr.mxu0 0.0
        %5977 = vmatpush1.msra.mxu0 0.0
        %5978 = vmatprep.subr.mxu0 0.0
        %5979 = vmatpush1.msra.mxu0 0.0
        %5980 = vmatprep.subr.mxu0 0.0
        %5981 = vmatpush1.msra.mxu0 %v5939
        %5982 = vmatprep.subr.mxu0 0.0
        %5983 = vmatpush1.msra.mxu0 %v5938
        %5984 = vmatprep.subr.mxu0 0.0
        %5985 = vmatpush1.msra.mxu0 %v5937
        %5986 = vmatprep.subr.mxu0 0.0
        %5987 = vmatpush1.msra.mxu0 %v5936
        %5988 = vmatprep.subr.mxu0 0.0
        %5989 = vmatpush2.msra.mxu0 0.0
        %5990 = vmatprep.subr.mxu0 0.0
        %5991 = vmatpush2.msra.mxu0 0.0
        %5992 = vmatprep.subr.mxu0 0.0
        %5993 = vmatpush2.msra.mxu0 0.0
        %5994 = vmatprep.subr.mxu0 0.0
        %5995 = vmatpush2.msra.mxu0 0.0
        %5996 = vmatprep.subr.mxu0 0.0
        %5997 = vmatpush2.msra.mxu0 0.0
        %5998 = vmatprep.subr.mxu0 0.0
        %5999 = vmatpush2.msra.mxu0 0.0
        %6000 = vmatprep.subr.mxu0 0.0
        %6001 = vmatpush2.msra.mxu0 0.0
        %6002 = vmatprep.subr.mxu0 0.0
        %6003 = vmatpush2.msra.mxu0 0.0
        %6004 = vmatprep.subr.mxu0 0.0
        %6005 = vmatpush2.msra.mxu0 0.0
        %6006 = vmatprep.subr.mxu0 0.0
        %6007 = vmatpush2.msra.mxu0 0.0
        %6008 = vmatprep.subr.mxu0 0.0
        %6009 = vmatpush2.msra.mxu0 0.0
        %6010 = vmatprep.subr.mxu0 0.0
        %6011 = vmatpush2.msra.mxu0 0.0
        %6012 = vmatprep.subr.mxu0 0.0
        %6013 = vmatpush2.msra.mxu0 0.0
        %6014 = vmatprep.subr.mxu0 0.0
        %6015 = vmatpush2.msra.mxu0 0.0
        %6016 = vmatprep.subr.mxu0 0.0
        %6017 = vmatpush2.msra.mxu0 0.0
        %6018 = vmatprep.subr.mxu0 0.0
        %6019 = vmatpush2.msra.mxu0 0.0
        %6020 = vmatprep.mubr.f32.mxu0 0.0
        %6021 = vmatmul.mubr.f32.gmra.mxu0 %v5948
        %v6022 = vpop.f32.mrf.mxu0
        %v6023 = vadd.f32 %v5945, %v6022
        %v6024 = vpop.f32.mrf.mxu0
        %6025 = vmatprep.mubr.f32.mxu0 0.0
        %6026 = vmatmul.mubr.f32.gmra.mxu0 %v5951
        %v6027 = vpop.f32.mrf.mxu0
        %v6028 = vadd.f32 %v5945, %v6027
        %v6029 = vpop.f32.mrf.mxu0
        %6030 = vmatprep.mubr.f32.mxu0 0.0
        %6031 = vmatmul.mubr.f32.gmra.mxu0 %v5954
        %v6032 = vpop.f32.mrf.mxu0
        %v6033 = vadd.f32 %v5945, %v6032
        %v6034 = vpop.f32.mrf.mxu0
        %6035 = vdwg.mxu0
        %v6039 = vadd.f32 %v6023, %v2173
        %v6040 = vadd.f32 %v6028, %v2222
        %v6041 = vadd.f32 %v6033, %v2237
        %v6042 = vld [vmem:[%s938] sm:$0x1]
        %v6043 = vld [vmem:[%s941] sm:$0x1]
        %v6044 = vsel %vm2238, %v6039, 0.0
        %6045 = vadd.xlane.f32.xlu0 %v6044
        %v6046 = vpop.xlane.xlu0 %6045
        %v6047 = vsel %vm2238, %v6040, 0.0
        %6048 = vadd.xlane.f32.xlu0 %v6047
        %v6049 = vpop.xlane.xlu0 %6048
        %vm6050 = vcmask 254976
        %v6051 = vsel %vm6050, %v6041, 0.0
        %6052 = vadd.xlane.f32.xlu0 %v6051
        %v6053 = vpop.xlane.xlu0 %6052
        %v6054 = vrcp.pop 32.0
        %v6055 = vmul.f32 %v6046, %v6054
        %v6056 = vmul.f32 %v6049, %v6054
        %v6057 = vmul.f32 %v6053, %v6054
        %v6058 = vsub.f32 %v6039, %v6055
        %v6059 = vsub.f32 %v6040, %v6056
        %v6060 = vsub.f32 %v6041, %v6057
        %v6061 = vmul.f32 %v6058, %v6058
        %v6062 = vmul.f32 %v6059, %v6059
        %v6063 = vmul.f32 %v6060, %v6060
        %v6064 = vsel %vm2238, %v6061, 0.0
        %6065 = vadd.xlane.f32.xlu0 %v6064
        %v6066 = vpop.xlane.xlu0 %6065
        %v6067 = vsel %vm2238, %v6062, 0.0
        %6068 = vadd.xlane.f32.xlu0 %v6067
        %v6069 = vpop.xlane.xlu0 %6068
        %v6070 = vsel %vm6050, %v6063, 0.0
        %6071 = vadd.xlane.f32.xlu0 %v6070
        %v6072 = vpop.xlane.xlu0 %6071
        %v6073 = vmul.f32 %v6066, %v6054
        %v6074 = vmul.f32 %v6069, %v6054
        %v6075 = vmul.f32 %v6072, %v6054
        %v6076 = vadd.f32 %v6073, 1e-12
        %v6077 = vadd.f32 %v6074, 1e-12
        %v6078 = vadd.f32 %v6075, 1e-12
        %v6079 = vrsqrt.pop %v6076
        %v6080 = vrsqrt.pop %v6077
        %v6081 = vrsqrt.pop %v6078
        %v6082 = vmul.f32 %v6058, %v6079
        %v6083 = vmul.f32 %v6059, %v6080
        %v6084 = vmul.f32 %v6060, %v6081
        %v6086 = vlaneseq
        %v6087 = vshrl.u32 %v6086, 7
        %v6088 = vsub.s32 0, %v6087
        %v6089 = vrot.slane %v6042, %v6088
        %v6091 = vmul.f32 %v6082, %v6089
        %v6092 = vmul.f32 %v6083, %v6089
        %v6093 = vmul.f32 %v6084, %v6089
        %v6095 = vlaneseq
        %v6096 = vshrl.u32 %v6095, 7
        %v6097 = vsub.s32 0, %v6096
        %v6098 = vrot.slane %v6043, %v6097
        %v6100 = vadd.f32 %v6091, %v6098
        %v6101 = vadd.f32 %v6092, %v6098
        %v6102 = vadd.f32 %v6093, %v6098
        %6103 = vst.msk [vmem:[#allocation2] sm:$0xff] %vm2238, %v6100
        %6104 = vst.msk [vmem:[#allocation2 + $0x8] sm:$0xff] %vm2238, %v6101
        %6105 = vst.msk [vmem:[#allocation2 + $0x10] sm:$0x3] %vm6050, %v6102
        %6106 = vst.msk [vmem:[#allocation3] sm:$0xff] %vm2238, 0.0
        %6107 = vst.msk [vmem:[#allocation3 + $0x8] sm:$0xff] %vm2238, 0.0
        %6108 = vst.msk [vmem:[#allocation3 + $0x10] sm:$0x3] %vm6050, 0.0
      $region108: #{tpu_custom_call.1} parent=103 // pred_fallthru
        _
      %v6109 = vld [vmem:[#allocation2] sm:$0xff]
      %v6110 = vld [vmem:[#allocation2 + $0x8] sm:$0xff]
      %v6111 = vld [vmem:[#allocation2 + $0x10] sm:$0x3]
      %v6112 = vld [vmem:[%s949] sm:$0xff]
      %v6113 = vld [vmem:[%s949 + $0x8] sm:$0xff]
      %v6114 = vld [vmem:[%s949 + $0x10] sm:$0xff]
      %v6115 = vld [vmem:[%s949 + $0x18] sm:$0xff]
      %v6116 = vld [vmem:[%s955] sm:$0x1]
      %v6118 = vlaneseq
      %v6119 = vshrl.u32 %v6118, 7
      %v6120 = vsub.s32 0, %v6119
      %v6121 = vrot.slane %v6116, %v6120
      %vm6123 = vcmask 261120
      %v6125 = vsel %vm6123, %v6109, 0
      %v6128 = vsel %vm6123, %v6110, 0
      %v6131 = vsel %vm6123, %v6111, 0
      %6133 = vmatprep.subr.mxu0 0.0
      %6134 = vmatpush1.msra.mxu0 0.0
      %6135 = vmatprep.subr.mxu0 0.0
      %6136 = vmatpush1.msra.mxu0 0.0
      %6137 = vmatprep.subr.mxu0 0.0
      %6138 = vmatpush1.msra.mxu0 0.0
      %6139 = vmatprep.subr.mxu0 0.0
      %6140 = vmatpush1.msra.mxu0 0.0
      %6141 = vmatprep.subr.mxu0 0.0
      %6142 = vmatpush1.msra.mxu0 0.0
      %6143 = vmatprep.subr.mxu0 0.0
      %6144 = vmatpush1.msra.mxu0 0.0
      %6145 = vmatprep.subr.mxu0 0.0
      %6146 = vmatpush1.msra.mxu0 0.0
      %6147 = vmatprep.subr.mxu0 0.0
      %6148 = vmatpush1.msra.mxu0 0.0
      %6149 = vmatprep.subr.mxu0 0.0
      %6150 = vmatpush1.msra.mxu0 0.0
      %6151 = vmatprep.subr.mxu0 0.0
      %6152 = vmatpush1.msra.mxu0 0.0
      %6153 = vmatprep.subr.mxu0 0.0
      %6154 = vmatpush1.msra.mxu0 0.0
      %6155 = vmatprep.subr.mxu0 0.0
      %6156 = vmatpush1.msra.mxu0 0.0
      %6157 = vmatprep.subr.mxu0 0.0
      %6158 = vmatpush1.msra.mxu0 %v6115
      %6159 = vmatprep.subr.mxu0 0.0
      %6160 = vmatpush1.msra.mxu0 %v6114
      %6161 = vmatprep.subr.mxu0 0.0
      %6162 = vmatpush1.msra.mxu0 %v6113
      %6163 = vmatprep.subr.mxu0 0.0
      %6164 = vmatpush1.msra.mxu0 %v6112
      %6165 = vmatprep.subr.mxu0 0.0
      %6166 = vmatpush2.msra.mxu0 0.0
      %6167 = vmatprep.subr.mxu0 0.0
      %6168 = vmatpush2.msra.mxu0 0.0
      %6169 = vmatprep.subr.mxu0 0.0
      %6170 = vmatpush2.msra.mxu0 0.0
      %6171 = vmatprep.subr.mxu0 0.0
      %6172 = vmatpush2.msra.mxu0 0.0
      %6173 = vmatprep.subr.mxu0 0.0
      %6174 = vmatpush2.msra.mxu0 0.0
      %6175 = vmatprep.subr.mxu0 0.0
      %6176 = vmatpush2.msra.mxu0 0.0
      %6177 = vmatprep.subr.mxu0 0.0
      %6178 = vmatpush2.msra.mxu0 0.0
      %6179 = vmatprep.subr.mxu0 0.0
      %6180 = vmatpush2.msra.mxu0 0.0
      %6181 = vmatprep.subr.mxu0 0.0
      %6182 = vmatpush2.msra.mxu0 0.0
      %6183 = vmatprep.subr.mxu0 0.0
      %6184 = vmatpush2.msra.mxu0 0.0
      %6185 = vmatprep.subr.mxu0 0.0
      %6186 = vmatpush2.msra.mxu0 0.0
      %6187 = vmatprep.subr.mxu0 0.0
      %6188 = vmatpush2.msra.mxu0 0.0
      %6189 = vmatprep.subr.mxu0 0.0
      %6190 = vmatpush2.msra.mxu0 0.0
      %6191 = vmatprep.subr.mxu0 0.0
      %6192 = vmatpush2.msra.mxu0 0.0
      %6193 = vmatprep.subr.mxu0 0.0
      %6194 = vmatpush2.msra.mxu0 0.0
      %6195 = vmatprep.subr.mxu0 0.0
      %6196 = vmatpush2.msra.mxu0 0.0
      %6197 = vmatprep.mubr.f32.mxu0 0.0
      %6198 = vmatmul.mubr.f32.gmra.mxu0 %v6125
      %v6199 = vpop.f32.mrf.mxu0
      %v6200 = vadd.f32 %v6121, %v6199
      %v6201 = vpop.f32.mrf.mxu0
      %6202 = vmatprep.mubr.f32.mxu0 0.0
      %6203 = vmatmul.mubr.f32.gmra.mxu0 %v6128
      %v6204 = vpop.f32.mrf.mxu0
      %v6205 = vadd.f32 %v6121, %v6204
      %v6206 = vpop.f32.mrf.mxu0
      %6207 = vmatprep.mubr.f32.mxu0 0.0
      %6208 = vmatmul.mubr.f32.gmra.mxu0 %v6131
      %v6209 = vpop.f32.mrf.mxu0
      %v6210 = vadd.f32 %v6121, %v6209
      %v6211 = vpop.f32.mrf.mxu0
      %6212 = vdwg.mxu0
      %v6213 = vmul.f32 %v6200, %v6200
      %v6214 = vmul.f32 %v6205, %v6205
      %v6215 = vmul.f32 %v6210, %v6210
      %v6216 = vmul.f32 %v6200, %v6213
      %v6217 = vmul.f32 %v6205, %v6214
      %v6218 = vmul.f32 %v6210, %v6215
      %v6219 = vmul.f32 %v6216, 0.044715
      %v6220 = vmul.f32 %v6217, 0.044715
      %v6221 = vmul.f32 %v6218, 0.044715
      %v6222 = vadd.f32 %v6200, %v6219
      %v6223 = vadd.f32 %v6205, %v6220
      %v6224 = vadd.f32 %v6210, %v6221
      %v6225 = vmul.f32 %v6222, 0.7978846
      %v6226 = vmul.f32 %v6223, 0.7978846
      %v6227 = vmul.f32 %v6224, 0.7978846
      %v6228 = vtanh.pop %v6225
      %v6229 = vtanh.pop %v6226
      %v6230 = vtanh.pop %v6227
      %v6231 = vadd.f32 %v6228, 1.0
      %v6232 = vadd.f32 %v6229, 1.0
      %v6233 = vadd.f32 %v6230, 1.0
      %v6234 = vmul.f32 %v6231, 0.5
      %v6235 = vmul.f32 %v6232, 0.5
      %v6236 = vmul.f32 %v6233, 0.5
      %v6237 = vmul.f32 %v6200, %v6234
      %v6238 = vmul.f32 %v6205, %v6235
      %v6239 = vmul.f32 %v6210, %v6236
      %v6240 = vld [vmem:[#allocation3] sm:$0xff]
      %v6241 = vld [vmem:[#allocation3 + $0x8] sm:$0xff]
      %v6242 = vld [vmem:[#allocation3 + $0x10] sm:$0x3]
      %v6243 = vld [vmem:[%s964] sm:$0xff]
      %v6244 = vld [vmem:[%s964 + $0x8] sm:$0xff]
      %v6245 = vld [vmem:[%s964 + $0x10] sm:$0xff]
      %v6246 = vld [vmem:[%s964 + $0x18] sm:$0xff]
      %v6247 = vld [vmem:[%s964 + $0x20] sm:$0xff]
      %v6248 = vld [vmem:[%s964 + $0x28] sm:$0xff]
      %v6249 = vld [vmem:[%s964 + $0x30] sm:$0xff]
      %v6250 = vld [vmem:[%s964 + $0x38] sm:$0xff]
      %vm6251 = vcmask 523264
      %v6253 = vsel %vm6251, %v6237, 0
      %v6256 = vsel %vm6251, %v6238, 0
      %v6259 = vsel %vm6251, %v6239, 0
      %6261 = vmatprep.subr.mxu0 0.0
      %6262 = vmatpush1.msra.mxu0 0.0
      %6263 = vmatprep.subr.mxu0 0.0
      %6264 = vmatpush1.msra.mxu0 0.0
      %6265 = vmatprep.subr.mxu0 0.0
      %6266 = vmatpush1.msra.mxu0 0.0
      %6267 = vmatprep.subr.mxu0 0.0
      %6268 = vmatpush1.msra.mxu0 0.0
      %6269 = vmatprep.subr.mxu0 0.0
      %6270 = vmatpush1.msra.mxu0 0.0
      %6271 = vmatprep.subr.mxu0 0.0
      %6272 = vmatpush1.msra.mxu0 0.0
      %6273 = vmatprep.subr.mxu0 0.0
      %6274 = vmatpush1.msra.mxu0 0.0
      %6275 = vmatprep.subr.mxu0 0.0
      %6276 = vmatpush1.msra.mxu0 0.0
      %6277 = vmatprep.subr.mxu0 0.0
      %6278 = vmatpush1.msra.mxu0 %v6250
      %6279 = vmatprep.subr.mxu0 0.0
      %6280 = vmatpush1.msra.mxu0 %v6249
      %6281 = vmatprep.subr.mxu0 0.0
      %6282 = vmatpush1.msra.mxu0 %v6248
      %6283 = vmatprep.subr.mxu0 0.0
      %6284 = vmatpush1.msra.mxu0 %v6247
      %6285 = vmatprep.subr.mxu0 0.0
      %6286 = vmatpush1.msra.mxu0 %v6246
      %6287 = vmatprep.subr.mxu0 0.0
      %6288 = vmatpush1.msra.mxu0 %v6245
      %6289 = vmatprep.subr.mxu0 0.0
      %6290 = vmatpush1.msra.mxu0 %v6244
      %6291 = vmatprep.subr.mxu0 0.0
      %6292 = vmatpush1.msra.mxu0 %v6243
      %6293 = vmatprep.subr.mxu0 0.0
      %6294 = vmatpush2.msra.mxu0 0.0
      %6295 = vmatprep.subr.mxu0 0.0
      %6296 = vmatpush2.msra.mxu0 0.0
      %6297 = vmatprep.subr.mxu0 0.0
      %6298 = vmatpush2.msra.mxu0 0.0
      %6299 = vmatprep.subr.mxu0 0.0
      %6300 = vmatpush2.msra.mxu0 0.0
      %6301 = vmatprep.subr.mxu0 0.0
      %6302 = vmatpush2.msra.mxu0 0.0
      %6303 = vmatprep.subr.mxu0 0.0
      %6304 = vmatpush2.msra.mxu0 0.0
      %6305 = vmatprep.subr.mxu0 0.0
      %6306 = vmatpush2.msra.mxu0 0.0
      %6307 = vmatprep.subr.mxu0 0.0
      %6308 = vmatpush2.msra.mxu0 0.0
      %6309 = vmatprep.subr.mxu0 0.0
      %6310 = vmatpush2.msra.mxu0 0.0
      %6311 = vmatprep.subr.mxu0 0.0
      %6312 = vmatpush2.msra.mxu0 0.0
      %6313 = vmatprep.subr.mxu0 0.0
      %6314 = vmatpush2.msra.mxu0 0.0
      %6315 = vmatprep.subr.mxu0 0.0
      %6316 = vmatpush2.msra.mxu0 0.0
      %6317 = vmatprep.subr.mxu0 0.0
      %6318 = vmatpush2.msra.mxu0 0.0
      %6319 = vmatprep.subr.mxu0 0.0
      %6320 = vmatpush2.msra.mxu0 0.0
      %6321 = vmatprep.subr.mxu0 0.0
      %6322 = vmatpush2.msra.mxu0 0.0
      %6323 = vmatprep.subr.mxu0 0.0
      %6324 = vmatpush2.msra.mxu0 0.0
      %6325 = vmatprep.mubr.f32.mxu0 0.0
      %6326 = vmatmul.mubr.f32.gmra.mxu0 %v6253
      %v6327 = vpop.f32.mrf.mxu0
      %v6328 = vadd.f32 0.0, %v6327
      %v6329 = vpop.f32.mrf.mxu0
      %6330 = vmatprep.mubr.f32.mxu0 0.0
      %6331 = vmatmul.mubr.f32.gmra.mxu0 %v6256
      %v6332 = vpop.f32.mrf.mxu0
      %v6333 = vadd.f32 0.0, %v6332
      %v6334 = vpop.f32.mrf.mxu0
      %6335 = vmatprep.mubr.f32.mxu0 0.0
      %6336 = vmatmul.mubr.f32.gmra.mxu0 %v6259
      %v6337 = vpop.f32.mrf.mxu0
      %v6338 = vadd.f32 0.0, %v6337
      %v6339 = vpop.f32.mrf.mxu0
      %6340 = vdwg.mxu0
      %v6341 = vadd.f32 %v6240, %v6328
      %v6342 = vadd.f32 %v6241, %v6333
      %v6343 = vadd.f32 %v6242, %v6338
      %6344 = vst.msk [vmem:[#allocation3] sm:$0xff] %vm6123, %v6341
      %6345 = vst.msk [vmem:[#allocation3 + $0x8] sm:$0xff] %vm6123, %v6342
      %vm6346 = vcmask 254976
      %6347 = vst.msk [vmem:[#allocation3 + $0x10] sm:$0x3] %vm6346, %v6343
      // Predicated region
      $region113: #{tpu_custom_call.1} parent=103 // pred_check
        %p6348 = pneg %p982
      $region114: #{tpu_custom_call.1} parent=103 // pred_check_branch
        %6350 = sbr.rel (%p6348) target = $region116
      $region115: #{tpu_custom_call.1} parent=103 // pred_region
        %v6351 = vld [vmem:[#allocation3] sm:$0xff]
        %v6352 = vld [vmem:[#allocation3 + $0x8] sm:$0xff]
        %v6353 = vld [vmem:[#allocation3 + $0x10] sm:$0x3]
        %v6354 = vld [vmem:[%s968] sm:$0x1]
        %v6356 = vlaneseq
        %v6357 = vshrl.u32 %v6356, 7
        %v6358 = vsub.s32 0, %v6357
        %v6359 = vrot.slane %v6354, %v6358
        %v6361 = vadd.f32 %v6351, %v6359
        %v6362 = vadd.f32 %v6352, %v6359
        %v6363 = vadd.f32 %v6353, %v6359
        %v6364 = vadd.f32 %v6361, %v6109
        %v6365 = vadd.f32 %v6362, %v6110
        %v6366 = vadd.f32 %v6363, %v6111
        %v6367 = vld [vmem:[%s971] sm:$0x1]
        %v6368 = vld [vmem:[%s974] sm:$0x1]
        %v6369 = vsel %vm6123, %v6364, 0.0
        %6370 = vadd.xlane.f32.xlu0 %v6369
        %v6371 = vpop.xlane.xlu0 %6370
        %v6372 = vsel %vm6123, %v6365, 0.0
        %6373 = vadd.xlane.f32.xlu0 %v6372
        %v6374 = vpop.xlane.xlu0 %6373
        %v6375 = vsel %vm6346, %v6366, 0.0
        %6376 = vadd.xlane.f32.xlu0 %v6375
        %v6377 = vpop.xlane.xlu0 %6376
        %v6378 = vrcp.pop 32.0
        %v6379 = vmul.f32 %v6371, %v6378
        %v6380 = vmul.f32 %v6374, %v6378
        %v6381 = vmul.f32 %v6377, %v6378
        %v6382 = vsub.f32 %v6364, %v6379
        %v6383 = vsub.f32 %v6365, %v6380
        %v6384 = vsub.f32 %v6366, %v6381
        %v6385 = vmul.f32 %v6382, %v6382
        %v6386 = vmul.f32 %v6383, %v6383
        %v6387 = vmul.f32 %v6384, %v6384
        %v6388 = vsel %vm6123, %v6385, 0.0
        %6389 = vadd.xlane.f32.xlu0 %v6388
        %v6390 = vpop.xlane.xlu0 %6389
        %v6391 = vsel %vm6123, %v6386, 0.0
        %6392 = vadd.xlane.f32.xlu0 %v6391
        %v6393 = vpop.xlane.xlu0 %6392
        %v6394 = vsel %vm6346, %v6387, 0.0
        %6395 = vadd.xlane.f32.xlu0 %v6394
        %v6396 = vpop.xlane.xlu0 %6395
        %v6397 = vmul.f32 %v6390, %v6378
        %v6398 = vmul.f32 %v6393, %v6378
        %v6399 = vmul.f32 %v6396, %v6378
        %v6400 = vadd.f32 %v6397, 1e-12
        %v6401 = vadd.f32 %v6398, 1e-12
        %v6402 = vadd.f32 %v6399, 1e-12
        %v6403 = vrsqrt.pop %v6400
        %v6404 = vrsqrt.pop %v6401
        %v6405 = vrsqrt.pop %v6402
        %v6406 = vmul.f32 %v6382, %v6403
        %v6407 = vmul.f32 %v6383, %v6404
        %v6408 = vmul.f32 %v6384, %v6405
        %v6410 = vlaneseq
        %v6411 = vshrl.u32 %v6410, 7
        %v6412 = vsub.s32 0, %v6411
        %v6413 = vrot.slane %v6367, %v6412
        %v6415 = vmul.f32 %v6406, %v6413
        %v6416 = vmul.f32 %v6407, %v6413
        %v6417 = vmul.f32 %v6408, %v6413
        %v6419 = vlaneseq
        %v6420 = vshrl.u32 %v6419, 7
        %v6421 = vsub.s32 0, %v6420
        %v6422 = vrot.slane %v6368, %v6421
        %v6424 = vadd.f32 %v6415, %v6422
        %v6425 = vadd.f32 %v6416, %v6422
        %v6426 = vadd.f32 %v6417, %v6422
        %v6430 = vcombine.high %v6424, %v6424
        %v6432 = vunpack.c.l.s4 1966171168
        %v6433 = vunpack.c.0.s8 %v6432
        %v6434 = vlaneseq
        %v6435 = vshrl.u32 %v6434, 7
        %v6436 = vsub.s32 %v6433, %v6435
        %v6437 = vrot.slane %v6424, %v6436
        %v6439 = vunpack.c.l.s4 1966171168
        %v6440 = vunpack.c.0.s8 %v6439
        %v6441 = vlaneseq
        %v6442 = vshrl.u32 %v6441, 7
        %v6443 = vsub.s32 %v6440, %v6442
        %v6444 = vrot.slane %v6430, %v6443
        %v6445 = vcombine.high %v6437, %v6437
        %v6446 = vcombine.high %v6444, %v6444
        %v6448 = vunpack.c.l.s4 1966171168
        %v6449 = vunpack.c.0.s8 %v6448
        %v6450 = vlaneseq
        %v6451 = vshrl.u32 %v6450, 7
        %v6452 = vsub.s32 %v6449, %v6451
        %v6453 = vrot.slane %v6437, %v6452
        %v6455 = vunpack.c.l.s4 1966171168
        %v6456 = vunpack.c.0.s8 %v6455
        %v6457 = vlaneseq
        %v6458 = vshrl.u32 %v6457, 7
        %v6459 = vsub.s32 %v6456, %v6458
        %v6460 = vrot.slane %v6444, %v6459
        %v6462 = vunpack.c.l.s4 1966171168
        %v6463 = vunpack.c.0.s8 %v6462
        %v6464 = vlaneseq
        %v6465 = vshrl.u32 %v6464, 7
        %v6466 = vsub.s32 %v6463, %v6465
        %v6467 = vrot.slane %v6445, %v6466
        %v6469 = vunpack.c.l.s4 1966171168
        %v6470 = vunpack.c.0.s8 %v6469
        %v6471 = vlaneseq
        %v6472 = vshrl.u32 %v6471, 7
        %v6473 = vsub.s32 %v6470, %v6472
        %v6474 = vrot.slane %v6446, %v6473
        %v6475 = vcombine.high %v6453, %v6453
        %v6476 = vcombine.high %v6460, %v6460
        %v6477 = vcombine.high %v6467, %v6467
        %v6478 = vcombine.high %v6474, %v6474
        %v6479 = vcombine.high %v6425, %v6425
        %v6481 = vunpack.c.l.s4 1966171168
        %v6482 = vunpack.c.0.s8 %v6481
        %v6483 = vlaneseq
        %v6484 = vshrl.u32 %v6483, 7
        %v6485 = vsub.s32 %v6482, %v6484
        %v6486 = vrot.slane %v6425, %v6485
        %v6488 = vunpack.c.l.s4 1966171168
        %v6489 = vunpack.c.0.s8 %v6488
        %v6490 = vlaneseq
        %v6491 = vshrl.u32 %v6490, 7
        %v6492 = vsub.s32 %v6489, %v6491
        %v6493 = vrot.slane %v6479, %v6492
        %v6494 = vcombine.high %v6486, %v6486
        %v6495 = vcombine.high %v6493, %v6493
        %v6497 = vunpack.c.l.s4 1966171168
        %v6498 = vunpack.c.0.s8 %v6497
        %v6499 = vlaneseq
        %v6500 = vshrl.u32 %v6499, 7
        %v6501 = vsub.s32 %v6498, %v6500
        %v6502 = vrot.slane %v6486, %v6501
        %v6504 = vunpack.c.l.s4 1966171168
        %v6505 = vunpack.c.0.s8 %v6504
        %v6506 = vlaneseq
        %v6507 = vshrl.u32 %v6506, 7
        %v6508 = vsub.s32 %v6505, %v6507
        %v6509 = vrot.slane %v6493, %v6508
        %v6511 = vunpack.c.l.s4 1966171168
        %v6512 = vunpack.c.0.s8 %v6511
        %v6513 = vlaneseq
        %v6514 = vshrl.u32 %v6513, 7
        %v6515 = vsub.s32 %v6512, %v6514
        %v6516 = vrot.slane %v6494, %v6515
        %v6518 = vunpack.c.l.s4 1966171168
        %v6519 = vunpack.c.0.s8 %v6518
        %v6520 = vlaneseq
        %v6521 = vshrl.u32 %v6520, 7
        %v6522 = vsub.s32 %v6519, %v6521
        %v6523 = vrot.slane %v6495, %v6522
        %v6524 = vcombine.high %v6502, %v6502
        %v6525 = vcombine.high %v6509, %v6509
        %v6526 = vcombine.high %v6516, %v6516
        %v6527 = vcombine.high %v6523, %v6523
        %v6529 = vunpack.c.l.s4 1966171168
        %v6530 = vunpack.c.0.s8 %v6529
        %v6531 = vlaneseq
        %v6532 = vshrl.u32 %v6531, 7
        %v6533 = vsub.s32 %v6530, %v6532
        %v6534 = vrot.slane %v6426, %v6533
        %v6535 = vcombine.high %v6534, %v6534
        %v6537 = vunpack.c.l.s4 1966171168
        %v6538 = vunpack.c.0.s8 %v6537
        %v6539 = vlaneseq
        %v6540 = vshrl.u32 %v6539, 7
        %v6541 = vsub.s32 %v6538, %v6540
        %v6542 = vrot.slane %v6534, %v6541
        %v6544 = vunpack.c.l.s4 1966171168
        %v6545 = vunpack.c.0.s8 %v6544
        %v6546 = vlaneseq
        %v6547 = vshrl.u32 %v6546, 7
        %v6548 = vsub.s32 %v6545, %v6547
        %v6549 = vrot.slane %v6535, %v6548
        %v6550 = vcombine.low %v6453, %v6467
        %v6551 = vcombine.low %v6475, %v6477
        %v6552 = vcombine.low %v6460, %v6474
        %v6553 = vcombine.low %v6476, %v6478
        %v6555 = vunpack.c.l.s4 1966171168
        %v6556 = vunpack.c.0.s8 %v6555
        %v6557 = vlaneseq
        %v6558 = vshrl.u32 %v6557, 7
        %v6559 = vsub.s32 %v6556, %v6558
        %v6560 = vrot.slane %v6550, %v6559
        %v6562 = vunpack.c.l.s4 1966171168
        %v6563 = vunpack.c.0.s8 %v6562
        %v6564 = vlaneseq
        %v6565 = vshrl.u32 %v6564, 7
        %v6566 = vsub.s32 %v6563, %v6565
        %v6567 = vrot.slane %v6551, %v6566
        %v6569 = vunpack.c.l.s4 1966171168
        %v6570 = vunpack.c.0.s8 %v6569
        %v6571 = vlaneseq
        %v6572 = vshrl.u32 %v6571, 7
        %v6573 = vsub.s32 %v6570, %v6572
        %v6574 = vrot.slane %v6552, %v6573
        %v6576 = vunpack.c.l.s4 1966171168
        %v6577 = vunpack.c.0.s8 %v6576
        %v6578 = vlaneseq
        %v6579 = vshrl.u32 %v6578, 7
        %v6580 = vsub.s32 %v6577, %v6579
        %v6581 = vrot.slane %v6553, %v6580
        %v6582 = vcombine.low %v6560, %v6567
        %v6583 = vcombine.low %v6574, %v6581
        %v6585 = vunpack.c.l.s4 1966171168
        %v6586 = vunpack.c.0.s8 %v6585
        %v6587 = vlaneseq
        %v6588 = vshrl.u32 %v6587, 7
        %v6589 = vsub.s32 %v6586, %v6588
        %v6590 = vrot.slane %v6582, %v6589
        %v6592 = vunpack.c.l.s4 1966171168
        %v6593 = vunpack.c.0.s8 %v6592
        %v6594 = vlaneseq
        %v6595 = vshrl.u32 %v6594, 7
        %v6596 = vsub.s32 %v6593, %v6595
        %v6597 = vrot.slane %v6583, %v6596
        %v6598 = vcombine.low %v6590, %v6597
        %v6600 = vunpack.c.l.s4 1966171168
        %v6601 = vunpack.c.0.s8 %v6600
        %v6602 = vlaneseq
        %v6603 = vshrl.u32 %v6602, 7
        %v6604 = vsub.s32 %v6601, %v6603
        %v6605 = vrot.slane %v6502, %v6604
        %v6607 = vunpack.c.l.s4 1966171168
        %v6608 = vunpack.c.0.s8 %v6607
        %v6609 = vlaneseq
        %v6610 = vshrl.u32 %v6609, 7
        %v6611 = vsub.s32 %v6608, %v6610
        %v6612 = vrot.slane %v6605, %v6611
        %v6613 = vcombine.low %v6516, %v6524
        %v6614 = vcombine.low %v6526, %v6509
        %v6615 = vcombine.low %v6523, %v6525
        %v6616 = vcombine.low %v6527, %v6542
        %v6618 = vunpack.c.l.s4 1966171168
        %v6619 = vunpack.c.0.s8 %v6618
        %v6620 = vlaneseq
        %v6621 = vshrl.u32 %v6620, 7
        %v6622 = vsub.s32 %v6619, %v6621
        %v6623 = vrot.slane %v6613, %v6622
        %v6625 = vunpack.c.l.s4 1966171168
        %v6626 = vunpack.c.0.s8 %v6625
        %v6627 = vlaneseq
        %v6628 = vshrl.u32 %v6627, 7
        %v6629 = vsub.s32 %v6626, %v6628
        %v6630 = vrot.slane %v6614, %v6629
        %v6632 = vunpack.c.l.s4 1966171168
        %v6633 = vunpack.c.0.s8 %v6632
        %v6634 = vlaneseq
        %v6635 = vshrl.u32 %v6634, 7
        %v6636 = vsub.s32 %v6633, %v6635
        %v6637 = vrot.slane %v6615, %v6636
        %v6639 = vunpack.c.l.s4 1966171168
        %v6640 = vunpack.c.0.s8 %v6639
        %v6641 = vlaneseq
        %v6642 = vshrl.u32 %v6641, 7
        %v6643 = vsub.s32 %v6640, %v6642
        %v6644 = vrot.slane %v6616, %v6643
        %v6645 = vcombine.low %v6623, %v6630
        %v6646 = vcombine.low %v6637, %v6644
        %v6648 = vunpack.c.l.s4 1966171168
        %v6649 = vunpack.c.0.s8 %v6648
        %v6650 = vlaneseq
        %v6651 = vshrl.u32 %v6650, 7
        %v6652 = vsub.s32 %v6649, %v6651
        %v6653 = vrot.slane %v6645, %v6652
        %v6655 = vunpack.c.l.s4 1966171168
        %v6656 = vunpack.c.0.s8 %v6655
        %v6657 = vlaneseq
        %v6658 = vshrl.u32 %v6657, 7
        %v6659 = vsub.s32 %v6656, %v6658
        %v6660 = vrot.slane %v6646, %v6659
        %v6661 = vcombine.low %v6653, %v6660
        %v6663 = vunpack.c.l.s4 1966171168
        %v6664 = vunpack.c.0.s8 %v6663
        %v6665 = vlaneseq
        %v6666 = vshrl.u32 %v6665, 7
        %v6667 = vsub.s32 %v6664, %v6666
        %v6668 = vrot.slane %v6549, %v6667
        %v6670 = vunpack.c.l.s4 1966171168
        %v6671 = vunpack.c.0.s8 %v6670
        %v6672 = vlaneseq
        %v6673 = vshrl.u32 %v6672, 7
        %v6674 = vsub.s32 %v6671, %v6673
        %v6675 = vrot.slane %v6668, %v6674
        %6680 = vst.msk [vmem:[%s980] sm:$0xff] %vm6123, %v6598
        %vm6681 = vcmask 253952
        %6682 = vst.msk [vmem:[%s980 + $0x8] sm:$0x1] %vm6681, %v6612
        %6683 = vst.msk [vmem:[%s980 + $0x10] sm:$0xff] %vm6123, %v6661
        %6684 = vst.msk [vmem:[%s980 + $0x18] sm:$0x1] %vm6681, %v6675
      $region116: #{tpu_custom_call.1} parent=103 // pred_fallthru
        _
      %s6685 = smul.u32 2, %s37
      %p6686 = scmp.lt.s32.totalorder %s6685, 3
      %s6687 = scalar_select %p6686, %s6685, 3
      %s6688 = smul.addr %s6687, 2
      %s6689 = smul.addr %s6688, 8
      %s6690 = scalar_lea.vmem %s21, %s6689
      // Predicated region
      $region117: #{tpu_custom_call.1} parent=103 // pred_check
        %p6691 = pneg %p601
      $region118: #{tpu_custom_call.1} parent=103 // pred_check_branch
        %6693 = sbr.rel (%p6691) target = $region120
      $region119: #{tpu_custom_call.1} parent=103 // pred_region
        %s6694 = smul.u32 2, %s37
      $region120: #{tpu_custom_call.1} parent=103 // pred_fallthru
        _
    $region104: #{tpu_custom_call.1} parent=5 // pred_fallthru
      _
    %p6695 = scmp.le.s32.totalorder 2, %s27
    // Predicated region
    $region121: #{tpu_custom_call.1} parent=5 // pred_check
      %p6696 = pneg %p6695
    $region122: #{tpu_custom_call.1} parent=5 // pred_check_branch
      %6698 = sbr.rel (%p6696) target = $region124
    $region123: #{tpu_custom_call.1} parent=5 // pred_region
      %s6699 = ssub.s32 %s27, 2
      // Predicated region
      $region125: #{tpu_custom_call.1} parent=123 // pred_check
        %p6700 = pneg %p607
      $region126: #{tpu_custom_call.1} parent=123 // pred_check_branch
        %6702 = sbr.rel (%p6700) target = $region128
      $region127: #{tpu_custom_call.1} parent=123 // pred_region
        %s6703 = smul.u32 2, %s40
        %p6704 = scmp.lt.s32.totalorder %s6703, 3
        %s6705 = scalar_select %p6704, %s6703, 3
        %s6706 = smul.addr %s6705, 2
        %s6707 = smul.addr %s6706, 8
        %s6708 = scalar_lea.vmem %s21, %s6707
      $region128: #{tpu_custom_call.1} parent=123 // pred_fallthru
        _
    $region124: #{tpu_custom_call.1} parent=5 // pred_fallthru
      _
  $region6: #{tpu_custom_call.1} parent=0 // loop_footer
    %s31 = sadd.s32 1, %s27
  $region7: #{tpu_custom_call.1} parent=0 // loop_footer_branch
    %26 = sbr.rel target = $region3
  $region8: #{tpu_custom_call.1} parent=0 // loop_exit
    _

</llo_original>
